<compile_context>
chip_gen: v7x
topology: tpu7x:2x2x1
jax: 0.10.0
libtpu: 0.0.40
codegen_flags: <defaults>
</compile_context>

<pallas_src>
import functools

import jax
import jax.numpy as jnp
from jax.experimental import pallas as pl
from jax.experimental.pallas import tpu as pltpu


def _basic_block_kernel(xpad_ref, w1_ref, w2_ref, s1_ref, b1_ref, s2_ref, b2_ref,
                        out_ref, xin_ref, patch_ref, mid_ref, *, H, W, Cp):
    """One grid step = one image (N axis).

    xpad_ref : (1, H+2, W+2, Cp) bf16  zero-padded (spatial + channel) NHWC input
    w1_ref   : (9*Cp, Cp)        bf16  conv1 weights, im2col layout (tap-major)
    w2_ref   : (9*Cp, Cp)        bf16  conv2 weights, im2col layout
    s*_ref   : (1, Cp)           f32   folded BN scale  = gamma / sqrt(var + eps)
    b*_ref   : (1, Cp)           f32   folded BN bias   = beta - mean * scale
    out_ref  : (1, H, W, Cp)     f32
    xin_ref  : (H+2, W+2, Cp)    f32   VMEM scratch: staged f32 copy of the input
    patch_ref: (H*W, 9*Cp)       bf16  VMEM scratch: im2col patch buffer
    mid_ref  : (H+2, W+2, Cp)    f32   VMEM scratch: spatially padded intermediate
    """
    HW = H * W
    bf16 = jnp.bfloat16

    # Stage the bf16 HBM block into f32 once; all window slicing below is f32.
    xin_ref[...] = xpad_ref[0, :, :, :].astype(jnp.float32)

    # ---------------- conv1 (single im2col matmul) + BN1 + ReLU20 -------------
    for ky in range(3):
        for kx in range(3):
            t = ky * 3 + kx
            patch_ref[:, t * Cp:(t + 1) * Cp] = (
                xin_ref[ky:ky + H, kx:kx + W, :].astype(bf16).reshape(HW, Cp))

    acc1 = jnp.dot(patch_ref[...], w1_ref[...],
                   preferred_element_type=jnp.float32)            # (HW, Cp) f32
    h1 = jnp.clip(acc1 * s1_ref[...] + b1_ref[...], 0.0, 20.0)    # BN + ReLU20

    # Spatially re-pad the intermediate inside VMEM (no HBM round trip).
    mid_ref[...] = jnp.zeros_like(mid_ref)
    mid_ref[1:1 + H, 1:1 + W, :] = h1.reshape(H, W, Cp)

    # -------- conv2 (single im2col matmul) + BN2 + residual + ReLU20 ----------
    for ky in range(3):
        for kx in range(3):
            t = ky * 3 + kx
            patch_ref[:, t * Cp:(t + 1) * Cp] = (
                mid_ref[ky:ky + H, kx:kx + W, :].astype(bf16).reshape(HW, Cp))

    acc2 = jnp.dot(patch_ref[...], w2_ref[...],
                   preferred_element_type=jnp.float32)            # (HW, Cp) f32
    residual = xin_ref[1:1 + H, 1:1 + W, :].reshape(HW, Cp)
    out = jnp.clip(acc2 * s2_ref[...] + b2_ref[...] + residual, 0.0, 20.0)
    out_ref[0] = out.reshape(H, W, Cp)


def basic_block_forward(x_nchw, params):
    """BasicBlock forward (stride=1, no downsample). x_nchw: (N, C, H, W) f32."""
    N, C, H, W = x_nchw.shape
    Cp = max(128, ((C + 127) // 128) * 128)   # lane-dense channel padding

    # NCHW -> NHWC, spatial zero-pad (padding=1), channel zero-pad, bf16 feed.
    x_nhwc = jnp.transpose(x_nchw, (0, 2, 3, 1)).astype(jnp.float32)
    xpad = jnp.zeros((N, H + 2, W + 2, Cp), jnp.bfloat16)
    xpad = xpad.at[:, 1:1 + H, 1:1 + W, :C].set(x_nhwc.astype(jnp.bfloat16))

    def pack_w(w):
        # PyTorch (Cout, Cin, 3, 3) -> im2col (9*Cp, Cp): row = tap*Cp + cin.
        Cout, Cin = w.shape[0], w.shape[1]
        wt = jnp.transpose(w.astype(jnp.float32), (2, 3, 1, 0)).reshape(9, Cin, Cout)
        wp = jnp.zeros((9, Cp, Cp), jnp.float32).at[:, :Cin, :Cout].set(wt)
        return wp.reshape(9 * Cp, Cp).astype(jnp.bfloat16)

    def fold_bn(gamma, beta, mean, var, eps=1e-5):
        s = gamma / jnp.sqrt(var + eps)
        b = beta - mean * s
        sp = jnp.zeros((1, Cp), jnp.float32).at[0, :C].set(s)
        bp = jnp.zeros((1, Cp), jnp.float32).at[0, :C].set(b)
        return sp, bp

    w1 = pack_w(params["w1"])
    w2 = pack_w(params["w2"])
    s1, b1 = fold_bn(*params["bn1"])
    s2, b2 = fold_bn(*params["bn2"])

    kernel = functools.partial(_basic_block_kernel, H=H, W=W, Cp=Cp)
    out = pl.pallas_call(
        kernel,
        out_shape=jax.ShapeDtypeStruct((N, H, W, Cp), jnp.float32),
        grid=(N,),
        in_specs=[
            pl.BlockSpec((1, H + 2, W + 2, Cp), lambda n: (n, 0, 0, 0)),
            pl.BlockSpec((9 * Cp, Cp), lambda n: (0, 0)),
            pl.BlockSpec((9 * Cp, Cp), lambda n: (0, 0)),
            pl.BlockSpec((1, Cp), lambda n: (0, 0)),
            pl.BlockSpec((1, Cp), lambda n: (0, 0)),
            pl.BlockSpec((1, Cp), lambda n: (0, 0)),
            pl.BlockSpec((1, Cp), lambda n: (0, 0)),
        ],
        out_specs=pl.BlockSpec((1, H, W, Cp), lambda n: (n, 0, 0, 0)),
        scratch_shapes=[
            pltpu.VMEM((H + 2, W + 2, Cp), jnp.float32),    # staged f32 input
            pltpu.VMEM((H * W, 9 * Cp), jnp.bfloat16),      # im2col patch
            pltpu.VMEM((H + 2, W + 2, Cp), jnp.float32),    # padded intermediate
        ],
        compiler_params=pltpu.CompilerParams(
            dimension_semantics=("parallel",)),
    )(xpad, w1, w2, s1, b1, s2, b2)

    out = out[..., :C]                         # drop channel padding
    return jnp.transpose(out, (0, 3, 1, 2))    # NHWC -> NCHW


def _reference_forward(x_nchw, params):
    """Pure-JAX reference mirroring the kernel's bf16 MXU feed (f32 accumulate)."""
    f32 = jnp.float32
    xb = x_nchw.astype(jnp.bfloat16).astype(f32)   # kernel stores the input as bf16

    def conv(t, w):
        tb = t.astype(jnp.bfloat16).astype(f32)
        wb = w.astype(jnp.bfloat16).astype(f32)
        dn = jax.lax.conv_dimension_numbers(tb.shape, wb.shape,
                                            ("NCHW", "OIHW", "NCHW"))
        return jax.lax.conv_general_dilated(tb, wb, (1, 1), ((1, 1), (1, 1)),
                                            dimension_numbers=dn)

    def bn(o, p):
        g, b, m, v = p
        s = g / jnp.sqrt(v + 1e-5)
        return o * s[None, :, None, None] + (b - m * s)[None, :, None, None]

    relu20 = lambda t: jnp.clip(t, 0.0, 20.0)
    h = relu20(bn(conv(xb, params["w1"]), params["bn1"]))
    out = bn(conv(h, params["w2"]), params["bn2"]) + xb
    return relu20(out)


if __name__ == "__main__":
    key = jax.random.PRNGKey(0)
    N, C, H, W = 2, 4, 16, 16  # in_channels == channels (stride=1, no downsample)

    (k_x, k_w1, k_w2,
     k_g1, k_b1, k_m1, k_v1,
     k_g2, k_b2, k_m2, k_v2) = jax.random.split(key, 11)
    x = jax.random.normal(k_x, (N, C, H, W), jnp.float32)

    params = {
        "w1": jax.random.normal(k_w1, (C, C, 3, 3), jnp.float32) * 0.1,
        "w2": jax.random.normal(k_w2, (C, C, 3, 3), jnp.float32) * 0.1,
        "bn1": (
            1.0 + 0.1 * jax.random.normal(k_g1, (C,), jnp.float32),          # gamma
            0.1 * jax.random.normal(k_b1, (C,), jnp.float32),                # beta
            0.1 * jax.random.normal(k_m1, (C,), jnp.float32),                # running_mean
            jnp.abs(1.0 + 0.1 * jax.random.normal(k_v1, (C,), jnp.float32)), # running_var
        ),
        "bn2": (
            1.0 + 0.1 * jax.random.normal(k_g2, (C,), jnp.float32),
            0.1 * jax.random.normal(k_b2, (C,), jnp.float32),
            0.1 * jax.random.normal(k_m2, (C,), jnp.float32),
            jnp.abs(1.0 + 0.1 * jax.random.normal(k_v2, (C,), jnp.float32)),
        ),
    }

    out = jax.block_until_ready(basic_block_forward(x, params))
    ref = jax.block_until_ready(_reference_forward(x, params))

    assert out.shape == (N, C, H, W), out.shape
    err = float(jnp.max(jnp.abs(out - ref)))
    assert jnp.allclose(out, ref, atol=1e-3, rtol=1e-3), err
    print("KERNEL_OK")
</pallas_src>

<mosaic_0001>
module attributes {stable_mosaic.version = 11 : i64} {
  func.func @_basic_block_kernel(%arg0: i32, %arg1: memref<1x18x18x128xbf16, #tpu.memory_space<vmem>>, %arg2: memref<1152x128xbf16, #tpu.memory_space<vmem>>, %arg3: memref<1152x128xbf16, #tpu.memory_space<vmem>>, %arg4: memref<1x128xf32, #tpu.memory_space<vmem>>, %arg5: memref<1x128xf32, #tpu.memory_space<vmem>>, %arg6: memref<1x128xf32, #tpu.memory_space<vmem>>, %arg7: memref<1x128xf32, #tpu.memory_space<vmem>>, %arg8: memref<1x16x16x128xf32, #tpu.memory_space<vmem>>, %arg9: memref<18x18x128xf32, #tpu.memory_space<vmem>>, %arg10: memref<256x1152xbf16, #tpu.memory_space<vmem>>, %arg11: memref<18x18x128xf32, #tpu.memory_space<vmem>>) attributes {dimension_semantics = [#tpu.dimension_semantics<parallel>], iteration_bounds = array<i64: 2>, scalar_prefetch = 0 : i64, scratch_operands = 3 : i64, tpu.core_type = #tpu.core_type<tc>, window_params = [{transform_indices = @transform_0, window_bounds = array<i64: 1, 18, 18, 128>}, {pipeline_mode = #tpu.pipeline_mode<synchronous>, transform_indices = @transform_1, window_bounds = array<i64: 1152, 128>}, {pipeline_mode = #tpu.pipeline_mode<synchronous>, transform_indices = @transform_2, window_bounds = array<i64: 1152, 128>}, {pipeline_mode = #tpu.pipeline_mode<synchronous>, transform_indices = @transform_3, window_bounds = array<i64: 1, 128>}, {pipeline_mode = #tpu.pipeline_mode<synchronous>, transform_indices = @transform_4, window_bounds = array<i64: 1, 128>}, {pipeline_mode = #tpu.pipeline_mode<synchronous>, transform_indices = @transform_5, window_bounds = array<i64: 1, 128>}, {pipeline_mode = #tpu.pipeline_mode<synchronous>, transform_indices = @transform_6, window_bounds = array<i64: 1, 128>}, {transform_indices = @transform_7, window_bounds = array<i64: 1, 16, 16, 128>}]} {
    %c0 = arith.constant 0 : index
    %c0_0 = arith.constant 0 : index
    %c0_1 = arith.constant 0 : index
    %c0_2 = arith.constant 0 : index
    %0 = vector.load %arg1[%c0, %c0_0, %c0_1, %c0_2] : memref<1x18x18x128xbf16, #tpu.memory_space<vmem>>, vector<1x18x18x128xbf16>
    %1 = vector.shape_cast %0 : vector<1x18x18x128xbf16> to vector<18x18x128xbf16>
    %2 = arith.extf %1 : vector<18x18x128xbf16> to vector<18x18x128xf32>
    %c0_3 = arith.constant 0 : index
    %c0_4 = arith.constant 0 : index
    %c0_5 = arith.constant 0 : index
    %3 = vector.load %arg9[%c0_3, %c0_4, %c0_5] : memref<18x18x128xf32, #tpu.memory_space<vmem>>, vector<18x18x128xf32>
    tpu.vector_store %arg9[%c0_3, %c0_4, %c0_5], %2 {strides = array<i32>} : memref<18x18x128xf32, #tpu.memory_space<vmem>>, vector<18x18x128xf32>,
    %c0_6 = arith.constant 0 : index
    %c0_7 = arith.constant 0 : index
    %c0_8 = arith.constant 0 : index
    %4 = vector.load %arg9[%c0_6, %c0_7, %c0_8] : memref<18x18x128xf32, #tpu.memory_space<vmem>>, vector<16x16x128xf32>
    %5 = arith.truncf %4 : vector<16x16x128xf32> to vector<16x16x128xbf16>
    %6 = vector.shape_cast %5 : vector<16x16x128xbf16> to vector<256x128xbf16>
    %c0_9 = arith.constant 0 : index
    %c0_10 = arith.constant 0 : index
    %7 = vector.load %arg10[%c0_9, %c0_10] : memref<256x1152xbf16, #tpu.memory_space<vmem>>, vector<256x128xbf16>
    tpu.vector_store %arg10[%c0_9, %c0_10], %6 {strides = array<i32>} : memref<256x1152xbf16, #tpu.memory_space<vmem>>, vector<256x128xbf16>,
    %c0_11 = arith.constant 0 : index
    %c1 = arith.constant 1 : index
    %c0_12 = arith.constant 0 : index
    %8 = vector.load %arg9[%c0_11, %c1, %c0_12] : memref<18x18x128xf32, #tpu.memory_space<vmem>>, vector<16x16x128xf32>
    %9 = arith.truncf %8 : vector<16x16x128xf32> to vector<16x16x128xbf16>
    %10 = vector.shape_cast %9 : vector<16x16x128xbf16> to vector<256x128xbf16>
    %c0_13 = arith.constant 0 : index
    %c128 = arith.constant 128 : index
    %11 = vector.load %arg10[%c0_13, %c128] : memref<256x1152xbf16, #tpu.memory_space<vmem>>, vector<256x128xbf16>
    tpu.vector_store %arg10[%c0_13, %c128], %10 {strides = array<i32>} : memref<256x1152xbf16, #tpu.memory_space<vmem>>, vector<256x128xbf16>,
    %c0_14 = arith.constant 0 : index
    %c2 = arith.constant 2 : index
    %c0_15 = arith.constant 0 : index
    %12 = vector.load %arg9[%c0_14, %c2, %c0_15] : memref<18x18x128xf32, #tpu.memory_space<vmem>>, vector<16x16x128xf32>
    %13 = arith.truncf %12 : vector<16x16x128xf32> to vector<16x16x128xbf16>
    %14 = vector.shape_cast %13 : vector<16x16x128xbf16> to vector<256x128xbf16>
    %c0_16 = arith.constant 0 : index
    %c256 = arith.constant 256 : index
    %15 = vector.load %arg10[%c0_16, %c256] : memref<256x1152xbf16, #tpu.memory_space<vmem>>, vector<256x128xbf16>
    tpu.vector_store %arg10[%c0_16, %c256], %14 {strides = array<i32>} : memref<256x1152xbf16, #tpu.memory_space<vmem>>, vector<256x128xbf16>,
    %c1_17 = arith.constant 1 : index
    %c0_18 = arith.constant 0 : index
    %c0_19 = arith.constant 0 : index
    %16 = vector.load %arg9[%c1_17, %c0_18, %c0_19] : memref<18x18x128xf32, #tpu.memory_space<vmem>>, vector<16x16x128xf32>
    %17 = arith.truncf %16 : vector<16x16x128xf32> to vector<16x16x128xbf16>
    %18 = vector.shape_cast %17 : vector<16x16x128xbf16> to vector<256x128xbf16>
    %c0_20 = arith.constant 0 : index
    %c384 = arith.constant 384 : index
    %19 = vector.load %arg10[%c0_20, %c384] : memref<256x1152xbf16, #tpu.memory_space<vmem>>, vector<256x128xbf16>
    tpu.vector_store %arg10[%c0_20, %c384], %18 {strides = array<i32>} : memref<256x1152xbf16, #tpu.memory_space<vmem>>, vector<256x128xbf16>,
    %c1_21 = arith.constant 1 : index
    %c1_22 = arith.constant 1 : index
    %c0_23 = arith.constant 0 : index
    %20 = vector.load %arg9[%c1_21, %c1_22, %c0_23] : memref<18x18x128xf32, #tpu.memory_space<vmem>>, vector<16x16x128xf32>
    %21 = arith.truncf %20 : vector<16x16x128xf32> to vector<16x16x128xbf16>
    %22 = vector.shape_cast %21 : vector<16x16x128xbf16> to vector<256x128xbf16>
    %c0_24 = arith.constant 0 : index
    %c512 = arith.constant 512 : index
    %23 = vector.load %arg10[%c0_24, %c512] : memref<256x1152xbf16, #tpu.memory_space<vmem>>, vector<256x128xbf16>
    tpu.vector_store %arg10[%c0_24, %c512], %22 {strides = array<i32>} : memref<256x1152xbf16, #tpu.memory_space<vmem>>, vector<256x128xbf16>,
    %c1_25 = arith.constant 1 : index
    %c2_26 = arith.constant 2 : index
    %c0_27 = arith.constant 0 : index
    %24 = vector.load %arg9[%c1_25, %c2_26, %c0_27] : memref<18x18x128xf32, #tpu.memory_space<vmem>>, vector<16x16x128xf32>
    %25 = arith.truncf %24 : vector<16x16x128xf32> to vector<16x16x128xbf16>
    %26 = vector.shape_cast %25 : vector<16x16x128xbf16> to vector<256x128xbf16>
    %c0_28 = arith.constant 0 : index
    %c640 = arith.constant 640 : index
    %27 = vector.load %arg10[%c0_28, %c640] : memref<256x1152xbf16, #tpu.memory_space<vmem>>, vector<256x128xbf16>
    tpu.vector_store %arg10[%c0_28, %c640], %26 {strides = array<i32>} : memref<256x1152xbf16, #tpu.memory_space<vmem>>, vector<256x128xbf16>,
    %c2_29 = arith.constant 2 : index
    %c0_30 = arith.constant 0 : index
    %c0_31 = arith.constant 0 : index
    %28 = vector.load %arg9[%c2_29, %c0_30, %c0_31] : memref<18x18x128xf32, #tpu.memory_space<vmem>>, vector<16x16x128xf32>
    %29 = arith.truncf %28 : vector<16x16x128xf32> to vector<16x16x128xbf16>
    %30 = vector.shape_cast %29 : vector<16x16x128xbf16> to vector<256x128xbf16>
    %c0_32 = arith.constant 0 : index
    %c768 = arith.constant 768 : index
    %31 = vector.load %arg10[%c0_32, %c768] : memref<256x1152xbf16, #tpu.memory_space<vmem>>, vector<256x128xbf16>
    tpu.vector_store %arg10[%c0_32, %c768], %30 {strides = array<i32>} : memref<256x1152xbf16, #tpu.memory_space<vmem>>, vector<256x128xbf16>,
    %c2_33 = arith.constant 2 : index
    %c1_34 = arith.constant 1 : index
    %c0_35 = arith.constant 0 : index
    %32 = vector.load %arg9[%c2_33, %c1_34, %c0_35] : memref<18x18x128xf32, #tpu.memory_space<vmem>>, vector<16x16x128xf32>
    %33 = arith.truncf %32 : vector<16x16x128xf32> to vector<16x16x128xbf16>
    %34 = vector.shape_cast %33 : vector<16x16x128xbf16> to vector<256x128xbf16>
    %c0_36 = arith.constant 0 : index
    %c896 = arith.constant 896 : index
    %35 = vector.load %arg10[%c0_36, %c896] : memref<256x1152xbf16, #tpu.memory_space<vmem>>, vector<256x128xbf16>
    tpu.vector_store %arg10[%c0_36, %c896], %34 {strides = array<i32>} : memref<256x1152xbf16, #tpu.memory_space<vmem>>, vector<256x128xbf16>,
    %c2_37 = arith.constant 2 : index
    %c2_38 = arith.constant 2 : index
    %c0_39 = arith.constant 0 : index
    %36 = vector.load %arg9[%c2_37, %c2_38, %c0_39] : memref<18x18x128xf32, #tpu.memory_space<vmem>>, vector<16x16x128xf32>
    %37 = arith.truncf %36 : vector<16x16x128xf32> to vector<16x16x128xbf16>
    %38 = vector.shape_cast %37 : vector<16x16x128xbf16> to vector<256x128xbf16>
    %c0_40 = arith.constant 0 : index
    %c1024 = arith.constant 1024 : index
    %39 = vector.load %arg10[%c0_40, %c1024] : memref<256x1152xbf16, #tpu.memory_space<vmem>>, vector<256x128xbf16>
    tpu.vector_store %arg10[%c0_40, %c1024], %38 {strides = array<i32>} : memref<256x1152xbf16, #tpu.memory_space<vmem>>, vector<256x128xbf16>,
    %c0_41 = arith.constant 0 : index
    %c0_42 = arith.constant 0 : index
    %40 = vector.load %arg10[%c0_41, %c0_42] : memref<256x1152xbf16, #tpu.memory_space<vmem>>, vector<256x1152xbf16>
    %c0_43 = arith.constant 0 : index
    %c0_44 = arith.constant 0 : index
    %41 = vector.load %arg2[%c0_43, %c0_44] : memref<1152x128xbf16, #tpu.memory_space<vmem>>, vector<1152x128xbf16>
    %cst = arith.constant dense<0.000000e+00> : vector<256x128xf32>
    %42 = tpu.matmul %40, %41, %cst {dimension_numbers = #tpu.dot_dimension_numbers<[1], [0], [0], [1], [0, 0, 1, 1], [], []>} : vector<256x1152xbf16>, vector<1152x128xbf16>, vector<256x128xf32> -> vector<256x128xf32>
    %c0_45 = arith.constant 0 : index
    %c0_46 = arith.constant 0 : index
    %43 = vector.load %arg4[%c0_45, %c0_46] : memref<1x128xf32, #tpu.memory_space<vmem>>, vector<1x128xf32>
    %44 = vector.broadcast %43 : vector<1x128xf32> to vector<256x128xf32>
    %45 = arith.mulf %42, %44 : vector<256x128xf32>
    %c0_47 = arith.constant 0 : index
    %c0_48 = arith.constant 0 : index
    %46 = vector.load %arg5[%c0_47, %c0_48] : memref<1x128xf32, #tpu.memory_space<vmem>>, vector<1x128xf32>
    %47 = vector.broadcast %46 : vector<1x128xf32> to vector<256x128xf32>
    %48 = arith.addf %45, %47 : vector<256x128xf32>
    %cst_49 = arith.constant 0.000000e+00 : f32
    %cst_50 = arith.constant 2.000000e+01 : f32
    %49 = vector.broadcast %cst_49 : f32 to vector<256x128xf32>
    %50 = arith.maximumf %49, %48 : vector<256x128xf32>
    %51 = vector.broadcast %cst_50 : f32 to vector<256x128xf32>
    %52 = arith.minimumf %51, %50 : vector<256x128xf32>
    %cst_51 = arith.constant 0.000000e+00 : f32
    %53 = vector.broadcast %cst_51 : f32 to vector<18x18x128xf32>
    %c0_52 = arith.constant 0 : index
    %c0_53 = arith.constant 0 : index
    %c0_54 = arith.constant 0 : index
    %54 = vector.load %arg11[%c0_52, %c0_53, %c0_54] : memref<18x18x128xf32, #tpu.memory_space<vmem>>, vector<18x18x128xf32>
    tpu.vector_store %arg11[%c0_52, %c0_53, %c0_54], %53 {strides = array<i32>} : memref<18x18x128xf32, #tpu.memory_space<vmem>>, vector<18x18x128xf32>,
    %55 = vector.shape_cast %52 : vector<256x128xf32> to vector<16x16x128xf32>
    %c1_55 = arith.constant 1 : index
    %c1_56 = arith.constant 1 : index
    %c0_57 = arith.constant 0 : index
    %56 = vector.load %arg11[%c1_55, %c1_56, %c0_57] : memref<18x18x128xf32, #tpu.memory_space<vmem>>, vector<16x16x128xf32>
    tpu.vector_store %arg11[%c1_55, %c1_56, %c0_57], %55 {strides = array<i32>} : memref<18x18x128xf32, #tpu.memory_space<vmem>>, vector<16x16x128xf32>,
    %c0_58 = arith.constant 0 : index
    %c0_59 = arith.constant 0 : index
    %c0_60 = arith.constant 0 : index
    %57 = vector.load %arg11[%c0_58, %c0_59, %c0_60] : memref<18x18x128xf32, #tpu.memory_space<vmem>>, vector<16x16x128xf32>
    %58 = arith.truncf %57 : vector<16x16x128xf32> to vector<16x16x128xbf16>
    %59 = vector.shape_cast %58 : vector<16x16x128xbf16> to vector<256x128xbf16>
    %c0_61 = arith.constant 0 : index
    %c0_62 = arith.constant 0 : index
    %60 = vector.load %arg10[%c0_61, %c0_62] : memref<256x1152xbf16, #tpu.memory_space<vmem>>, vector<256x128xbf16>
    tpu.vector_store %arg10[%c0_61, %c0_62], %59 {strides = array<i32>} : memref<256x1152xbf16, #tpu.memory_space<vmem>>, vector<256x128xbf16>,
    %c0_63 = arith.constant 0 : index
    %c1_64 = arith.constant 1 : index
    %c0_65 = arith.constant 0 : index
    %61 = vector.load %arg11[%c0_63, %c1_64, %c0_65] : memref<18x18x128xf32, #tpu.memory_space<vmem>>, vector<16x16x128xf32>
    %62 = arith.truncf %61 : vector<16x16x128xf32> to vector<16x16x128xbf16>
    %63 = vector.shape_cast %62 : vector<16x16x128xbf16> to vector<256x128xbf16>
    %c0_66 = arith.constant 0 : index
    %c128_67 = arith.constant 128 : index
    %64 = vector.load %arg10[%c0_66, %c128_67] : memref<256x1152xbf16, #tpu.memory_space<vmem>>, vector<256x128xbf16>
    tpu.vector_store %arg10[%c0_66, %c128_67], %63 {strides = array<i32>} : memref<256x1152xbf16, #tpu.memory_space<vmem>>, vector<256x128xbf16>,
    %c0_68 = arith.constant 0 : index
    %c2_69 = arith.constant 2 : index
    %c0_70 = arith.constant 0 : index
    %65 = vector.load %arg11[%c0_68, %c2_69, %c0_70] : memref<18x18x128xf32, #tpu.memory_space<vmem>>, vector<16x16x128xf32>
    %66 = arith.truncf %65 : vector<16x16x128xf32> to vector<16x16x128xbf16>
    %67 = vector.shape_cast %66 : vector<16x16x128xbf16> to vector<256x128xbf16>
    %c0_71 = arith.constant 0 : index
    %c256_72 = arith.constant 256 : index
    %68 = vector.load %arg10[%c0_71, %c256_72] : memref<256x1152xbf16, #tpu.memory_space<vmem>>, vector<256x128xbf16>
    tpu.vector_store %arg10[%c0_71, %c256_72], %67 {strides = array<i32>} : memref<256x1152xbf16, #tpu.memory_space<vmem>>, vector<256x128xbf16>,
    %c1_73 = arith.constant 1 : index
    %c0_74 = arith.constant 0 : index
    %c0_75 = arith.constant 0 : index
    %69 = vector.load %arg11[%c1_73, %c0_74, %c0_75] : memref<18x18x128xf32, #tpu.memory_space<vmem>>, vector<16x16x128xf32>
    %70 = arith.truncf %69 : vector<16x16x128xf32> to vector<16x16x128xbf16>
    %71 = vector.shape_cast %70 : vector<16x16x128xbf16> to vector<256x128xbf16>
    %c0_76 = arith.constant 0 : index
    %c384_77 = arith.constant 384 : index
    %72 = vector.load %arg10[%c0_76, %c384_77] : memref<256x1152xbf16, #tpu.memory_space<vmem>>, vector<256x128xbf16>
    tpu.vector_store %arg10[%c0_76, %c384_77], %71 {strides = array<i32>} : memref<256x1152xbf16, #tpu.memory_space<vmem>>, vector<256x128xbf16>,
    %c1_78 = arith.constant 1 : index
    %c1_79 = arith.constant 1 : index
    %c0_80 = arith.constant 0 : index
    %73 = vector.load %arg11[%c1_78, %c1_79, %c0_80] : memref<18x18x128xf32, #tpu.memory_space<vmem>>, vector<16x16x128xf32>
    %74 = arith.truncf %73 : vector<16x16x128xf32> to vector<16x16x128xbf16>
    %75 = vector.shape_cast %74 : vector<16x16x128xbf16> to vector<256x128xbf16>
    %c0_81 = arith.constant 0 : index
    %c512_82 = arith.constant 512 : index
    %76 = vector.load %arg10[%c0_81, %c512_82] : memref<256x1152xbf16, #tpu.memory_space<vmem>>, vector<256x128xbf16>
    tpu.vector_store %arg10[%c0_81, %c512_82], %75 {strides = array<i32>} : memref<256x1152xbf16, #tpu.memory_space<vmem>>, vector<256x128xbf16>,
    %c1_83 = arith.constant 1 : index
    %c2_84 = arith.constant 2 : index
    %c0_85 = arith.constant 0 : index
    %77 = vector.load %arg11[%c1_83, %c2_84, %c0_85] : memref<18x18x128xf32, #tpu.memory_space<vmem>>, vector<16x16x128xf32>
    %78 = arith.truncf %77 : vector<16x16x128xf32> to vector<16x16x128xbf16>
    %79 = vector.shape_cast %78 : vector<16x16x128xbf16> to vector<256x128xbf16>
    %c0_86 = arith.constant 0 : index
    %c640_87 = arith.constant 640 : index
    %80 = vector.load %arg10[%c0_86, %c640_87] : memref<256x1152xbf16, #tpu.memory_space<vmem>>, vector<256x128xbf16>
    tpu.vector_store %arg10[%c0_86, %c640_87], %79 {strides = array<i32>} : memref<256x1152xbf16, #tpu.memory_space<vmem>>, vector<256x128xbf16>,
    %c2_88 = arith.constant 2 : index
    %c0_89 = arith.constant 0 : index
    %c0_90 = arith.constant 0 : index
    %81 = vector.load %arg11[%c2_88, %c0_89, %c0_90] : memref<18x18x128xf32, #tpu.memory_space<vmem>>, vector<16x16x128xf32>
    %82 = arith.truncf %81 : vector<16x16x128xf32> to vector<16x16x128xbf16>
    %83 = vector.shape_cast %82 : vector<16x16x128xbf16> to vector<256x128xbf16>
    %c0_91 = arith.constant 0 : index
    %c768_92 = arith.constant 768 : index
    %84 = vector.load %arg10[%c0_91, %c768_92] : memref<256x1152xbf16, #tpu.memory_space<vmem>>, vector<256x128xbf16>
    tpu.vector_store %arg10[%c0_91, %c768_92], %83 {strides = array<i32>} : memref<256x1152xbf16, #tpu.memory_space<vmem>>, vector<256x128xbf16>,
    %c2_93 = arith.constant 2 : index
    %c1_94 = arith.constant 1 : index
    %c0_95 = arith.constant 0 : index
    %85 = vector.load %arg11[%c2_93, %c1_94, %c0_95] : memref<18x18x128xf32, #tpu.memory_space<vmem>>, vector<16x16x128xf32>
    %86 = arith.truncf %85 : vector<16x16x128xf32> to vector<16x16x128xbf16>
    %87 = vector.shape_cast %86 : vector<16x16x128xbf16> to vector<256x128xbf16>
    %c0_96 = arith.constant 0 : index
    %c896_97 = arith.constant 896 : index
    %88 = vector.load %arg10[%c0_96, %c896_97] : memref<256x1152xbf16, #tpu.memory_space<vmem>>, vector<256x128xbf16>
    tpu.vector_store %arg10[%c0_96, %c896_97], %87 {strides = array<i32>} : memref<256x1152xbf16, #tpu.memory_space<vmem>>, vector<256x128xbf16>,
    %c2_98 = arith.constant 2 : index
    %c2_99 = arith.constant 2 : index
    %c0_100 = arith.constant 0 : index
    %89 = vector.load %arg11[%c2_98, %c2_99, %c0_100] : memref<18x18x128xf32, #tpu.memory_space<vmem>>, vector<16x16x128xf32>
    %90 = arith.truncf %89 : vector<16x16x128xf32> to vector<16x16x128xbf16>
    %91 = vector.shape_cast %90 : vector<16x16x128xbf16> to vector<256x128xbf16>
    %c0_101 = arith.constant 0 : index
    %c1024_102 = arith.constant 1024 : index
    %92 = vector.load %arg10[%c0_101, %c1024_102] : memref<256x1152xbf16, #tpu.memory_space<vmem>>, vector<256x128xbf16>
    tpu.vector_store %arg10[%c0_101, %c1024_102], %91 {strides = array<i32>} : memref<256x1152xbf16, #tpu.memory_space<vmem>>, vector<256x128xbf16>,
    %c0_103 = arith.constant 0 : index
    %c0_104 = arith.constant 0 : index
    %93 = vector.load %arg10[%c0_103, %c0_104] : memref<256x1152xbf16, #tpu.memory_space<vmem>>, vector<256x1152xbf16>
    %c0_105 = arith.constant 0 : index
    %c0_106 = arith.constant 0 : index
    %94 = vector.load %arg3[%c0_105, %c0_106] : memref<1152x128xbf16, #tpu.memory_space<vmem>>, vector<1152x128xbf16>
    %cst_107 = arith.constant dense<0.000000e+00> : vector<256x128xf32>
    %95 = tpu.matmul %93, %94, %cst_107 {dimension_numbers = #tpu.dot_dimension_numbers<[1], [0], [0], [1], [0, 0, 1, 1], [], []>} : vector<256x1152xbf16>, vector<1152x128xbf16>, vector<256x128xf32> -> vector<256x128xf32>
    %c1_108 = arith.constant 1 : index
    %c1_109 = arith.constant 1 : index
    %c0_110 = arith.constant 0 : index
    %96 = vector.load %arg9[%c1_108, %c1_109, %c0_110] : memref<18x18x128xf32, #tpu.memory_space<vmem>>, vector<16x16x128xf32>
    %97 = vector.shape_cast %96 : vector<16x16x128xf32> to vector<256x128xf32>
    %c0_111 = arith.constant 0 : index
    %c0_112 = arith.constant 0 : index
    %98 = vector.load %arg6[%c0_111, %c0_112] : memref<1x128xf32, #tpu.memory_space<vmem>>, vector<1x128xf32>
    %99 = vector.broadcast %98 : vector<1x128xf32> to vector<256x128xf32>
    %100 = arith.mulf %95, %99 : vector<256x128xf32>
    %c0_113 = arith.constant 0 : index
    %c0_114 = arith.constant 0 : index
    %101 = vector.load %arg7[%c0_113, %c0_114] : memref<1x128xf32, #tpu.memory_space<vmem>>, vector<1x128xf32>
    %102 = vector.broadcast %101 : vector<1x128xf32> to vector<256x128xf32>
    %103 = arith.addf %100, %102 : vector<256x128xf32>
    %104 = arith.addf %103, %97 : vector<256x128xf32>
    %cst_115 = arith.constant 0.000000e+00 : f32
    %cst_116 = arith.constant 2.000000e+01 : f32
    %105 = vector.broadcast %cst_115 : f32 to vector<256x128xf32>
    %106 = arith.maximumf %105, %104 : vector<256x128xf32>
    %107 = vector.broadcast %cst_116 : f32 to vector<256x128xf32>
    %108 = arith.minimumf %107, %106 : vector<256x128xf32>
    %109 = vector.shape_cast %108 : vector<256x128xf32> to vector<16x16x128xf32>
    %c0_117 = arith.constant 0 : index
    %c0_118 = arith.constant 0 : index
    %c0_119 = arith.constant 0 : index
    %c0_120 = arith.constant 0 : index
    %110 = vector.load %arg8[%c0_117, %c0_118, %c0_119, %c0_120] : memref<1x16x16x128xf32, #tpu.memory_space<vmem>>, vector<1x16x16x128xf32>
    %111 = vector.shape_cast %110 : vector<1x16x16x128xf32> to vector<16x16x128xf32>
    %112 = vector.shape_cast %109 : vector<16x16x128xf32> to vector<1x16x16x128xf32>
    tpu.vector_store %arg8[%c0_117, %c0_118, %c0_119, %c0_120], %112 {strides = array<i32>} : memref<1x16x16x128xf32, #tpu.memory_space<vmem>>, vector<1x16x16x128xf32>,
    return
  }
  func.func @transform_0(%arg0: i32) -> (i32, i32, i32, i32) {
    %c0_i32 = arith.constant 0 : i32
    %c0_i32_0 = arith.constant 0 : i32
    %c0_i32_1 = arith.constant 0 : i32
    %c0_i32_2 = arith.constant 0 : i32
    return %arg0, %c0_i32, %c0_i32_0, %c0_i32_1 : i32, i32, i32, i32
  }
  func.func @transform_1(%arg0: i32) -> (i32, i32) {
    %c0_i32 = arith.constant 0 : i32
    %c0_i32_0 = arith.constant 0 : i32
    %c0_i32_1 = arith.constant 0 : i32
    return %c0_i32, %c0_i32_0 : i32, i32
  }
  func.func @transform_2(%arg0: i32) -> (i32, i32) {
    %c0_i32 = arith.constant 0 : i32
    %c0_i32_0 = arith.constant 0 : i32
    %c0_i32_1 = arith.constant 0 : i32
    return %c0_i32, %c0_i32_0 : i32, i32
  }
  func.func @transform_3(%arg0: i32) -> (i32, i32) {
    %c0_i32 = arith.constant 0 : i32
    %c0_i32_0 = arith.constant 0 : i32
    %c0_i32_1 = arith.constant 0 : i32
    return %c0_i32, %c0_i32_0 : i32, i32
  }
  func.func @transform_4(%arg0: i32) -> (i32, i32) {
    %c0_i32 = arith.constant 0 : i32
    %c0_i32_0 = arith.constant 0 : i32
    %c0_i32_1 = arith.constant 0 : i32
    return %c0_i32, %c0_i32_0 : i32, i32
  }
  func.func @transform_5(%arg0: i32) -> (i32, i32) {
    %c0_i32 = arith.constant 0 : i32
    %c0_i32_0 = arith.constant 0 : i32
    %c0_i32_1 = arith.constant 0 : i32
    return %c0_i32, %c0_i32_0 : i32, i32
  }
  func.func @transform_6(%arg0: i32) -> (i32, i32) {
    %c0_i32 = arith.constant 0 : i32
    %c0_i32_0 = arith.constant 0 : i32
    %c0_i32_1 = arith.constant 0 : i32
    return %c0_i32, %c0_i32_0 : i32, i32
  }
  func.func @transform_7(%arg0: i32) -> (i32, i32, i32, i32) {
    %c0_i32 = arith.constant 0 : i32
    %c0_i32_0 = arith.constant 0 : i32
    %c0_i32_1 = arith.constant 0 : i32
    %c0_i32_2 = arith.constant 0 : i32
    return %arg0, %c0_i32, %c0_i32_0, %c0_i32_1 : i32, i32, i32, i32
  }
}

</mosaic_0001>

<llo_original>
// kernel: tpu_custom_call.1
$region0: #{tpu_custom_call.1}
  #allocation0 [shape = 'u32[]', space=smem, size = 0x4, offset = 0x4, fixed_abs, tag = 'smem constant byte address 0x4 - core index']
  #allocation1 [shape = 'u32[144,128]{1,0:T(1,128)}', space=vmem, size = 0x12000, scoped, tag = 'internal scratch']
  #allocation2 [shape = 'f32[18,18,128]{2,1,0:T(8,128)}', space=vmem, size = 0x36000, scoped, tag = 'scratch operand']
  #allocation3 [shape = 'bf16[256,1152]{1,0:T(16,128)(2,1)}', space=vmem, size = 0x90000, scoped, tag = 'scratch operand']
  #allocation4 [shape = 'f32[18,18,128]{2,1,0:T(8,128)}', space=vmem, size = 0x36000, scoped, tag = 'scratch operand']
  %s0 = inlined_call_operand.vmem [shape: bf16[2,18,18,128], index: 0, kind: input, shape index: {}]
  %s1 = inlined_call_operand.vmem [shape: bf16[1152,128], index: 1, kind: input, shape index: {}]
  %s2 = inlined_call_operand.hbm [shape: bf16[1152,128], index: 2, kind: input, shape index: {}]
  %s3 = inlined_call_operand.vmem [shape: f32[1,128], index: 3, kind: input, shape index: {}]
  %s4 = inlined_call_operand.vmem [shape: f32[1,128], index: 4, kind: input, shape index: {}]
  %s5 = inlined_call_operand.vmem [shape: f32[1,128], index: 5, kind: input, shape index: {}]
  %s6 = inlined_call_operand.vmem [shape: f32[1,128], index: 6, kind: input, shape index: {}]
  %s7 = inlined_call_operand.hbm [shape: f32[2,16,16,128], index: 7, kind: output, shape index: {}]
  %s8 = sld [smem:[#allocation0]]
  $region65: #{tpu_custom_call.1} parent=0
    _
  %s10 = ssub.s32 1, %s8
  %s11 = scalar_select 0, %s10, %s8
  $region1: #{tpu_custom_call.1} parent=0
    #allocation5 [shape = 'u8[294912]{0}', space=vmem, size = 0x48000, scoped, tag = 'input window, operand 2, single buffered']
    #allocation6 [shape = 's32[2]{0}', space=sflag, size = 0x8, scoped, tag = 'scoped memory for tpu_custom_call.1']
    #allocation7 [shape = 's32[2]{0}', space=sflag, size = 0x8, scoped, tag = 'scoped memory for tpu_custom_call.1']
    #allocation8 [shape = 'u8[262144]{0}', space=vmem, size = 0x40000, scoped, tag = 'output window, operand 0']
    %12 = vsyncpa [#allocation6], 0
    %13 = vsyncpa [#allocation7], 0
    %s14 = scalar_lea.sflag [#allocation7], 1
    %15 = vsyncpa %s14, 0
    loop: start=0, step=1, limit=4
    $region2: #{tpu_custom_call.1} parent=1 // loop_pre_header
      _
    $region3: #{tpu_custom_call.1} parent=1 // loop_header
      %s17 = sphi 0, %s21
      %p18 = scmp.ge.s32.totalorder %s17, 4
      %s27 = sphi 0, %s29
      %s30 = sphi 0, %s27
      %s31 = sphi 0, %s30
      %s47 = sphi 0, %s31
      %s51 = sphi 0, %s51
      %s53 = sphi 0, %s51
      %s54 = sphi 0, %s53
      %s68 = sphi 0, %s54
      %s72 = sphi 0, %s72
      %s74 = sphi 0, %s72
      %s75 = sphi 0, %s74
      %s89 = sphi 0, %s75
      %s93 = sphi 0, %s93
      %s95 = sphi 0, %s93
      %s96 = sphi 0, %s95
      %s110 = sphi 0, %s96
      %s114 = sphi 0, %s114
      %s116 = sphi 0, %s114
      %s117 = sphi 0, %s116
      %s131 = sphi 0, %s117
      %s135 = sphi 0, %s135
      %s137 = sphi 0, %s135
      %s138 = sphi 0, %s137
      %s152 = sphi 0, %s138
      %s156 = sphi 0, %s156
      %s158 = sphi 0, %s156
      %s159 = sphi 0, %s158
      %s173 = sphi 0, %s159
      %s179 = sphi 0, %s181
      %s182 = sphi 0, %s179
      %s183 = sphi 0, %s182
      %s199 = sphi 0, %s183
    $region4: #{tpu_custom_call.1} parent=1 // loop_header_branch
      %20 = sbr.rel (%p18) target = $region8
    $region5: #{tpu_custom_call.1} parent=1 // loop_body
      %s22 = ssub.s32 %s17, 1
      %s23 = ssub.s32 %s17, 2
      %s24 = sadd.s32 %s17, 1
      %s25 = ssub.s32 %s17, %s24
      %p26 = scmp.eq.s32.totalorder %s25, 0
      %s28 = sadd.s32 %s27, 1
      %s29 = scalar_select %p26, %s27, %s28
      %p32 = pneg %p26
      %p33 = scmp.eq.s32.totalorder %s17, 1
      %p34 = por %p32, %p33
      %p35 = scmp.ne.s32.totalorder %s27, %s30
      %p36 = scmp.eq.s32.totalorder %s17, 0
      %p37 = por %p35, %p36
      %p38 = scmp.ne.s32.totalorder %s27, %s30
      %p39 = scmp.eq.s32.totalorder %s22, 1
      %p40 = por %p38, %p39
      %p41 = scmp.ne.s32.totalorder %s30, %s31
      %p42 = scmp.eq.s32.totalorder %s22, 0
      %p43 = por %p41, %p42
      %p44 = scmp.ne.s32.totalorder %s30, %s31
      %p45 = scmp.eq.s32.totalorder %s23, 1
      %p46 = por %p44, %p45
      %p48 = scmp.ne.s32.totalorder %s31, %s47
      %p49 = scmp.eq.s32.totalorder %s23, 0
      %p50 = por %p48, %p49
      %s52 = sadd.s32 %s51, 1
      %p55 = scmp.eq.s32.totalorder %s17, 1
      %p56 = scmp.ne.s32.totalorder %s51, %s53
      %p57 = scmp.eq.s32.totalorder %s17, 0
      %p58 = por %p56, %p57
      %p59 = scmp.ne.s32.totalorder %s51, %s53
      %p60 = scmp.eq.s32.totalorder %s22, 1
      %p61 = por %p59, %p60
      %p62 = scmp.ne.s32.totalorder %s53, %s54
      %p63 = scmp.eq.s32.totalorder %s22, 0
      %p64 = por %p62, %p63
      %p65 = scmp.ne.s32.totalorder %s53, %s54
      %p66 = scmp.eq.s32.totalorder %s23, 1
      %p67 = por %p65, %p66
      %p69 = scmp.ne.s32.totalorder %s54, %s68
      %p70 = scmp.eq.s32.totalorder %s23, 0
      %p71 = por %p69, %p70
      %s73 = sadd.s32 %s72, 1
      %p76 = scmp.eq.s32.totalorder %s17, 1
      %p77 = scmp.ne.s32.totalorder %s72, %s74
      %p78 = scmp.eq.s32.totalorder %s17, 0
      %p79 = por %p77, %p78
      %p80 = scmp.ne.s32.totalorder %s72, %s74
      %p81 = scmp.eq.s32.totalorder %s22, 1
      %p82 = por %p80, %p81
      %p83 = scmp.ne.s32.totalorder %s74, %s75
      %p84 = scmp.eq.s32.totalorder %s22, 0
      %p85 = por %p83, %p84
      %p86 = scmp.ne.s32.totalorder %s74, %s75
      %p87 = scmp.eq.s32.totalorder %s23, 1
      %p88 = por %p86, %p87
      %p90 = scmp.ne.s32.totalorder %s75, %s89
      %p91 = scmp.eq.s32.totalorder %s23, 0
      %p92 = por %p90, %p91
      %s94 = sadd.s32 %s93, 1
      %p97 = scmp.eq.s32.totalorder %s17, 1
      %p98 = scmp.ne.s32.totalorder %s93, %s95
      %p99 = scmp.eq.s32.totalorder %s17, 0
      %p100 = por %p98, %p99
      %p101 = scmp.ne.s32.totalorder %s93, %s95
      %p102 = scmp.eq.s32.totalorder %s22, 1
      %p103 = por %p101, %p102
      %p104 = scmp.ne.s32.totalorder %s95, %s96
      %p105 = scmp.eq.s32.totalorder %s22, 0
      %p106 = por %p104, %p105
      %p107 = scmp.ne.s32.totalorder %s95, %s96
      %p108 = scmp.eq.s32.totalorder %s23, 1
      %p109 = por %p107, %p108
      %p111 = scmp.ne.s32.totalorder %s96, %s110
      %p112 = scmp.eq.s32.totalorder %s23, 0
      %p113 = por %p111, %p112
      %s115 = sadd.s32 %s114, 1
      %p118 = scmp.eq.s32.totalorder %s17, 1
      %p119 = scmp.ne.s32.totalorder %s114, %s116
      %p120 = scmp.eq.s32.totalorder %s17, 0
      %p121 = por %p119, %p120
      %p122 = scmp.ne.s32.totalorder %s114, %s116
      %p123 = scmp.eq.s32.totalorder %s22, 1
      %p124 = por %p122, %p123
      %p125 = scmp.ne.s32.totalorder %s116, %s117
      %p126 = scmp.eq.s32.totalorder %s22, 0
      %p127 = por %p125, %p126
      %p128 = scmp.ne.s32.totalorder %s116, %s117
      %p129 = scmp.eq.s32.totalorder %s23, 1
      %p130 = por %p128, %p129
      %p132 = scmp.ne.s32.totalorder %s117, %s131
      %p133 = scmp.eq.s32.totalorder %s23, 0
      %p134 = por %p132, %p133
      %s136 = sadd.s32 %s135, 1
      %p139 = scmp.eq.s32.totalorder %s17, 1
      %p140 = scmp.ne.s32.totalorder %s135, %s137
      %p141 = scmp.eq.s32.totalorder %s17, 0
      %p142 = por %p140, %p141
      %p143 = scmp.ne.s32.totalorder %s135, %s137
      %p144 = scmp.eq.s32.totalorder %s22, 1
      %p145 = por %p143, %p144
      %p146 = scmp.ne.s32.totalorder %s137, %s138
      %p147 = scmp.eq.s32.totalorder %s22, 0
      %p148 = por %p146, %p147
      %p149 = scmp.ne.s32.totalorder %s137, %s138
      %p150 = scmp.eq.s32.totalorder %s23, 1
      %p151 = por %p149, %p150
      %p153 = scmp.ne.s32.totalorder %s138, %s152
      %p154 = scmp.eq.s32.totalorder %s23, 0
      %p155 = por %p153, %p154
      %s157 = sadd.s32 %s156, 1
      %p160 = scmp.eq.s32.totalorder %s17, 1
      %p161 = scmp.ne.s32.totalorder %s156, %s158
      %p162 = scmp.eq.s32.totalorder %s17, 0
      %p163 = por %p161, %p162
      %p164 = scmp.ne.s32.totalorder %s156, %s158
      %p165 = scmp.eq.s32.totalorder %s22, 1
      %p166 = por %p164, %p165
      %p167 = scmp.ne.s32.totalorder %s158, %s159
      %p168 = scmp.eq.s32.totalorder %s22, 0
      %p169 = por %p167, %p168
      %p170 = scmp.ne.s32.totalorder %s158, %s159
      %p171 = scmp.eq.s32.totalorder %s23, 1
      %p172 = por %p170, %p171
      %p174 = scmp.ne.s32.totalorder %s159, %s173
      %p175 = scmp.eq.s32.totalorder %s23, 0
      %p176 = por %p174, %p175
      %s177 = ssub.s32 %s17, %s24
      %p178 = scmp.eq.s32.totalorder %s177, 0
      %s180 = sadd.s32 %s179, 1
      %s181 = scalar_select %p178, %s179, %s180
      %p184 = pneg %p178
      %p185 = scmp.eq.s32.totalorder %s17, 1
      %p186 = por %p184, %p185
      %p187 = scmp.ne.s32.totalorder %s179, %s182
      %p188 = scmp.eq.s32.totalorder %s17, 0
      %p189 = por %p187, %p188
      %p190 = scmp.ne.s32.totalorder %s179, %s182
      %p191 = scmp.eq.s32.totalorder %s22, 1
      %p192 = por %p190, %p191
      %p193 = scmp.ne.s32.totalorder %s182, %s183
      %p194 = scmp.eq.s32.totalorder %s22, 0
      %p195 = por %p193, %p194
      %p196 = scmp.ne.s32.totalorder %s182, %s183
      %p197 = scmp.eq.s32.totalorder %s23, 1
      %p198 = por %p196, %p197
      %p200 = scmp.ne.s32.totalorder %s183, %s199
      %p201 = scmp.eq.s32.totalorder %s23, 0
      %p202 = por %p200, %p201
      %p203 = scmp.le.s32.totalorder 1, %s17
      %p204 = scmp.lt.s32.totalorder %s17, 3
      %p205 = pnand %p203, %p204
      %p206 = pneg %p205
      // Predicated region
      $region9: #{tpu_custom_call.1} parent=5 // pred_check
        _
      $region10: #{tpu_custom_call.1} parent=5 // pred_check_branch
        %208 = sbr.rel (%p205) target = $region12
      $region11: #{tpu_custom_call.1} parent=5 // pred_region
        %s209 = ssub.s32 %s17, 1
        // Predicated region
        $region13: #{tpu_custom_call.1} parent=11 // pred_check
          %p210 = pneg %p64
        $region14: #{tpu_custom_call.1} parent=11 // pred_check_branch
          %212 = sbr.rel (%p210) target = $region16
        $region15: #{tpu_custom_call.1} parent=11 // pred_region
          _
        $region16: #{tpu_custom_call.1} parent=11 // pred_fallthru
          _
        // Predicated region
        $region17: #{tpu_custom_call.1} parent=11 // pred_check
          %p213 = pneg %p85
        $region18: #{tpu_custom_call.1} parent=11 // pred_check_branch
          %215 = sbr.rel (%p213) target = $region20
        $region19: #{tpu_custom_call.1} parent=11 // pred_region
          %s217 = ssub.s32 9216, 9216
          %218 = vsyncadd [#allocation6], %s217
          %s219 = sshll.u32 [#allocation5], 4
          %s220 = int_to_ptr.vmem [resolvable:$true] %s219
          %225 = dma.hbm_to_vmem [thread:$0]  %s2, 9216, %s220, [#allocation6], 64, 64, 4
        $region20: #{tpu_custom_call.1} parent=11 // pred_fallthru
          _
        // Predicated region
        $region21: #{tpu_custom_call.1} parent=11 // pred_check
          %p226 = pneg %p106
        $region22: #{tpu_custom_call.1} parent=11 // pred_check_branch
          %228 = sbr.rel (%p226) target = $region24
        $region23: #{tpu_custom_call.1} parent=11 // pred_region
          _
        $region24: #{tpu_custom_call.1} parent=11 // pred_fallthru
          _
        // Predicated region
        $region25: #{tpu_custom_call.1} parent=11 // pred_check
          %p229 = pneg %p127
        $region26: #{tpu_custom_call.1} parent=11 // pred_check_branch
          %231 = sbr.rel (%p229) target = $region28
        $region27: #{tpu_custom_call.1} parent=11 // pred_region
          _
        $region28: #{tpu_custom_call.1} parent=11 // pred_fallthru
          _
        // Predicated region
        $region29: #{tpu_custom_call.1} parent=11 // pred_check
          %p232 = pneg %p148
        $region30: #{tpu_custom_call.1} parent=11 // pred_check_branch
          %234 = sbr.rel (%p232) target = $region32
        $region31: #{tpu_custom_call.1} parent=11 // pred_region
          _
        $region32: #{tpu_custom_call.1} parent=11 // pred_fallthru
          _
        // Predicated region
        $region33: #{tpu_custom_call.1} parent=11 // pred_check
          %p235 = pneg %p169
        $region34: #{tpu_custom_call.1} parent=11 // pred_check_branch
          %237 = sbr.rel (%p235) target = $region36
        $region35: #{tpu_custom_call.1} parent=11 // pred_region
          _
        $region36: #{tpu_custom_call.1} parent=11 // pred_fallthru
          _
      $region12: #{tpu_custom_call.1} parent=5 // pred_fallthru
        _
      %p238 = scmp.lt.s32.totalorder %s17, 2
      // Predicated region
      $region37: #{tpu_custom_call.1} parent=5 // pred_check
        %p239 = pneg %p238
      $region38: #{tpu_custom_call.1} parent=5 // pred_check_branch
        %241 = sbr.rel (%p239) target = $region40
      $region39: #{tpu_custom_call.1} parent=5 // pred_region
        // Predicated region
        $region41: #{tpu_custom_call.1} parent=39 // pred_check
          %p242 = pneg %p37
        $region42: #{tpu_custom_call.1} parent=39 // pred_check_branch
          %244 = sbr.rel (%p242) target = $region44
        $region43: #{tpu_custom_call.1} parent=39 // pred_region
          %p245 = scmp.lt.s32.totalorder %s17, 1
          %s246 = scalar_select %p245, %s17, 1
          %s247 = smul.addr %s246, 54
          %s248 = smul.addr %s247, 4
          %s249 = scalar_lea.vmem %s0, %s248
        $region44: #{tpu_custom_call.1} parent=39 // pred_fallthru
          _
      $region40: #{tpu_custom_call.1} parent=5 // pred_fallthru
        _
      %p250 = scmp.le.s32.totalorder 1, %s17
      %p251 = scmp.lt.s32.totalorder %s17, 3
      %p252 = pnand %p250, %p251
      %p253 = pneg %p252
      // Predicated region
      $region45: #{tpu_custom_call.1} parent=5 // pred_check
        _
      $region46: #{tpu_custom_call.1} parent=5 // pred_check_branch
        %255 = sbr.rel (%p252) target = $region48
      $region47: #{tpu_custom_call.1} parent=5 // pred_region
        %s256 = ssub.s32 %s17, 1
        // Predicated region
        $region49: #{tpu_custom_call.1} parent=47 // pred_check
          %p257 = pneg %p85
        $region50: #{tpu_custom_call.1} parent=47 // pred_check_branch
          %259 = sbr.rel (%p257) target = $region52
        $region51: #{tpu_custom_call.1} parent=47 // pred_region
          %260 = dma.done [#allocation6], 9216
        $region52: #{tpu_custom_call.1} parent=47 // pred_fallthru
          _
        %p261 = scmp.lt.s32.totalorder %s22, 1
        %s262 = scalar_select %p261, %s22, 1
        %s263 = smul.addr %s262, 54
        %s264 = smul.addr %s263, 4
        %s265 = scalar_lea.vmem %s0, %s264
        %p266 = pneg %p43
        %p267 = pneg %p40
        %p268 = pneg %p64
        %p269 = pneg %p61
        %p270 = pneg %p85
        %p271 = pneg %p82
        %p272 = pneg %p106
        %p273 = pneg %p103
        %p274 = pneg %p127
        %p275 = pneg %p124
        %p276 = pneg %p148
        %p277 = pneg %p145
        %p278 = pneg %p169
        %p279 = pneg %p166
        %p280 = pneg %p195
        %p281 = pneg %p192
        %s282 = sand.u32 %s182, 1
        %s283 = scalar_lea.sflag [#allocation7], %s282
        %s284 = sand.u32 %s182, 1
        %s285 = smul.addr %s284, 256
        %s286 = scalar_lea.vmem [#allocation8], %s285
        %p287 = scmp.lt.s32.totalorder %s22, 1
        %s288 = scalar_select %p287, %s22, 1
        %s289 = smul.addr %s288, 54
        %s290 = smul.addr %s289, 4
        %s291 = scalar_lea.vmem %s0, %s290
        %v293 = vld [vmem:[%s291] sm:$0xf]
        %v294 = vld [vmem:[%s291 + $0x4] sm:$0xf]
        %v295 = vld [vmem:[%s291 + $0x8] sm:$0x1]
        %v296 = vld [vmem:[%s291 + $0xc] sm:$0xf]
        %v297 = vld [vmem:[%s291 + $0x10] sm:$0xf]
        %v298 = vld [vmem:[%s291 + $0x14] sm:$0x1]
        %v299 = vld [vmem:[%s291 + $0x18] sm:$0xf]
        %v300 = vld [vmem:[%s291 + $0x1c] sm:$0xf]
        %v301 = vld [vmem:[%s291 + $0x20] sm:$0x1]
        %v302 = vld [vmem:[%s291 + $0x24] sm:$0xf]
        %v303 = vld [vmem:[%s291 + $0x28] sm:$0xf]
        %v304 = vld [vmem:[%s291 + $0x2c] sm:$0x1]
        %v305 = vld [vmem:[%s291 + $0x30] sm:$0xf]
        %v306 = vld [vmem:[%s291 + $0x34] sm:$0xf]
        %v307 = vld [vmem:[%s291 + $0x38] sm:$0x1]
        %v308 = vld [vmem:[%s291 + $0x3c] sm:$0xf]
        %v309 = vld [vmem:[%s291 + $0x40] sm:$0xf]
        %v310 = vld [vmem:[%s291 + $0x44] sm:$0x1]
        %v311 = vld [vmem:[%s291 + $0x48] sm:$0xf]
        %v312 = vld [vmem:[%s291 + $0x4c] sm:$0xf]
        %v313 = vld [vmem:[%s291 + $0x50] sm:$0x1]
        %v314 = vld [vmem:[%s291 + $0x54] sm:$0xf]
        %v315 = vld [vmem:[%s291 + $0x58] sm:$0xf]
        %v316 = vld [vmem:[%s291 + $0x5c] sm:$0x1]
        %v317 = vld [vmem:[%s291 + $0x60] sm:$0xf]
        %v318 = vld [vmem:[%s291 + $0x64] sm:$0xf]
        %v319 = vld [vmem:[%s291 + $0x68] sm:$0x1]
        %v320 = vld [vmem:[%s291 + $0x6c] sm:$0xf]
        %v321 = vld [vmem:[%s291 + $0x70] sm:$0xf]
        %v322 = vld [vmem:[%s291 + $0x74] sm:$0x1]
        %v323 = vld [vmem:[%s291 + $0x78] sm:$0xf]
        %v324 = vld [vmem:[%s291 + $0x7c] sm:$0xf]
        %v325 = vld [vmem:[%s291 + $0x80] sm:$0x1]
        %v326 = vld [vmem:[%s291 + $0x84] sm:$0xf]
        %v327 = vld [vmem:[%s291 + $0x88] sm:$0xf]
        %v328 = vld [vmem:[%s291 + $0x8c] sm:$0x1]
        %v329 = vld [vmem:[%s291 + $0x90] sm:$0xf]
        %v330 = vld [vmem:[%s291 + $0x94] sm:$0xf]
        %v331 = vld [vmem:[%s291 + $0x98] sm:$0x1]
        %v332 = vld [vmem:[%s291 + $0x9c] sm:$0xf]
        %v333 = vld [vmem:[%s291 + $0xa0] sm:$0xf]
        %v334 = vld [vmem:[%s291 + $0xa4] sm:$0x1]
        %v335 = vld [vmem:[%s291 + $0xa8] sm:$0xf]
        %v336 = vld [vmem:[%s291 + $0xac] sm:$0xf]
        %v337 = vld [vmem:[%s291 + $0xb0] sm:$0x1]
        %v338 = vld [vmem:[%s291 + $0xb4] sm:$0xf]
        %v339 = vld [vmem:[%s291 + $0xb8] sm:$0xf]
        %v340 = vld [vmem:[%s291 + $0xbc] sm:$0x1]
        %v341 = vld [vmem:[%s291 + $0xc0] sm:$0xf]
        %v342 = vld [vmem:[%s291 + $0xc4] sm:$0xf]
        %v343 = vld [vmem:[%s291 + $0xc8] sm:$0x1]
        %v344 = vld [vmem:[%s291 + $0xcc] sm:$0xf]
        %v345 = vld [vmem:[%s291 + $0xd0] sm:$0xf]
        %v346 = vld [vmem:[%s291 + $0xd4] sm:$0x1]
        %v347 = vunpack.c.l.bf16 %v293
        %v348 = vunpack.c.l.bf16 %v294
        %v349 = vunpack.c.l.bf16 %v295
        %v350 = vunpack.c.l.bf16 %v296
        %v351 = vunpack.c.l.bf16 %v297
        %v352 = vunpack.c.l.bf16 %v298
        %v353 = vunpack.c.l.bf16 %v299
        %v354 = vunpack.c.l.bf16 %v300
        %v355 = vunpack.c.l.bf16 %v301
        %v356 = vunpack.c.l.bf16 %v302
        %v357 = vunpack.c.l.bf16 %v303
        %v358 = vunpack.c.l.bf16 %v304
        %v359 = vunpack.c.l.bf16 %v305
        %v360 = vunpack.c.l.bf16 %v306
        %v361 = vunpack.c.l.bf16 %v307
        %v362 = vunpack.c.l.bf16 %v308
        %v363 = vunpack.c.l.bf16 %v309
        %v364 = vunpack.c.l.bf16 %v310
        %v365 = vunpack.c.l.bf16 %v311
        %v366 = vunpack.c.l.bf16 %v312
        %v367 = vunpack.c.l.bf16 %v313
        %v368 = vunpack.c.l.bf16 %v314
        %v369 = vunpack.c.l.bf16 %v315
        %v370 = vunpack.c.l.bf16 %v316
        %v371 = vunpack.c.l.bf16 %v317
        %v372 = vunpack.c.l.bf16 %v318
        %v373 = vunpack.c.l.bf16 %v319
        %v374 = vunpack.c.l.bf16 %v320
        %v375 = vunpack.c.l.bf16 %v321
        %v376 = vunpack.c.l.bf16 %v322
        %v377 = vunpack.c.l.bf16 %v323
        %v378 = vunpack.c.l.bf16 %v324
        %v379 = vunpack.c.l.bf16 %v325
        %v380 = vunpack.c.l.bf16 %v326
        %v381 = vunpack.c.l.bf16 %v327
        %v382 = vunpack.c.l.bf16 %v328
        %v383 = vunpack.c.l.bf16 %v329
        %v384 = vunpack.c.l.bf16 %v330
        %v385 = vunpack.c.l.bf16 %v331
        %v386 = vunpack.c.l.bf16 %v332
        %v387 = vunpack.c.l.bf16 %v333
        %v388 = vunpack.c.l.bf16 %v334
        %v389 = vunpack.c.l.bf16 %v335
        %v390 = vunpack.c.l.bf16 %v336
        %v391 = vunpack.c.l.bf16 %v337
        %v392 = vunpack.c.l.bf16 %v338
        %v393 = vunpack.c.l.bf16 %v339
        %v394 = vunpack.c.l.bf16 %v340
        %v395 = vunpack.c.l.bf16 %v341
        %v396 = vunpack.c.l.bf16 %v342
        %v397 = vunpack.c.l.bf16 %v343
        %v398 = vunpack.c.l.bf16 %v344
        %v399 = vunpack.c.l.bf16 %v345
        %v400 = vunpack.c.l.bf16 %v346
        %401 = vst [vmem:[#allocation2] sm:$0xff] %v347
        %402 = vst [vmem:[#allocation2 + $0x8] sm:$0xff] %v348
        %403 = vst [vmem:[#allocation2 + $0x10] sm:$0x3] %v349
        %404 = vst [vmem:[#allocation2 + $0x18] sm:$0xff] %v350
        %405 = vst [vmem:[#allocation2 + $0x20] sm:$0xff] %v351
        %406 = vst [vmem:[#allocation2 + $0x28] sm:$0x3] %v352
        %407 = vst [vmem:[#allocation2 + $0x30] sm:$0xff] %v353
        %408 = vst [vmem:[#allocation2 + $0x38] sm:$0xff] %v354
        %409 = vst [vmem:[#allocation2 + $0x40] sm:$0x3] %v355
        %410 = vst [vmem:[#allocation2 + $0x48] sm:$0xff] %v356
        %411 = vst [vmem:[#allocation2 + $0x50] sm:$0xff] %v357
        %412 = vst [vmem:[#allocation2 + $0x58] sm:$0x3] %v358
        %413 = vst [vmem:[#allocation2 + $0x60] sm:$0xff] %v359
        %414 = vst [vmem:[#allocation2 + $0x68] sm:$0xff] %v360
        %415 = vst [vmem:[#allocation2 + $0x70] sm:$0x3] %v361
        %416 = vst [vmem:[#allocation2 + $0x78] sm:$0xff] %v362
        %417 = vst [vmem:[#allocation2 + $0x80] sm:$0xff] %v363
        %418 = vst [vmem:[#allocation2 + $0x88] sm:$0x3] %v364
        %419 = vst [vmem:[#allocation2 + $0x90] sm:$0xff] %v365
        %420 = vst [vmem:[#allocation2 + $0x98] sm:$0xff] %v366
        %421 = vst [vmem:[#allocation2 + $0xa0] sm:$0x3] %v367
        %422 = vst [vmem:[#allocation2 + $0xa8] sm:$0xff] %v368
        %423 = vst [vmem:[#allocation2 + $0xb0] sm:$0xff] %v369
        %424 = vst [vmem:[#allocation2 + $0xb8] sm:$0x3] %v370
        %425 = vst [vmem:[#allocation2 + $0xc0] sm:$0xff] %v371
        %426 = vst [vmem:[#allocation2 + $0xc8] sm:$0xff] %v372
        %427 = vst [vmem:[#allocation2 + $0xd0] sm:$0x3] %v373
        %428 = vst [vmem:[#allocation2 + $0xd8] sm:$0xff] %v374
        %429 = vst [vmem:[#allocation2 + $0xe0] sm:$0xff] %v375
        %430 = vst [vmem:[#allocation2 + $0xe8] sm:$0x3] %v376
        %431 = vst [vmem:[#allocation2 + $0xf0] sm:$0xff] %v377
        %432 = vst [vmem:[#allocation2 + $0xf8] sm:$0xff] %v378
        %433 = vst [vmem:[#allocation2 + $0x100] sm:$0x3] %v379
        %434 = vst [vmem:[#allocation2 + $0x108] sm:$0xff] %v380
        %435 = vst [vmem:[#allocation2 + $0x110] sm:$0xff] %v381
        %436 = vst [vmem:[#allocation2 + $0x118] sm:$0x3] %v382
        %437 = vst [vmem:[#allocation2 + $0x120] sm:$0xff] %v383
        %438 = vst [vmem:[#allocation2 + $0x128] sm:$0xff] %v384
        %439 = vst [vmem:[#allocation2 + $0x130] sm:$0x3] %v385
        %440 = vst [vmem:[#allocation2 + $0x138] sm:$0xff] %v386
        %441 = vst [vmem:[#allocation2 + $0x140] sm:$0xff] %v387
        %442 = vst [vmem:[#allocation2 + $0x148] sm:$0x3] %v388
        %443 = vst [vmem:[#allocation2 + $0x150] sm:$0xff] %v389
        %444 = vst [vmem:[#allocation2 + $0x158] sm:$0xff] %v390
        %445 = vst [vmem:[#allocation2 + $0x160] sm:$0x3] %v391
        %446 = vst [vmem:[#allocation2 + $0x168] sm:$0xff] %v392
        %447 = vst [vmem:[#allocation2 + $0x170] sm:$0xff] %v393
        %448 = vst [vmem:[#allocation2 + $0x178] sm:$0x3] %v394
        %449 = vst [vmem:[#allocation2 + $0x180] sm:$0xff] %v395
        %450 = vst [vmem:[#allocation2 + $0x188] sm:$0xff] %v396
        %451 = vst [vmem:[#allocation2 + $0x190] sm:$0x3] %v397
        %452 = vst [vmem:[#allocation2 + $0x198] sm:$0xff] %v398
        %453 = vst [vmem:[#allocation2 + $0x1a0] sm:$0xff] %v399
        %454 = vst [vmem:[#allocation2 + $0x1a8] sm:$0x3] %v400
        %v455 = vld [vmem:[#allocation2] sm:$0xff]
        %v456 = vld [vmem:[#allocation2 + $0x8] sm:$0xff]
        %v457 = vld [vmem:[#allocation2 + $0x18] sm:$0xff]
        %v458 = vld [vmem:[#allocation2 + $0x20] sm:$0xff]
        %v459 = vld [vmem:[#allocation2 + $0x30] sm:$0xff]
        %v460 = vld [vmem:[#allocation2 + $0x38] sm:$0xff]
        %v461 = vld [vmem:[#allocation2 + $0x48] sm:$0xff]
        %v462 = vld [vmem:[#allocation2 + $0x50] sm:$0xff]
        %v463 = vld [vmem:[#allocation2 + $0x60] sm:$0xff]
        %v464 = vld [vmem:[#allocation2 + $0x68] sm:$0xff]
        %v465 = vld [vmem:[#allocation2 + $0x78] sm:$0xff]
        %v466 = vld [vmem:[#allocation2 + $0x80] sm:$0xff]
        %v467 = vld [vmem:[#allocation2 + $0x90] sm:$0xff]
        %v468 = vld [vmem:[#allocation2 + $0x98] sm:$0xff]
        %v469 = vld [vmem:[#allocation2 + $0xa8] sm:$0xff]
        %v470 = vld [vmem:[#allocation2 + $0xb0] sm:$0xff]
        %v471 = vld [vmem:[#allocation2 + $0xc0] sm:$0xff]
        %v472 = vld [vmem:[#allocation2 + $0xc8] sm:$0xff]
        %v473 = vld [vmem:[#allocation2 + $0xd8] sm:$0xff]
        %v474 = vld [vmem:[#allocation2 + $0xe0] sm:$0xff]
        %v475 = vld [vmem:[#allocation2 + $0xf0] sm:$0xff]
        %v476 = vld [vmem:[#allocation2 + $0xf8] sm:$0xff]
        %v477 = vld [vmem:[#allocation2 + $0x108] sm:$0xff]
        %v478 = vld [vmem:[#allocation2 + $0x110] sm:$0xff]
        %v479 = vld [vmem:[#allocation2 + $0x120] sm:$0xff]
        %v480 = vld [vmem:[#allocation2 + $0x128] sm:$0xff]
        %v481 = vld [vmem:[#allocation2 + $0x138] sm:$0xff]
        %v482 = vld [vmem:[#allocation2 + $0x140] sm:$0xff]
        %v483 = vld [vmem:[#allocation2 + $0x150] sm:$0xff]
        %v484 = vld [vmem:[#allocation2 + $0x158] sm:$0xff]
        %v485 = vld [vmem:[#allocation2 + $0x168] sm:$0xff]
        %v486 = vld [vmem:[#allocation2 + $0x170] sm:$0xff]
        %v487 = vpack.c.bf16 %v456, %v455
        %v488 = vpack.c.bf16 %v458, %v457
        %v489 = vpack.c.bf16 %v460, %v459
        %v490 = vpack.c.bf16 %v462, %v461
        %v491 = vpack.c.bf16 %v464, %v463
        %v492 = vpack.c.bf16 %v466, %v465
        %v493 = vpack.c.bf16 %v468, %v467
        %v494 = vpack.c.bf16 %v470, %v469
        %v495 = vpack.c.bf16 %v472, %v471
        %v496 = vpack.c.bf16 %v474, %v473
        %v497 = vpack.c.bf16 %v476, %v475
        %v498 = vpack.c.bf16 %v478, %v477
        %v499 = vpack.c.bf16 %v480, %v479
        %v500 = vpack.c.bf16 %v482, %v481
        %v501 = vpack.c.bf16 %v484, %v483
        %v502 = vpack.c.bf16 %v486, %v485
        %503 = vst [vmem:[#allocation3] sm:$0xff] %v487
        %504 = vst [vmem:[#allocation3 + $0x48] sm:$0xff] %v488
        %505 = vst [vmem:[#allocation3 + $0x90] sm:$0xff] %v489
        %506 = vst [vmem:[#allocation3 + $0xd8] sm:$0xff] %v490
        %507 = vst [vmem:[#allocation3 + $0x120] sm:$0xff] %v491
        %508 = vst [vmem:[#allocation3 + $0x168] sm:$0xff] %v492
        %509 = vst [vmem:[#allocation3 + $0x1b0] sm:$0xff] %v493
        %510 = vst [vmem:[#allocation3 + $0x1f8] sm:$0xff] %v494
        %511 = vst [vmem:[#allocation3 + $0x240] sm:$0xff] %v495
        %512 = vst [vmem:[#allocation3 + $0x288] sm:$0xff] %v496
        %513 = vst [vmem:[#allocation3 + $0x2d0] sm:$0xff] %v497
        %514 = vst [vmem:[#allocation3 + $0x318] sm:$0xff] %v498
        %515 = vst [vmem:[#allocation3 + $0x360] sm:$0xff] %v499
        %516 = vst [vmem:[#allocation3 + $0x3a8] sm:$0xff] %v500
        %517 = vst [vmem:[#allocation3 + $0x3f0] sm:$0xff] %v501
        %518 = vst [vmem:[#allocation3 + $0x438] sm:$0xff] %v502
        %v519 = vld [vmem:[#allocation2 + $0x1] sm:$0xff]
        %v520 = vld [vmem:[#allocation2 + $0x9] sm:$0xff]
        %v521 = vld [vmem:[#allocation2 + $0x19] sm:$0xff]
        %v522 = vld [vmem:[#allocation2 + $0x21] sm:$0xff]
        %v523 = vld [vmem:[#allocation2 + $0x31] sm:$0xff]
        %v524 = vld [vmem:[#allocation2 + $0x39] sm:$0xff]
        %v525 = vld [vmem:[#allocation2 + $0x49] sm:$0xff]
        %v526 = vld [vmem:[#allocation2 + $0x51] sm:$0xff]
        %v527 = vld [vmem:[#allocation2 + $0x61] sm:$0xff]
        %v528 = vld [vmem:[#allocation2 + $0x69] sm:$0xff]
        %v529 = vld [vmem:[#allocation2 + $0x79] sm:$0xff]
        %v530 = vld [vmem:[#allocation2 + $0x81] sm:$0xff]
        %v531 = vld [vmem:[#allocation2 + $0x91] sm:$0xff]
        %v532 = vld [vmem:[#allocation2 + $0x99] sm:$0xff]
        %v533 = vld [vmem:[#allocation2 + $0xa9] sm:$0xff]
        %v534 = vld [vmem:[#allocation2 + $0xb1] sm:$0xff]
        %v535 = vld [vmem:[#allocation2 + $0xc1] sm:$0xff]
        %v536 = vld [vmem:[#allocation2 + $0xc9] sm:$0xff]
        %v537 = vld [vmem:[#allocation2 + $0xd9] sm:$0xff]
        %v538 = vld [vmem:[#allocation2 + $0xe1] sm:$0xff]
        %v539 = vld [vmem:[#allocation2 + $0xf1] sm:$0xff]
        %v540 = vld [vmem:[#allocation2 + $0xf9] sm:$0xff]
        %v541 = vld [vmem:[#allocation2 + $0x109] sm:$0xff]
        %v542 = vld [vmem:[#allocation2 + $0x111] sm:$0xff]
        %v543 = vld [vmem:[#allocation2 + $0x121] sm:$0xff]
        %v544 = vld [vmem:[#allocation2 + $0x129] sm:$0xff]
        %v545 = vld [vmem:[#allocation2 + $0x139] sm:$0xff]
        %v546 = vld [vmem:[#allocation2 + $0x141] sm:$0xff]
        %v547 = vld [vmem:[#allocation2 + $0x151] sm:$0xff]
        %v548 = vld [vmem:[#allocation2 + $0x159] sm:$0xff]
        %v549 = vld [vmem:[#allocation2 + $0x169] sm:$0xff]
        %v550 = vld [vmem:[#allocation2 + $0x171] sm:$0xff]
        %v551 = vpack.c.bf16 %v520, %v519
        %v552 = vpack.c.bf16 %v522, %v521
        %v553 = vpack.c.bf16 %v524, %v523
        %v554 = vpack.c.bf16 %v526, %v525
        %v555 = vpack.c.bf16 %v528, %v527
        %v556 = vpack.c.bf16 %v530, %v529
        %v557 = vpack.c.bf16 %v532, %v531
        %v558 = vpack.c.bf16 %v534, %v533
        %v559 = vpack.c.bf16 %v536, %v535
        %v560 = vpack.c.bf16 %v538, %v537
        %v561 = vpack.c.bf16 %v540, %v539
        %v562 = vpack.c.bf16 %v542, %v541
        %v563 = vpack.c.bf16 %v544, %v543
        %v564 = vpack.c.bf16 %v546, %v545
        %v565 = vpack.c.bf16 %v548, %v547
        %v566 = vpack.c.bf16 %v550, %v549
        %567 = vst [vmem:[#allocation3 + $0x8] sm:$0xff] %v551
        %568 = vst [vmem:[#allocation3 + $0x50] sm:$0xff] %v552
        %569 = vst [vmem:[#allocation3 + $0x98] sm:$0xff] %v553
        %570 = vst [vmem:[#allocation3 + $0xe0] sm:$0xff] %v554
        %571 = vst [vmem:[#allocation3 + $0x128] sm:$0xff] %v555
        %572 = vst [vmem:[#allocation3 + $0x170] sm:$0xff] %v556
        %573 = vst [vmem:[#allocation3 + $0x1b8] sm:$0xff] %v557
        %574 = vst [vmem:[#allocation3 + $0x200] sm:$0xff] %v558
        %575 = vst [vmem:[#allocation3 + $0x248] sm:$0xff] %v559
        %576 = vst [vmem:[#allocation3 + $0x290] sm:$0xff] %v560
        %577 = vst [vmem:[#allocation3 + $0x2d8] sm:$0xff] %v561
        %578 = vst [vmem:[#allocation3 + $0x320] sm:$0xff] %v562
        %579 = vst [vmem:[#allocation3 + $0x368] sm:$0xff] %v563
        %580 = vst [vmem:[#allocation3 + $0x3b0] sm:$0xff] %v564
        %581 = vst [vmem:[#allocation3 + $0x3f8] sm:$0xff] %v565
        %582 = vst [vmem:[#allocation3 + $0x440] sm:$0xff] %v566
        %v583 = vld [vmem:[#allocation2 + $0x2] sm:$0xff]
        %v584 = vld [vmem:[#allocation2 + $0xa] sm:$0xff]
        %v585 = vld [vmem:[#allocation2 + $0x1a] sm:$0xff]
        %v586 = vld [vmem:[#allocation2 + $0x22] sm:$0xff]
        %v587 = vld [vmem:[#allocation2 + $0x32] sm:$0xff]
        %v588 = vld [vmem:[#allocation2 + $0x3a] sm:$0xff]
        %v589 = vld [vmem:[#allocation2 + $0x4a] sm:$0xff]
        %v590 = vld [vmem:[#allocation2 + $0x52] sm:$0xff]
        %v591 = vld [vmem:[#allocation2 + $0x62] sm:$0xff]
        %v592 = vld [vmem:[#allocation2 + $0x6a] sm:$0xff]
        %v593 = vld [vmem:[#allocation2 + $0x7a] sm:$0xff]
        %v594 = vld [vmem:[#allocation2 + $0x82] sm:$0xff]
        %v595 = vld [vmem:[#allocation2 + $0x92] sm:$0xff]
        %v596 = vld [vmem:[#allocation2 + $0x9a] sm:$0xff]
        %v597 = vld [vmem:[#allocation2 + $0xaa] sm:$0xff]
        %v598 = vld [vmem:[#allocation2 + $0xb2] sm:$0xff]
        %v599 = vld [vmem:[#allocation2 + $0xc2] sm:$0xff]
        %v600 = vld [vmem:[#allocation2 + $0xca] sm:$0xff]
        %v601 = vld [vmem:[#allocation2 + $0xda] sm:$0xff]
        %v602 = vld [vmem:[#allocation2 + $0xe2] sm:$0xff]
        %v603 = vld [vmem:[#allocation2 + $0xf2] sm:$0xff]
        %v604 = vld [vmem:[#allocation2 + $0xfa] sm:$0xff]
        %v605 = vld [vmem:[#allocation2 + $0x10a] sm:$0xff]
        %v606 = vld [vmem:[#allocation2 + $0x112] sm:$0xff]
        %v607 = vld [vmem:[#allocation2 + $0x122] sm:$0xff]
        %v608 = vld [vmem:[#allocation2 + $0x12a] sm:$0xff]
        %v609 = vld [vmem:[#allocation2 + $0x13a] sm:$0xff]
        %v610 = vld [vmem:[#allocation2 + $0x142] sm:$0xff]
        %v611 = vld [vmem:[#allocation2 + $0x152] sm:$0xff]
        %v612 = vld [vmem:[#allocation2 + $0x15a] sm:$0xff]
        %v613 = vld [vmem:[#allocation2 + $0x16a] sm:$0xff]
        %v614 = vld [vmem:[#allocation2 + $0x172] sm:$0xff]
        %v615 = vpack.c.bf16 %v584, %v583
        %v616 = vpack.c.bf16 %v586, %v585
        %v617 = vpack.c.bf16 %v588, %v587
        %v618 = vpack.c.bf16 %v590, %v589
        %v619 = vpack.c.bf16 %v592, %v591
        %v620 = vpack.c.bf16 %v594, %v593
        %v621 = vpack.c.bf16 %v596, %v595
        %v622 = vpack.c.bf16 %v598, %v597
        %v623 = vpack.c.bf16 %v600, %v599
        %v624 = vpack.c.bf16 %v602, %v601
        %v625 = vpack.c.bf16 %v604, %v603
        %v626 = vpack.c.bf16 %v606, %v605
        %v627 = vpack.c.bf16 %v608, %v607
        %v628 = vpack.c.bf16 %v610, %v609
        %v629 = vpack.c.bf16 %v612, %v611
        %v630 = vpack.c.bf16 %v614, %v613
        %631 = vst [vmem:[#allocation3 + $0x10] sm:$0xff] %v615
        %632 = vst [vmem:[#allocation3 + $0x58] sm:$0xff] %v616
        %633 = vst [vmem:[#allocation3 + $0xa0] sm:$0xff] %v617
        %634 = vst [vmem:[#allocation3 + $0xe8] sm:$0xff] %v618
        %635 = vst [vmem:[#allocation3 + $0x130] sm:$0xff] %v619
        %636 = vst [vmem:[#allocation3 + $0x178] sm:$0xff] %v620
        %637 = vst [vmem:[#allocation3 + $0x1c0] sm:$0xff] %v621
        %638 = vst [vmem:[#allocation3 + $0x208] sm:$0xff] %v622
        %639 = vst [vmem:[#allocation3 + $0x250] sm:$0xff] %v623
        %640 = vst [vmem:[#allocation3 + $0x298] sm:$0xff] %v624
        %641 = vst [vmem:[#allocation3 + $0x2e0] sm:$0xff] %v625
        %642 = vst [vmem:[#allocation3 + $0x328] sm:$0xff] %v626
        %643 = vst [vmem:[#allocation3 + $0x370] sm:$0xff] %v627
        %644 = vst [vmem:[#allocation3 + $0x3b8] sm:$0xff] %v628
        %645 = vst [vmem:[#allocation3 + $0x400] sm:$0xff] %v629
        %646 = vst [vmem:[#allocation3 + $0x448] sm:$0xff] %v630
        %s647 = scalar_lea.vmem [#allocation2], 24
        %v648 = vld [vmem:[%s647] sm:$0xff]
        %v649 = vld [vmem:[%s647 + $0x8] sm:$0xff]
        %v650 = vld [vmem:[%s647 + $0x18] sm:$0xff]
        %v651 = vld [vmem:[%s647 + $0x20] sm:$0xff]
        %v652 = vld [vmem:[%s647 + $0x30] sm:$0xff]
        %v653 = vld [vmem:[%s647 + $0x38] sm:$0xff]
        %v654 = vld [vmem:[%s647 + $0x48] sm:$0xff]
        %v655 = vld [vmem:[%s647 + $0x50] sm:$0xff]
        %v656 = vld [vmem:[%s647 + $0x60] sm:$0xff]
        %v657 = vld [vmem:[%s647 + $0x68] sm:$0xff]
        %v658 = vld [vmem:[%s647 + $0x78] sm:$0xff]
        %v659 = vld [vmem:[%s647 + $0x80] sm:$0xff]
        %v660 = vld [vmem:[%s647 + $0x90] sm:$0xff]
        %v661 = vld [vmem:[%s647 + $0x98] sm:$0xff]
        %v662 = vld [vmem:[%s647 + $0xa8] sm:$0xff]
        %v663 = vld [vmem:[%s647 + $0xb0] sm:$0xff]
        %v664 = vld [vmem:[%s647 + $0xc0] sm:$0xff]
        %v665 = vld [vmem:[%s647 + $0xc8] sm:$0xff]
        %v666 = vld [vmem:[%s647 + $0xd8] sm:$0xff]
        %v667 = vld [vmem:[%s647 + $0xe0] sm:$0xff]
        %v668 = vld [vmem:[%s647 + $0xf0] sm:$0xff]
        %v669 = vld [vmem:[%s647 + $0xf8] sm:$0xff]
        %v670 = vld [vmem:[%s647 + $0x108] sm:$0xff]
        %v671 = vld [vmem:[%s647 + $0x110] sm:$0xff]
        %v672 = vld [vmem:[%s647 + $0x120] sm:$0xff]
        %v673 = vld [vmem:[%s647 + $0x128] sm:$0xff]
        %v674 = vld [vmem:[%s647 + $0x138] sm:$0xff]
        %v675 = vld [vmem:[%s647 + $0x140] sm:$0xff]
        %v676 = vld [vmem:[%s647 + $0x150] sm:$0xff]
        %v677 = vld [vmem:[%s647 + $0x158] sm:$0xff]
        %v678 = vld [vmem:[%s647 + $0x168] sm:$0xff]
        %v679 = vld [vmem:[%s647 + $0x170] sm:$0xff]
        %v680 = vpack.c.bf16 %v649, %v648
        %v681 = vpack.c.bf16 %v651, %v650
        %v682 = vpack.c.bf16 %v653, %v652
        %v683 = vpack.c.bf16 %v655, %v654
        %v684 = vpack.c.bf16 %v657, %v656
        %v685 = vpack.c.bf16 %v659, %v658
        %v686 = vpack.c.bf16 %v661, %v660
        %v687 = vpack.c.bf16 %v663, %v662
        %v688 = vpack.c.bf16 %v665, %v664
        %v689 = vpack.c.bf16 %v667, %v666
        %v690 = vpack.c.bf16 %v669, %v668
        %v691 = vpack.c.bf16 %v671, %v670
        %v692 = vpack.c.bf16 %v673, %v672
        %v693 = vpack.c.bf16 %v675, %v674
        %v694 = vpack.c.bf16 %v677, %v676
        %v695 = vpack.c.bf16 %v679, %v678
        %696 = vst [vmem:[#allocation3 + $0x18] sm:$0xff] %v680
        %697 = vst [vmem:[#allocation3 + $0x60] sm:$0xff] %v681
        %698 = vst [vmem:[#allocation3 + $0xa8] sm:$0xff] %v682
        %699 = vst [vmem:[#allocation3 + $0xf0] sm:$0xff] %v683
        %700 = vst [vmem:[#allocation3 + $0x138] sm:$0xff] %v684
        %701 = vst [vmem:[#allocation3 + $0x180] sm:$0xff] %v685
        %702 = vst [vmem:[#allocation3 + $0x1c8] sm:$0xff] %v686
        %703 = vst [vmem:[#allocation3 + $0x210] sm:$0xff] %v687
        %704 = vst [vmem:[#allocation3 + $0x258] sm:$0xff] %v688
        %705 = vst [vmem:[#allocation3 + $0x2a0] sm:$0xff] %v689
        %706 = vst [vmem:[#allocation3 + $0x2e8] sm:$0xff] %v690
        %707 = vst [vmem:[#allocation3 + $0x330] sm:$0xff] %v691
        %708 = vst [vmem:[#allocation3 + $0x378] sm:$0xff] %v692
        %709 = vst [vmem:[#allocation3 + $0x3c0] sm:$0xff] %v693
        %710 = vst [vmem:[#allocation3 + $0x408] sm:$0xff] %v694
        %711 = vst [vmem:[#allocation3 + $0x450] sm:$0xff] %v695
        %v712 = vld [vmem:[%s647 + $0x1] sm:$0xff]
        %v713 = vld [vmem:[%s647 + $0x9] sm:$0xff]
        %v714 = vld [vmem:[%s647 + $0x19] sm:$0xff]
        %v715 = vld [vmem:[%s647 + $0x21] sm:$0xff]
        %v716 = vld [vmem:[%s647 + $0x31] sm:$0xff]
        %v717 = vld [vmem:[%s647 + $0x39] sm:$0xff]
        %v718 = vld [vmem:[%s647 + $0x49] sm:$0xff]
        %v719 = vld [vmem:[%s647 + $0x51] sm:$0xff]
        %v720 = vld [vmem:[%s647 + $0x61] sm:$0xff]
        %v721 = vld [vmem:[%s647 + $0x69] sm:$0xff]
        %v722 = vld [vmem:[%s647 + $0x79] sm:$0xff]
        %v723 = vld [vmem:[%s647 + $0x81] sm:$0xff]
        %v724 = vld [vmem:[%s647 + $0x91] sm:$0xff]
        %v725 = vld [vmem:[%s647 + $0x99] sm:$0xff]
        %v726 = vld [vmem:[%s647 + $0xa9] sm:$0xff]
        %v727 = vld [vmem:[%s647 + $0xb1] sm:$0xff]
        %v728 = vld [vmem:[%s647 + $0xc1] sm:$0xff]
        %v729 = vld [vmem:[%s647 + $0xc9] sm:$0xff]
        %v730 = vld [vmem:[%s647 + $0xd9] sm:$0xff]
        %v731 = vld [vmem:[%s647 + $0xe1] sm:$0xff]
        %v732 = vld [vmem:[%s647 + $0xf1] sm:$0xff]
        %v733 = vld [vmem:[%s647 + $0xf9] sm:$0xff]
        %v734 = vld [vmem:[%s647 + $0x109] sm:$0xff]
        %v735 = vld [vmem:[%s647 + $0x111] sm:$0xff]
        %v736 = vld [vmem:[%s647 + $0x121] sm:$0xff]
        %v737 = vld [vmem:[%s647 + $0x129] sm:$0xff]
        %v738 = vld [vmem:[%s647 + $0x139] sm:$0xff]
        %v739 = vld [vmem:[%s647 + $0x141] sm:$0xff]
        %v740 = vld [vmem:[%s647 + $0x151] sm:$0xff]
        %v741 = vld [vmem:[%s647 + $0x159] sm:$0xff]
        %v742 = vld [vmem:[%s647 + $0x169] sm:$0xff]
        %v743 = vld [vmem:[%s647 + $0x171] sm:$0xff]
        %v744 = vpack.c.bf16 %v713, %v712
        %v745 = vpack.c.bf16 %v715, %v714
        %v746 = vpack.c.bf16 %v717, %v716
        %v747 = vpack.c.bf16 %v719, %v718
        %v748 = vpack.c.bf16 %v721, %v720
        %v749 = vpack.c.bf16 %v723, %v722
        %v750 = vpack.c.bf16 %v725, %v724
        %v751 = vpack.c.bf16 %v727, %v726
        %v752 = vpack.c.bf16 %v729, %v728
        %v753 = vpack.c.bf16 %v731, %v730
        %v754 = vpack.c.bf16 %v733, %v732
        %v755 = vpack.c.bf16 %v735, %v734
        %v756 = vpack.c.bf16 %v737, %v736
        %v757 = vpack.c.bf16 %v739, %v738
        %v758 = vpack.c.bf16 %v741, %v740
        %v759 = vpack.c.bf16 %v743, %v742
        %760 = vst [vmem:[#allocation3 + $0x20] sm:$0xff] %v744
        %761 = vst [vmem:[#allocation3 + $0x68] sm:$0xff] %v745
        %762 = vst [vmem:[#allocation3 + $0xb0] sm:$0xff] %v746
        %763 = vst [vmem:[#allocation3 + $0xf8] sm:$0xff] %v747
        %764 = vst [vmem:[#allocation3 + $0x140] sm:$0xff] %v748
        %765 = vst [vmem:[#allocation3 + $0x188] sm:$0xff] %v749
        %766 = vst [vmem:[#allocation3 + $0x1d0] sm:$0xff] %v750
        %767 = vst [vmem:[#allocation3 + $0x218] sm:$0xff] %v751
        %768 = vst [vmem:[#allocation3 + $0x260] sm:$0xff] %v752
        %769 = vst [vmem:[#allocation3 + $0x2a8] sm:$0xff] %v753
        %770 = vst [vmem:[#allocation3 + $0x2f0] sm:$0xff] %v754
        %771 = vst [vmem:[#allocation3 + $0x338] sm:$0xff] %v755
        %772 = vst [vmem:[#allocation3 + $0x380] sm:$0xff] %v756
        %773 = vst [vmem:[#allocation3 + $0x3c8] sm:$0xff] %v757
        %774 = vst [vmem:[#allocation3 + $0x410] sm:$0xff] %v758
        %775 = vst [vmem:[#allocation3 + $0x458] sm:$0xff] %v759
        %v776 = vld [vmem:[%s647 + $0x2] sm:$0xff]
        %v777 = vld [vmem:[%s647 + $0xa] sm:$0xff]
        %v778 = vld [vmem:[%s647 + $0x1a] sm:$0xff]
        %v779 = vld [vmem:[%s647 + $0x22] sm:$0xff]
        %v780 = vld [vmem:[%s647 + $0x32] sm:$0xff]
        %v781 = vld [vmem:[%s647 + $0x3a] sm:$0xff]
        %v782 = vld [vmem:[%s647 + $0x4a] sm:$0xff]
        %v783 = vld [vmem:[%s647 + $0x52] sm:$0xff]
        %v784 = vld [vmem:[%s647 + $0x62] sm:$0xff]
        %v785 = vld [vmem:[%s647 + $0x6a] sm:$0xff]
        %v786 = vld [vmem:[%s647 + $0x7a] sm:$0xff]
        %v787 = vld [vmem:[%s647 + $0x82] sm:$0xff]
        %v788 = vld [vmem:[%s647 + $0x92] sm:$0xff]
        %v789 = vld [vmem:[%s647 + $0x9a] sm:$0xff]
        %v790 = vld [vmem:[%s647 + $0xaa] sm:$0xff]
        %v791 = vld [vmem:[%s647 + $0xb2] sm:$0xff]
        %v792 = vld [vmem:[%s647 + $0xc2] sm:$0xff]
        %v793 = vld [vmem:[%s647 + $0xca] sm:$0xff]
        %v794 = vld [vmem:[%s647 + $0xda] sm:$0xff]
        %v795 = vld [vmem:[%s647 + $0xe2] sm:$0xff]
        %v796 = vld [vmem:[%s647 + $0xf2] sm:$0xff]
        %v797 = vld [vmem:[%s647 + $0xfa] sm:$0xff]
        %v798 = vld [vmem:[%s647 + $0x10a] sm:$0xff]
        %v799 = vld [vmem:[%s647 + $0x112] sm:$0xff]
        %v800 = vld [vmem:[%s647 + $0x122] sm:$0xff]
        %v801 = vld [vmem:[%s647 + $0x12a] sm:$0xff]
        %v802 = vld [vmem:[%s647 + $0x13a] sm:$0xff]
        %v803 = vld [vmem:[%s647 + $0x142] sm:$0xff]
        %v804 = vld [vmem:[%s647 + $0x152] sm:$0xff]
        %v805 = vld [vmem:[%s647 + $0x15a] sm:$0xff]
        %v806 = vld [vmem:[%s647 + $0x16a] sm:$0xff]
        %v807 = vld [vmem:[%s647 + $0x172] sm:$0xff]
        %v808 = vpack.c.bf16 %v777, %v776
        %v809 = vpack.c.bf16 %v779, %v778
        %v810 = vpack.c.bf16 %v781, %v780
        %v811 = vpack.c.bf16 %v783, %v782
        %v812 = vpack.c.bf16 %v785, %v784
        %v813 = vpack.c.bf16 %v787, %v786
        %v814 = vpack.c.bf16 %v789, %v788
        %v815 = vpack.c.bf16 %v791, %v790
        %v816 = vpack.c.bf16 %v793, %v792
        %v817 = vpack.c.bf16 %v795, %v794
        %v818 = vpack.c.bf16 %v797, %v796
        %v819 = vpack.c.bf16 %v799, %v798
        %v820 = vpack.c.bf16 %v801, %v800
        %v821 = vpack.c.bf16 %v803, %v802
        %v822 = vpack.c.bf16 %v805, %v804
        %v823 = vpack.c.bf16 %v807, %v806
        %824 = vst [vmem:[#allocation3 + $0x28] sm:$0xff] %v808
        %825 = vst [vmem:[#allocation3 + $0x70] sm:$0xff] %v809
        %826 = vst [vmem:[#allocation3 + $0xb8] sm:$0xff] %v810
        %827 = vst [vmem:[#allocation3 + $0x100] sm:$0xff] %v811
        %828 = vst [vmem:[#allocation3 + $0x148] sm:$0xff] %v812
        %829 = vst [vmem:[#allocation3 + $0x190] sm:$0xff] %v813
        %830 = vst [vmem:[#allocation3 + $0x1d8] sm:$0xff] %v814
        %831 = vst [vmem:[#allocation3 + $0x220] sm:$0xff] %v815
        %832 = vst [vmem:[#allocation3 + $0x268] sm:$0xff] %v816
        %833 = vst [vmem:[#allocation3 + $0x2b0] sm:$0xff] %v817
        %834 = vst [vmem:[#allocation3 + $0x2f8] sm:$0xff] %v818
        %835 = vst [vmem:[#allocation3 + $0x340] sm:$0xff] %v819
        %836 = vst [vmem:[#allocation3 + $0x388] sm:$0xff] %v820
        %837 = vst [vmem:[#allocation3 + $0x3d0] sm:$0xff] %v821
        %838 = vst [vmem:[#allocation3 + $0x418] sm:$0xff] %v822
        %839 = vst [vmem:[#allocation3 + $0x460] sm:$0xff] %v823
        %s840 = scalar_lea.vmem [#allocation2], 48
        %v841 = vld [vmem:[%s840] sm:$0xff]
        %v842 = vld [vmem:[%s840 + $0x8] sm:$0xff]
        %v843 = vld [vmem:[%s840 + $0x18] sm:$0xff]
        %v844 = vld [vmem:[%s840 + $0x20] sm:$0xff]
        %v845 = vld [vmem:[%s840 + $0x30] sm:$0xff]
        %v846 = vld [vmem:[%s840 + $0x38] sm:$0xff]
        %v847 = vld [vmem:[%s840 + $0x48] sm:$0xff]
        %v848 = vld [vmem:[%s840 + $0x50] sm:$0xff]
        %v849 = vld [vmem:[%s840 + $0x60] sm:$0xff]
        %v850 = vld [vmem:[%s840 + $0x68] sm:$0xff]
        %v851 = vld [vmem:[%s840 + $0x78] sm:$0xff]
        %v852 = vld [vmem:[%s840 + $0x80] sm:$0xff]
        %v853 = vld [vmem:[%s840 + $0x90] sm:$0xff]
        %v854 = vld [vmem:[%s840 + $0x98] sm:$0xff]
        %v855 = vld [vmem:[%s840 + $0xa8] sm:$0xff]
        %v856 = vld [vmem:[%s840 + $0xb0] sm:$0xff]
        %v857 = vld [vmem:[%s840 + $0xc0] sm:$0xff]
        %v858 = vld [vmem:[%s840 + $0xc8] sm:$0xff]
        %v859 = vld [vmem:[%s840 + $0xd8] sm:$0xff]
        %v860 = vld [vmem:[%s840 + $0xe0] sm:$0xff]
        %v861 = vld [vmem:[%s840 + $0xf0] sm:$0xff]
        %v862 = vld [vmem:[%s840 + $0xf8] sm:$0xff]
        %v863 = vld [vmem:[%s840 + $0x108] sm:$0xff]
        %v864 = vld [vmem:[%s840 + $0x110] sm:$0xff]
        %v865 = vld [vmem:[%s840 + $0x120] sm:$0xff]
        %v866 = vld [vmem:[%s840 + $0x128] sm:$0xff]
        %v867 = vld [vmem:[%s840 + $0x138] sm:$0xff]
        %v868 = vld [vmem:[%s840 + $0x140] sm:$0xff]
        %v869 = vld [vmem:[%s840 + $0x150] sm:$0xff]
        %v870 = vld [vmem:[%s840 + $0x158] sm:$0xff]
        %v871 = vld [vmem:[%s840 + $0x168] sm:$0xff]
        %v872 = vld [vmem:[%s840 + $0x170] sm:$0xff]
        %v873 = vpack.c.bf16 %v842, %v841
        %v874 = vpack.c.bf16 %v844, %v843
        %v875 = vpack.c.bf16 %v846, %v845
        %v876 = vpack.c.bf16 %v848, %v847
        %v877 = vpack.c.bf16 %v850, %v849
        %v878 = vpack.c.bf16 %v852, %v851
        %v879 = vpack.c.bf16 %v854, %v853
        %v880 = vpack.c.bf16 %v856, %v855
        %v881 = vpack.c.bf16 %v858, %v857
        %v882 = vpack.c.bf16 %v860, %v859
        %v883 = vpack.c.bf16 %v862, %v861
        %v884 = vpack.c.bf16 %v864, %v863
        %v885 = vpack.c.bf16 %v866, %v865
        %v886 = vpack.c.bf16 %v868, %v867
        %v887 = vpack.c.bf16 %v870, %v869
        %v888 = vpack.c.bf16 %v872, %v871
        %889 = vst [vmem:[#allocation3 + $0x30] sm:$0xff] %v873
        %890 = vst [vmem:[#allocation3 + $0x78] sm:$0xff] %v874
        %891 = vst [vmem:[#allocation3 + $0xc0] sm:$0xff] %v875
        %892 = vst [vmem:[#allocation3 + $0x108] sm:$0xff] %v876
        %893 = vst [vmem:[#allocation3 + $0x150] sm:$0xff] %v877
        %894 = vst [vmem:[#allocation3 + $0x198] sm:$0xff] %v878
        %895 = vst [vmem:[#allocation3 + $0x1e0] sm:$0xff] %v879
        %896 = vst [vmem:[#allocation3 + $0x228] sm:$0xff] %v880
        %897 = vst [vmem:[#allocation3 + $0x270] sm:$0xff] %v881
        %898 = vst [vmem:[#allocation3 + $0x2b8] sm:$0xff] %v882
        %899 = vst [vmem:[#allocation3 + $0x300] sm:$0xff] %v883
        %900 = vst [vmem:[#allocation3 + $0x348] sm:$0xff] %v884
        %901 = vst [vmem:[#allocation3 + $0x390] sm:$0xff] %v885
        %902 = vst [vmem:[#allocation3 + $0x3d8] sm:$0xff] %v886
        %903 = vst [vmem:[#allocation3 + $0x420] sm:$0xff] %v887
        %904 = vst [vmem:[#allocation3 + $0x468] sm:$0xff] %v888
        %v905 = vld [vmem:[%s840 + $0x1] sm:$0xff]
        %v906 = vld [vmem:[%s840 + $0x9] sm:$0xff]
        %v907 = vld [vmem:[%s840 + $0x19] sm:$0xff]
        %v908 = vld [vmem:[%s840 + $0x21] sm:$0xff]
        %v909 = vld [vmem:[%s840 + $0x31] sm:$0xff]
        %v910 = vld [vmem:[%s840 + $0x39] sm:$0xff]
        %v911 = vld [vmem:[%s840 + $0x49] sm:$0xff]
        %v912 = vld [vmem:[%s840 + $0x51] sm:$0xff]
        %v913 = vld [vmem:[%s840 + $0x61] sm:$0xff]
        %v914 = vld [vmem:[%s840 + $0x69] sm:$0xff]
        %v915 = vld [vmem:[%s840 + $0x79] sm:$0xff]
        %v916 = vld [vmem:[%s840 + $0x81] sm:$0xff]
        %v917 = vld [vmem:[%s840 + $0x91] sm:$0xff]
        %v918 = vld [vmem:[%s840 + $0x99] sm:$0xff]
        %v919 = vld [vmem:[%s840 + $0xa9] sm:$0xff]
        %v920 = vld [vmem:[%s840 + $0xb1] sm:$0xff]
        %v921 = vld [vmem:[%s840 + $0xc1] sm:$0xff]
        %v922 = vld [vmem:[%s840 + $0xc9] sm:$0xff]
        %v923 = vld [vmem:[%s840 + $0xd9] sm:$0xff]
        %v924 = vld [vmem:[%s840 + $0xe1] sm:$0xff]
        %v925 = vld [vmem:[%s840 + $0xf1] sm:$0xff]
        %v926 = vld [vmem:[%s840 + $0xf9] sm:$0xff]
        %v927 = vld [vmem:[%s840 + $0x109] sm:$0xff]
        %v928 = vld [vmem:[%s840 + $0x111] sm:$0xff]
        %v929 = vld [vmem:[%s840 + $0x121] sm:$0xff]
        %v930 = vld [vmem:[%s840 + $0x129] sm:$0xff]
        %v931 = vld [vmem:[%s840 + $0x139] sm:$0xff]
        %v932 = vld [vmem:[%s840 + $0x141] sm:$0xff]
        %v933 = vld [vmem:[%s840 + $0x151] sm:$0xff]
        %v934 = vld [vmem:[%s840 + $0x159] sm:$0xff]
        %v935 = vld [vmem:[%s840 + $0x169] sm:$0xff]
        %v936 = vld [vmem:[%s840 + $0x171] sm:$0xff]
        %v937 = vpack.c.bf16 %v906, %v905
        %v938 = vpack.c.bf16 %v908, %v907
        %v939 = vpack.c.bf16 %v910, %v909
        %v940 = vpack.c.bf16 %v912, %v911
        %v941 = vpack.c.bf16 %v914, %v913
        %v942 = vpack.c.bf16 %v916, %v915
        %v943 = vpack.c.bf16 %v918, %v917
        %v944 = vpack.c.bf16 %v920, %v919
        %v945 = vpack.c.bf16 %v922, %v921
        %v946 = vpack.c.bf16 %v924, %v923
        %v947 = vpack.c.bf16 %v926, %v925
        %v948 = vpack.c.bf16 %v928, %v927
        %v949 = vpack.c.bf16 %v930, %v929
        %v950 = vpack.c.bf16 %v932, %v931
        %v951 = vpack.c.bf16 %v934, %v933
        %v952 = vpack.c.bf16 %v936, %v935
        %953 = vst [vmem:[#allocation3 + $0x38] sm:$0xff] %v937
        %954 = vst [vmem:[#allocation3 + $0x80] sm:$0xff] %v938
        %955 = vst [vmem:[#allocation3 + $0xc8] sm:$0xff] %v939
        %956 = vst [vmem:[#allocation3 + $0x110] sm:$0xff] %v940
        %957 = vst [vmem:[#allocation3 + $0x158] sm:$0xff] %v941
        %958 = vst [vmem:[#allocation3 + $0x1a0] sm:$0xff] %v942
        %959 = vst [vmem:[#allocation3 + $0x1e8] sm:$0xff] %v943
        %960 = vst [vmem:[#allocation3 + $0x230] sm:$0xff] %v944
        %961 = vst [vmem:[#allocation3 + $0x278] sm:$0xff] %v945
        %962 = vst [vmem:[#allocation3 + $0x2c0] sm:$0xff] %v946
        %963 = vst [vmem:[#allocation3 + $0x308] sm:$0xff] %v947
        %964 = vst [vmem:[#allocation3 + $0x350] sm:$0xff] %v948
        %965 = vst [vmem:[#allocation3 + $0x398] sm:$0xff] %v949
        %966 = vst [vmem:[#allocation3 + $0x3e0] sm:$0xff] %v950
        %967 = vst [vmem:[#allocation3 + $0x428] sm:$0xff] %v951
        %968 = vst [vmem:[#allocation3 + $0x470] sm:$0xff] %v952
        %v969 = vld [vmem:[%s840 + $0x2] sm:$0xff]
        %v970 = vld [vmem:[%s840 + $0xa] sm:$0xff]
        %v971 = vld [vmem:[%s840 + $0x1a] sm:$0xff]
        %v972 = vld [vmem:[%s840 + $0x22] sm:$0xff]
        %v973 = vld [vmem:[%s840 + $0x32] sm:$0xff]
        %v974 = vld [vmem:[%s840 + $0x3a] sm:$0xff]
        %v975 = vld [vmem:[%s840 + $0x4a] sm:$0xff]
        %v976 = vld [vmem:[%s840 + $0x52] sm:$0xff]
        %v977 = vld [vmem:[%s840 + $0x62] sm:$0xff]
        %v978 = vld [vmem:[%s840 + $0x6a] sm:$0xff]
        %v979 = vld [vmem:[%s840 + $0x7a] sm:$0xff]
        %v980 = vld [vmem:[%s840 + $0x82] sm:$0xff]
        %v981 = vld [vmem:[%s840 + $0x92] sm:$0xff]
        %v982 = vld [vmem:[%s840 + $0x9a] sm:$0xff]
        %v983 = vld [vmem:[%s840 + $0xaa] sm:$0xff]
        %v984 = vld [vmem:[%s840 + $0xb2] sm:$0xff]
        %v985 = vld [vmem:[%s840 + $0xc2] sm:$0xff]
        %v986 = vld [vmem:[%s840 + $0xca] sm:$0xff]
        %v987 = vld [vmem:[%s840 + $0xda] sm:$0xff]
        %v988 = vld [vmem:[%s840 + $0xe2] sm:$0xff]
        %v989 = vld [vmem:[%s840 + $0xf2] sm:$0xff]
        %v990 = vld [vmem:[%s840 + $0xfa] sm:$0xff]
        %v991 = vld [vmem:[%s840 + $0x10a] sm:$0xff]
        %v992 = vld [vmem:[%s840 + $0x112] sm:$0xff]
        %v993 = vld [vmem:[%s840 + $0x122] sm:$0xff]
        %v994 = vld [vmem:[%s840 + $0x12a] sm:$0xff]
        %v995 = vld [vmem:[%s840 + $0x13a] sm:$0xff]
        %v996 = vld [vmem:[%s840 + $0x142] sm:$0xff]
        %v997 = vld [vmem:[%s840 + $0x152] sm:$0xff]
        %v998 = vld [vmem:[%s840 + $0x15a] sm:$0xff]
        %v999 = vld [vmem:[%s840 + $0x16a] sm:$0xff]
        %v1000 = vld [vmem:[%s840 + $0x172] sm:$0xff]
        %v1001 = vpack.c.bf16 %v970, %v969
        %v1002 = vpack.c.bf16 %v972, %v971
        %v1003 = vpack.c.bf16 %v974, %v973
        %v1004 = vpack.c.bf16 %v976, %v975
        %v1005 = vpack.c.bf16 %v978, %v977
        %v1006 = vpack.c.bf16 %v980, %v979
        %v1007 = vpack.c.bf16 %v982, %v981
        %v1008 = vpack.c.bf16 %v984, %v983
        %v1009 = vpack.c.bf16 %v986, %v985
        %v1010 = vpack.c.bf16 %v988, %v987
        %v1011 = vpack.c.bf16 %v990, %v989
        %v1012 = vpack.c.bf16 %v992, %v991
        %v1013 = vpack.c.bf16 %v994, %v993
        %v1014 = vpack.c.bf16 %v996, %v995
        %v1015 = vpack.c.bf16 %v998, %v997
        %v1016 = vpack.c.bf16 %v1000, %v999
        %1017 = vst [vmem:[#allocation3 + $0x40] sm:$0xff] %v1001
        %1018 = vst [vmem:[#allocation3 + $0x88] sm:$0xff] %v1002
        %1019 = vst [vmem:[#allocation3 + $0xd0] sm:$0xff] %v1003
        %1020 = vst [vmem:[#allocation3 + $0x118] sm:$0xff] %v1004
        %1021 = vst [vmem:[#allocation3 + $0x160] sm:$0xff] %v1005
        %1022 = vst [vmem:[#allocation3 + $0x1a8] sm:$0xff] %v1006
        %1023 = vst [vmem:[#allocation3 + $0x1f0] sm:$0xff] %v1007
        %1024 = vst [vmem:[#allocation3 + $0x238] sm:$0xff] %v1008
        %1025 = vst [vmem:[#allocation3 + $0x280] sm:$0xff] %v1009
        %1026 = vst [vmem:[#allocation3 + $0x2c8] sm:$0xff] %v1010
        %1027 = vst [vmem:[#allocation3 + $0x310] sm:$0xff] %v1011
        %1028 = vst [vmem:[#allocation3 + $0x358] sm:$0xff] %v1012
        %1029 = vst [vmem:[#allocation3 + $0x3a0] sm:$0xff] %v1013
        %1030 = vst [vmem:[#allocation3 + $0x3e8] sm:$0xff] %v1014
        %1031 = vst [vmem:[#allocation3 + $0x430] sm:$0xff] %v1015
        %1032 = vst [vmem:[#allocation3 + $0x478] sm:$0xff] %v1016
        %v1033 = vld [vmem:[#allocation3] sm:$0xff]
        %v1034 = vld [vmem:[#allocation3 + $0x8] sm:$0xff]
        %v1035 = vld [vmem:[#allocation3 + $0x10] sm:$0xff]
        %v1036 = vld [vmem:[#allocation3 + $0x18] sm:$0xff]
        %v1037 = vld [vmem:[#allocation3 + $0x20] sm:$0xff]
        %v1038 = vld [vmem:[#allocation3 + $0x28] sm:$0xff]
        %v1039 = vld [vmem:[#allocation3 + $0x30] sm:$0xff]
        %v1040 = vld [vmem:[#allocation3 + $0x38] sm:$0xff]
        %v1041 = vld [vmem:[#allocation3 + $0x40] sm:$0xff]
        %v1042 = vld [vmem:[#allocation3 + $0x48] sm:$0xff]
        %v1043 = vld [vmem:[#allocation3 + $0x50] sm:$0xff]
        %v1044 = vld [vmem:[#allocation3 + $0x58] sm:$0xff]
        %v1045 = vld [vmem:[#allocation3 + $0x60] sm:$0xff]
        %v1046 = vld [vmem:[#allocation3 + $0x68] sm:$0xff]
        %v1047 = vld [vmem:[#allocation3 + $0x70] sm:$0xff]
        %v1048 = vld [vmem:[#allocation3 + $0x78] sm:$0xff]
        %v1049 = vld [vmem:[#allocation3 + $0x80] sm:$0xff]
        %v1050 = vld [vmem:[#allocation3 + $0x88] sm:$0xff]
        %v1051 = vld [vmem:[#allocation3 + $0x90] sm:$0xff]
        %v1052 = vld [vmem:[#allocation3 + $0x98] sm:$0xff]
        %v1053 = vld [vmem:[#allocation3 + $0xa0] sm:$0xff]
        %v1054 = vld [vmem:[#allocation3 + $0xa8] sm:$0xff]
        %v1055 = vld [vmem:[#allocation3 + $0xb0] sm:$0xff]
        %v1056 = vld [vmem:[#allocation3 + $0xb8] sm:$0xff]
        %v1057 = vld [vmem:[#allocation3 + $0xc0] sm:$0xff]
        %v1058 = vld [vmem:[#allocation3 + $0xc8] sm:$0xff]
        %v1059 = vld [vmem:[#allocation3 + $0xd0] sm:$0xff]
        %v1060 = vld [vmem:[#allocation3 + $0xd8] sm:$0xff]
        %v1061 = vld [vmem:[#allocation3 + $0xe0] sm:$0xff]
        %v1062 = vld [vmem:[#allocation3 + $0xe8] sm:$0xff]
        %v1063 = vld [vmem:[#allocation3 + $0xf0] sm:$0xff]
        %v1064 = vld [vmem:[#allocation3 + $0xf8] sm:$0xff]
        %v1065 = vld [vmem:[#allocation3 + $0x100] sm:$0xff]
        %v1066 = vld [vmem:[#allocation3 + $0x108] sm:$0xff]
        %v1067 = vld [vmem:[#allocation3 + $0x110] sm:$0xff]
        %v1068 = vld [vmem:[#allocation3 + $0x118] sm:$0xff]
        %v1069 = vld [vmem:[#allocation3 + $0x120] sm:$0xff]
        %v1070 = vld [vmem:[#allocation3 + $0x128] sm:$0xff]
        %v1071 = vld [vmem:[#allocation3 + $0x130] sm:$0xff]
        %v1072 = vld [vmem:[#allocation3 + $0x138] sm:$0xff]
        %v1073 = vld [vmem:[#allocation3 + $0x140] sm:$0xff]
        %v1074 = vld [vmem:[#allocation3 + $0x148] sm:$0xff]
        %v1075 = vld [vmem:[#allocation3 + $0x150] sm:$0xff]
        %v1076 = vld [vmem:[#allocation3 + $0x158] sm:$0xff]
        %v1077 = vld [vmem:[#allocation3 + $0x160] sm:$0xff]
        %v1078 = vld [vmem:[#allocation3 + $0x168] sm:$0xff]
        %v1079 = vld [vmem:[#allocation3 + $0x170] sm:$0xff]
        %v1080 = vld [vmem:[#allocation3 + $0x178] sm:$0xff]
        %v1081 = vld [vmem:[#allocation3 + $0x180] sm:$0xff]
        %v1082 = vld [vmem:[#allocation3 + $0x188] sm:$0xff]
        %v1083 = vld [vmem:[#allocation3 + $0x190] sm:$0xff]
        %v1084 = vld [vmem:[#allocation3 + $0x198] sm:$0xff]
        %v1085 = vld [vmem:[#allocation3 + $0x1a0] sm:$0xff]
        %v1086 = vld [vmem:[#allocation3 + $0x1a8] sm:$0xff]
        %v1087 = vld [vmem:[#allocation3 + $0x1b0] sm:$0xff]
        %v1088 = vld [vmem:[#allocation3 + $0x1b8] sm:$0xff]
        %v1089 = vld [vmem:[#allocation3 + $0x1c0] sm:$0xff]
        %v1090 = vld [vmem:[#allocation3 + $0x1c8] sm:$0xff]
        %v1091 = vld [vmem:[#allocation3 + $0x1d0] sm:$0xff]
        %v1092 = vld [vmem:[#allocation3 + $0x1d8] sm:$0xff]
        %v1093 = vld [vmem:[#allocation3 + $0x1e0] sm:$0xff]
        %v1094 = vld [vmem:[#allocation3 + $0x1e8] sm:$0xff]
        %v1095 = vld [vmem:[#allocation3 + $0x1f0] sm:$0xff]
        %v1096 = vld [vmem:[#allocation3 + $0x1f8] sm:$0xff]
        %v1097 = vld [vmem:[#allocation3 + $0x200] sm:$0xff]
        %v1098 = vld [vmem:[#allocation3 + $0x208] sm:$0xff]
        %v1099 = vld [vmem:[#allocation3 + $0x210] sm:$0xff]
        %v1100 = vld [vmem:[#allocation3 + $0x218] sm:$0xff]
        %v1101 = vld [vmem:[#allocation3 + $0x220] sm:$0xff]
        %v1102 = vld [vmem:[#allocation3 + $0x228] sm:$0xff]
        %v1103 = vld [vmem:[#allocation3 + $0x230] sm:$0xff]
        %v1104 = vld [vmem:[#allocation3 + $0x238] sm:$0xff]
        %v1105 = vld [vmem:[#allocation3 + $0x240] sm:$0xff]
        %v1106 = vld [vmem:[#allocation3 + $0x248] sm:$0xff]
        %v1107 = vld [vmem:[#allocation3 + $0x250] sm:$0xff]
        %v1108 = vld [vmem:[#allocation3 + $0x258] sm:$0xff]
        %v1109 = vld [vmem:[#allocation3 + $0x260] sm:$0xff]
        %v1110 = vld [vmem:[#allocation3 + $0x268] sm:$0xff]
        %v1111 = vld [vmem:[#allocation3 + $0x270] sm:$0xff]
        %v1112 = vld [vmem:[#allocation3 + $0x278] sm:$0xff]
        %v1113 = vld [vmem:[#allocation3 + $0x280] sm:$0xff]
        %v1114 = vld [vmem:[#allocation3 + $0x288] sm:$0xff]
        %v1115 = vld [vmem:[#allocation3 + $0x290] sm:$0xff]
        %v1116 = vld [vmem:[#allocation3 + $0x298] sm:$0xff]
        %v1117 = vld [vmem:[#allocation3 + $0x2a0] sm:$0xff]
        %v1118 = vld [vmem:[#allocation3 + $0x2a8] sm:$0xff]
        %v1119 = vld [vmem:[#allocation3 + $0x2b0] sm:$0xff]
        %v1120 = vld [vmem:[#allocation3 + $0x2b8] sm:$0xff]
        %v1121 = vld [vmem:[#allocation3 + $0x2c0] sm:$0xff]
        %v1122 = vld [vmem:[#allocation3 + $0x2c8] sm:$0xff]
        %v1123 = vld [vmem:[#allocation3 + $0x2d0] sm:$0xff]
        %v1124 = vld [vmem:[#allocation3 + $0x2d8] sm:$0xff]
        %v1125 = vld [vmem:[#allocation3 + $0x2e0] sm:$0xff]
        %v1126 = vld [vmem:[#allocation3 + $0x2e8] sm:$0xff]
        %v1127 = vld [vmem:[#allocation3 + $0x2f0] sm:$0xff]
        %v1128 = vld [vmem:[#allocation3 + $0x2f8] sm:$0xff]
        %v1129 = vld [vmem:[#allocation3 + $0x300] sm:$0xff]
        %v1130 = vld [vmem:[#allocation3 + $0x308] sm:$0xff]
        %v1131 = vld [vmem:[#allocation3 + $0x310] sm:$0xff]
        %v1132 = vld [vmem:[#allocation3 + $0x318] sm:$0xff]
        %v1133 = vld [vmem:[#allocation3 + $0x320] sm:$0xff]
        %v1134 = vld [vmem:[#allocation3 + $0x328] sm:$0xff]
        %v1135 = vld [vmem:[#allocation3 + $0x330] sm:$0xff]
        %v1136 = vld [vmem:[#allocation3 + $0x338] sm:$0xff]
        %v1137 = vld [vmem:[#allocation3 + $0x340] sm:$0xff]
        %v1138 = vld [vmem:[#allocation3 + $0x348] sm:$0xff]
        %v1139 = vld [vmem:[#allocation3 + $0x350] sm:$0xff]
        %v1140 = vld [vmem:[#allocation3 + $0x358] sm:$0xff]
        %v1141 = vld [vmem:[#allocation3 + $0x360] sm:$0xff]
        %v1142 = vld [vmem:[#allocation3 + $0x368] sm:$0xff]
        %v1143 = vld [vmem:[#allocation3 + $0x370] sm:$0xff]
        %v1144 = vld [vmem:[#allocation3 + $0x378] sm:$0xff]
        %v1145 = vld [vmem:[#allocation3 + $0x380] sm:$0xff]
        %v1146 = vld [vmem:[#allocation3 + $0x388] sm:$0xff]
        %v1147 = vld [vmem:[#allocation3 + $0x390] sm:$0xff]
        %v1148 = vld [vmem:[#allocation3 + $0x398] sm:$0xff]
        %v1149 = vld [vmem:[#allocation3 + $0x3a0] sm:$0xff]
        %v1150 = vld [vmem:[#allocation3 + $0x3a8] sm:$0xff]
        %v1151 = vld [vmem:[#allocation3 + $0x3b0] sm:$0xff]
        %v1152 = vld [vmem:[#allocation3 + $0x3b8] sm:$0xff]
        %v1153 = vld [vmem:[#allocation3 + $0x3c0] sm:$0xff]
        %v1154 = vld [vmem:[#allocation3 + $0x3c8] sm:$0xff]
        %v1155 = vld [vmem:[#allocation3 + $0x3d0] sm:$0xff]
        %v1156 = vld [vmem:[#allocation3 + $0x3d8] sm:$0xff]
        %v1157 = vld [vmem:[#allocation3 + $0x3e0] sm:$0xff]
        %v1158 = vld [vmem:[#allocation3 + $0x3e8] sm:$0xff]
        %v1159 = vld [vmem:[#allocation3 + $0x3f0] sm:$0xff]
        %v1160 = vld [vmem:[#allocation3 + $0x3f8] sm:$0xff]
        %v1161 = vld [vmem:[#allocation3 + $0x400] sm:$0xff]
        %v1162 = vld [vmem:[#allocation3 + $0x408] sm:$0xff]
        %v1163 = vld [vmem:[#allocation3 + $0x410] sm:$0xff]
        %v1164 = vld [vmem:[#allocation3 + $0x418] sm:$0xff]
        %v1165 = vld [vmem:[#allocation3 + $0x420] sm:$0xff]
        %v1166 = vld [vmem:[#allocation3 + $0x428] sm:$0xff]
        %v1167 = vld [vmem:[#allocation3 + $0x430] sm:$0xff]
        %v1168 = vld [vmem:[#allocation3 + $0x438] sm:$0xff]
        %v1169 = vld [vmem:[#allocation3 + $0x440] sm:$0xff]
        %v1170 = vld [vmem:[#allocation3 + $0x448] sm:$0xff]
        %v1171 = vld [vmem:[#allocation3 + $0x450] sm:$0xff]
        %v1172 = vld [vmem:[#allocation3 + $0x458] sm:$0xff]
        %v1173 = vld [vmem:[#allocation3 + $0x460] sm:$0xff]
        %v1174 = vld [vmem:[#allocation3 + $0x468] sm:$0xff]
        %v1175 = vld [vmem:[#allocation3 + $0x470] sm:$0xff]
        %v1176 = vld [vmem:[#allocation3 + $0x478] sm:$0xff]
        %v1177 = vld [vmem:[%s1] sm:$0xf]
        %v1178 = vld [vmem:[%s1 + $0x4] sm:$0xf]
        %v1179 = vld [vmem:[%s1 + $0x8] sm:$0xf]
        %v1180 = vld [vmem:[%s1 + $0xc] sm:$0xf]
        %v1181 = vld [vmem:[%s1 + $0x10] sm:$0xf]
        %v1182 = vld [vmem:[%s1 + $0x14] sm:$0xf]
        %v1183 = vld [vmem:[%s1 + $0x18] sm:$0xf]
        %v1184 = vld [vmem:[%s1 + $0x1c] sm:$0xf]
        %v1185 = vld [vmem:[%s1 + $0x20] sm:$0xf]
        %v1186 = vld [vmem:[%s1 + $0x24] sm:$0xf]
        %v1187 = vld [vmem:[%s1 + $0x28] sm:$0xf]
        %v1188 = vld [vmem:[%s1 + $0x2c] sm:$0xf]
        %v1189 = vld [vmem:[%s1 + $0x30] sm:$0xf]
        %v1190 = vld [vmem:[%s1 + $0x34] sm:$0xf]
        %v1191 = vld [vmem:[%s1 + $0x38] sm:$0xf]
        %v1192 = vld [vmem:[%s1 + $0x3c] sm:$0xf]
        %v1193 = vld [vmem:[%s1 + $0x40] sm:$0xf]
        %v1194 = vld [vmem:[%s1 + $0x44] sm:$0xf]
        %v1195 = vld [vmem:[%s1 + $0x48] sm:$0xf]
        %v1196 = vld [vmem:[%s1 + $0x4c] sm:$0xf]
        %v1197 = vld [vmem:[%s1 + $0x50] sm:$0xf]
        %v1198 = vld [vmem:[%s1 + $0x54] sm:$0xf]
        %v1199 = vld [vmem:[%s1 + $0x58] sm:$0xf]
        %v1200 = vld [vmem:[%s1 + $0x5c] sm:$0xf]
        %v1201 = vld [vmem:[%s1 + $0x60] sm:$0xf]
        %v1202 = vld [vmem:[%s1 + $0x64] sm:$0xf]
        %v1203 = vld [vmem:[%s1 + $0x68] sm:$0xf]
        %v1204 = vld [vmem:[%s1 + $0x6c] sm:$0xf]
        %v1205 = vld [vmem:[%s1 + $0x70] sm:$0xf]
        %v1206 = vld [vmem:[%s1 + $0x74] sm:$0xf]
        %v1207 = vld [vmem:[%s1 + $0x78] sm:$0xf]
        %v1208 = vld [vmem:[%s1 + $0x7c] sm:$0xf]
        %v1209 = vld [vmem:[%s1 + $0x80] sm:$0xf]
        %v1210 = vld [vmem:[%s1 + $0x84] sm:$0xf]
        %v1211 = vld [vmem:[%s1 + $0x88] sm:$0xf]
        %v1212 = vld [vmem:[%s1 + $0x8c] sm:$0xf]
        %v1213 = vld [vmem:[%s1 + $0x90] sm:$0xf]
        %v1214 = vld [vmem:[%s1 + $0x94] sm:$0xf]
        %v1215 = vld [vmem:[%s1 + $0x98] sm:$0xf]
        %v1216 = vld [vmem:[%s1 + $0x9c] sm:$0xf]
        %v1217 = vld [vmem:[%s1 + $0xa0] sm:$0xf]
        %v1218 = vld [vmem:[%s1 + $0xa4] sm:$0xf]
        %v1219 = vld [vmem:[%s1 + $0xa8] sm:$0xf]
        %v1220 = vld [vmem:[%s1 + $0xac] sm:$0xf]
        %v1221 = vld [vmem:[%s1 + $0xb0] sm:$0xf]
        %v1222 = vld [vmem:[%s1 + $0xb4] sm:$0xf]
        %v1223 = vld [vmem:[%s1 + $0xb8] sm:$0xf]
        %v1224 = vld [vmem:[%s1 + $0xbc] sm:$0xf]
        %v1225 = vld [vmem:[%s1 + $0xc0] sm:$0xf]
        %v1226 = vld [vmem:[%s1 + $0xc4] sm:$0xf]
        %v1227 = vld [vmem:[%s1 + $0xc8] sm:$0xf]
        %v1228 = vld [vmem:[%s1 + $0xcc] sm:$0xf]
        %v1229 = vld [vmem:[%s1 + $0xd0] sm:$0xf]
        %v1230 = vld [vmem:[%s1 + $0xd4] sm:$0xf]
        %v1231 = vld [vmem:[%s1 + $0xd8] sm:$0xf]
        %v1232 = vld [vmem:[%s1 + $0xdc] sm:$0xf]
        %v1233 = vld [vmem:[%s1 + $0xe0] sm:$0xf]
        %v1234 = vld [vmem:[%s1 + $0xe4] sm:$0xf]
        %v1235 = vld [vmem:[%s1 + $0xe8] sm:$0xf]
        %v1236 = vld [vmem:[%s1 + $0xec] sm:$0xf]
        %v1237 = vld [vmem:[%s1 + $0xf0] sm:$0xf]
        %v1238 = vld [vmem:[%s1 + $0xf4] sm:$0xf]
        %v1239 = vld [vmem:[%s1 + $0xf8] sm:$0xf]
        %v1240 = vld [vmem:[%s1 + $0xfc] sm:$0xf]
        %v1241 = vld [vmem:[%s1 + $0x100] sm:$0xf]
        %v1242 = vld [vmem:[%s1 + $0x104] sm:$0xf]
        %v1243 = vld [vmem:[%s1 + $0x108] sm:$0xf]
        %v1244 = vld [vmem:[%s1 + $0x10c] sm:$0xf]
        %v1245 = vld [vmem:[%s1 + $0x110] sm:$0xf]
        %v1246 = vld [vmem:[%s1 + $0x114] sm:$0xf]
        %v1247 = vld [vmem:[%s1 + $0x118] sm:$0xf]
        %v1248 = vld [vmem:[%s1 + $0x11c] sm:$0xf]
        %v1249 = vld [vmem:[%s1 + $0x120] sm:$0xf]
        %v1250 = vld [vmem:[%s1 + $0x124] sm:$0xf]
        %v1251 = vld [vmem:[%s1 + $0x128] sm:$0xf]
        %v1252 = vld [vmem:[%s1 + $0x12c] sm:$0xf]
        %v1253 = vld [vmem:[%s1 + $0x130] sm:$0xf]
        %v1254 = vld [vmem:[%s1 + $0x134] sm:$0xf]
        %v1255 = vld [vmem:[%s1 + $0x138] sm:$0xf]
        %v1256 = vld [vmem:[%s1 + $0x13c] sm:$0xf]
        %v1257 = vld [vmem:[%s1 + $0x140] sm:$0xf]
        %v1258 = vld [vmem:[%s1 + $0x144] sm:$0xf]
        %v1259 = vld [vmem:[%s1 + $0x148] sm:$0xf]
        %v1260 = vld [vmem:[%s1 + $0x14c] sm:$0xf]
        %v1261 = vld [vmem:[%s1 + $0x150] sm:$0xf]
        %v1262 = vld [vmem:[%s1 + $0x154] sm:$0xf]
        %v1263 = vld [vmem:[%s1 + $0x158] sm:$0xf]
        %v1264 = vld [vmem:[%s1 + $0x15c] sm:$0xf]
        %v1265 = vld [vmem:[%s1 + $0x160] sm:$0xf]
        %v1266 = vld [vmem:[%s1 + $0x164] sm:$0xf]
        %v1267 = vld [vmem:[%s1 + $0x168] sm:$0xf]
        %v1268 = vld [vmem:[%s1 + $0x16c] sm:$0xf]
        %v1269 = vld [vmem:[%s1 + $0x170] sm:$0xf]
        %v1270 = vld [vmem:[%s1 + $0x174] sm:$0xf]
        %v1271 = vld [vmem:[%s1 + $0x178] sm:$0xf]
        %v1272 = vld [vmem:[%s1 + $0x17c] sm:$0xf]
        %v1273 = vld [vmem:[%s1 + $0x180] sm:$0xf]
        %v1274 = vld [vmem:[%s1 + $0x184] sm:$0xf]
        %v1275 = vld [vmem:[%s1 + $0x188] sm:$0xf]
        %v1276 = vld [vmem:[%s1 + $0x18c] sm:$0xf]
        %v1277 = vld [vmem:[%s1 + $0x190] sm:$0xf]
        %v1278 = vld [vmem:[%s1 + $0x194] sm:$0xf]
        %v1279 = vld [vmem:[%s1 + $0x198] sm:$0xf]
        %v1280 = vld [vmem:[%s1 + $0x19c] sm:$0xf]
        %v1281 = vld [vmem:[%s1 + $0x1a0] sm:$0xf]
        %v1282 = vld [vmem:[%s1 + $0x1a4] sm:$0xf]
        %v1283 = vld [vmem:[%s1 + $0x1a8] sm:$0xf]
        %v1284 = vld [vmem:[%s1 + $0x1ac] sm:$0xf]
        %v1285 = vld [vmem:[%s1 + $0x1b0] sm:$0xf]
        %v1286 = vld [vmem:[%s1 + $0x1b4] sm:$0xf]
        %v1287 = vld [vmem:[%s1 + $0x1b8] sm:$0xf]
        %v1288 = vld [vmem:[%s1 + $0x1bc] sm:$0xf]
        %v1289 = vld [vmem:[%s1 + $0x1c0] sm:$0xf]
        %v1290 = vld [vmem:[%s1 + $0x1c4] sm:$0xf]
        %v1291 = vld [vmem:[%s1 + $0x1c8] sm:$0xf]
        %v1292 = vld [vmem:[%s1 + $0x1cc] sm:$0xf]
        %v1293 = vld [vmem:[%s1 + $0x1d0] sm:$0xf]
        %v1294 = vld [vmem:[%s1 + $0x1d4] sm:$0xf]
        %v1295 = vld [vmem:[%s1 + $0x1d8] sm:$0xf]
        %v1296 = vld [vmem:[%s1 + $0x1dc] sm:$0xf]
        %v1297 = vld [vmem:[%s1 + $0x1e0] sm:$0xf]
        %v1298 = vld [vmem:[%s1 + $0x1e4] sm:$0xf]
        %v1299 = vld [vmem:[%s1 + $0x1e8] sm:$0xf]
        %v1300 = vld [vmem:[%s1 + $0x1ec] sm:$0xf]
        %v1301 = vld [vmem:[%s1 + $0x1f0] sm:$0xf]
        %v1302 = vld [vmem:[%s1 + $0x1f4] sm:$0xf]
        %v1303 = vld [vmem:[%s1 + $0x1f8] sm:$0xf]
        %v1304 = vld [vmem:[%s1 + $0x1fc] sm:$0xf]
        %v1305 = vld [vmem:[%s1 + $0x200] sm:$0xf]
        %v1306 = vld [vmem:[%s1 + $0x204] sm:$0xf]
        %v1307 = vld [vmem:[%s1 + $0x208] sm:$0xf]
        %v1308 = vld [vmem:[%s1 + $0x20c] sm:$0xf]
        %v1309 = vld [vmem:[%s1 + $0x210] sm:$0xf]
        %v1310 = vld [vmem:[%s1 + $0x214] sm:$0xf]
        %v1311 = vld [vmem:[%s1 + $0x218] sm:$0xf]
        %v1312 = vld [vmem:[%s1 + $0x21c] sm:$0xf]
        %v1313 = vld [vmem:[%s1 + $0x220] sm:$0xf]
        %v1314 = vld [vmem:[%s1 + $0x224] sm:$0xf]
        %v1315 = vld [vmem:[%s1 + $0x228] sm:$0xf]
        %v1316 = vld [vmem:[%s1 + $0x22c] sm:$0xf]
        %v1317 = vld [vmem:[%s1 + $0x230] sm:$0xf]
        %v1318 = vld [vmem:[%s1 + $0x234] sm:$0xf]
        %v1319 = vld [vmem:[%s1 + $0x238] sm:$0xf]
        %v1320 = vld [vmem:[%s1 + $0x23c] sm:$0xf]
        %v1465 = vunpack.c.l.b16 %v1177
        %v1466 = vunpack.c.l.b16 %v1178
        %v1467 = vunpack.c.l.b16 %v1179
        %v1468 = vunpack.c.l.b16 %v1180
        %v1469 = vunpack.c.l.b16 %v1181
        %v1470 = vunpack.c.l.b16 %v1182
        %v1471 = vunpack.c.l.b16 %v1183
        %v1472 = vunpack.c.l.b16 %v1184
        %v1473 = vunpack.c.l.b16 %v1185
        %v1474 = vunpack.c.l.b16 %v1186
        %v1475 = vunpack.c.l.b16 %v1187
        %v1476 = vunpack.c.l.b16 %v1188
        %v1477 = vunpack.c.l.b16 %v1189
        %v1478 = vunpack.c.l.b16 %v1190
        %v1479 = vunpack.c.l.b16 %v1191
        %v1480 = vunpack.c.l.b16 %v1192
        %v1481 = vunpack.c.l.b16 %v1193
        %v1482 = vunpack.c.l.b16 %v1194
        %v1483 = vunpack.c.l.b16 %v1195
        %v1484 = vunpack.c.l.b16 %v1196
        %v1485 = vunpack.c.l.b16 %v1197
        %v1486 = vunpack.c.l.b16 %v1198
        %v1487 = vunpack.c.l.b16 %v1199
        %v1488 = vunpack.c.l.b16 %v1200
        %v1489 = vunpack.c.l.b16 %v1201
        %v1490 = vunpack.c.l.b16 %v1202
        %v1491 = vunpack.c.l.b16 %v1203
        %v1492 = vunpack.c.l.b16 %v1204
        %v1493 = vunpack.c.l.b16 %v1205
        %v1494 = vunpack.c.l.b16 %v1206
        %v1495 = vunpack.c.l.b16 %v1207
        %v1496 = vunpack.c.l.b16 %v1208
        %v1497 = vunpack.c.l.b16 %v1209
        %v1498 = vunpack.c.l.b16 %v1210
        %v1499 = vunpack.c.l.b16 %v1211
        %v1500 = vunpack.c.l.b16 %v1212
        %v1501 = vunpack.c.l.b16 %v1213
        %v1502 = vunpack.c.l.b16 %v1214
        %v1503 = vunpack.c.l.b16 %v1215
        %v1504 = vunpack.c.l.b16 %v1216
        %v1505 = vunpack.c.l.b16 %v1217
        %v1506 = vunpack.c.l.b16 %v1218
        %v1507 = vunpack.c.l.b16 %v1219
        %v1508 = vunpack.c.l.b16 %v1220
        %v1509 = vunpack.c.l.b16 %v1221
        %v1510 = vunpack.c.l.b16 %v1222
        %v1511 = vunpack.c.l.b16 %v1223
        %v1512 = vunpack.c.l.b16 %v1224
        %v1513 = vunpack.c.l.b16 %v1225
        %v1514 = vunpack.c.l.b16 %v1226
        %v1515 = vunpack.c.l.b16 %v1227
        %v1516 = vunpack.c.l.b16 %v1228
        %v1517 = vunpack.c.l.b16 %v1229
        %v1518 = vunpack.c.l.b16 %v1230
        %v1519 = vunpack.c.l.b16 %v1231
        %v1520 = vunpack.c.l.b16 %v1232
        %v1521 = vunpack.c.l.b16 %v1233
        %v1522 = vunpack.c.l.b16 %v1234
        %v1523 = vunpack.c.l.b16 %v1235
        %v1524 = vunpack.c.l.b16 %v1236
        %v1525 = vunpack.c.l.b16 %v1237
        %v1526 = vunpack.c.l.b16 %v1238
        %v1527 = vunpack.c.l.b16 %v1239
        %v1528 = vunpack.c.l.b16 %v1240
        %v1529 = vunpack.c.l.b16 %v1241
        %v1530 = vunpack.c.l.b16 %v1242
        %v1531 = vunpack.c.l.b16 %v1243
        %v1532 = vunpack.c.l.b16 %v1244
        %v1533 = vunpack.c.l.b16 %v1245
        %v1534 = vunpack.c.l.b16 %v1246
        %v1535 = vunpack.c.l.b16 %v1247
        %v1536 = vunpack.c.l.b16 %v1248
        %v1537 = vunpack.c.l.b16 %v1249
        %v1538 = vunpack.c.l.b16 %v1250
        %v1539 = vunpack.c.l.b16 %v1251
        %v1540 = vunpack.c.l.b16 %v1252
        %v1541 = vunpack.c.l.b16 %v1253
        %v1542 = vunpack.c.l.b16 %v1254
        %v1543 = vunpack.c.l.b16 %v1255
        %v1544 = vunpack.c.l.b16 %v1256
        %v1545 = vunpack.c.l.b16 %v1257
        %v1546 = vunpack.c.l.b16 %v1258
        %v1547 = vunpack.c.l.b16 %v1259
        %v1548 = vunpack.c.l.b16 %v1260
        %v1549 = vunpack.c.l.b16 %v1261
        %v1550 = vunpack.c.l.b16 %v1262
        %v1551 = vunpack.c.l.b16 %v1263
        %v1552 = vunpack.c.l.b16 %v1264
        %v1553 = vunpack.c.l.b16 %v1265
        %v1554 = vunpack.c.l.b16 %v1266
        %v1555 = vunpack.c.l.b16 %v1267
        %v1556 = vunpack.c.l.b16 %v1268
        %v1557 = vunpack.c.l.b16 %v1269
        %v1558 = vunpack.c.l.b16 %v1270
        %v1559 = vunpack.c.l.b16 %v1271
        %v1560 = vunpack.c.l.b16 %v1272
        %v1561 = vunpack.c.l.b16 %v1273
        %v1562 = vunpack.c.l.b16 %v1274
        %v1563 = vunpack.c.l.b16 %v1275
        %v1564 = vunpack.c.l.b16 %v1276
        %v1565 = vunpack.c.l.b16 %v1277
        %v1566 = vunpack.c.l.b16 %v1278
        %v1567 = vunpack.c.l.b16 %v1279
        %v1568 = vunpack.c.l.b16 %v1280
        %v1569 = vunpack.c.l.b16 %v1281
        %v1570 = vunpack.c.l.b16 %v1282
        %v1571 = vunpack.c.l.b16 %v1283
        %v1572 = vunpack.c.l.b16 %v1284
        %v1573 = vunpack.c.l.b16 %v1285
        %v1574 = vunpack.c.l.b16 %v1286
        %v1575 = vunpack.c.l.b16 %v1287
        %v1576 = vunpack.c.l.b16 %v1288
        %v1577 = vunpack.c.l.b16 %v1289
        %v1578 = vunpack.c.l.b16 %v1290
        %v1579 = vunpack.c.l.b16 %v1291
        %v1580 = vunpack.c.l.b16 %v1292
        %v1581 = vunpack.c.l.b16 %v1293
        %v1582 = vunpack.c.l.b16 %v1294
        %v1583 = vunpack.c.l.b16 %v1295
        %v1584 = vunpack.c.l.b16 %v1296
        %v1585 = vunpack.c.l.b16 %v1297
        %v1586 = vunpack.c.l.b16 %v1298
        %v1587 = vunpack.c.l.b16 %v1299
        %v1588 = vunpack.c.l.b16 %v1300
        %v1589 = vunpack.c.l.b16 %v1301
        %v1590 = vunpack.c.l.b16 %v1302
        %v1591 = vunpack.c.l.b16 %v1303
        %v1592 = vunpack.c.l.b16 %v1304
        %v1593 = vunpack.c.l.b16 %v1305
        %v1594 = vunpack.c.l.b16 %v1306
        %v1595 = vunpack.c.l.b16 %v1307
        %v1596 = vunpack.c.l.b16 %v1308
        %v1597 = vunpack.c.l.b16 %v1309
        %v1598 = vunpack.c.l.b16 %v1310
        %v1599 = vunpack.c.l.b16 %v1311
        %v1600 = vunpack.c.l.b16 %v1312
        %v1601 = vunpack.c.l.b16 %v1313
        %v1602 = vunpack.c.l.b16 %v1314
        %v1603 = vunpack.c.l.b16 %v1315
        %v1604 = vunpack.c.l.b16 %v1316
        %v1605 = vunpack.c.l.b16 %v1317
        %v1606 = vunpack.c.l.b16 %v1318
        %v1607 = vunpack.c.l.b16 %v1319
        %v1608 = vunpack.c.l.b16 %v1320
        %v1609 = vpack.c.b16 %v1466, %v1465
        %v1610 = vpack.c.b16 %v1468, %v1467
        %v1611 = vpack.c.b16 %v1470, %v1469
        %v1612 = vpack.c.b16 %v1472, %v1471
        %v1613 = vpack.c.b16 %v1474, %v1473
        %v1614 = vpack.c.b16 %v1476, %v1475
        %v1615 = vpack.c.b16 %v1478, %v1477
        %v1616 = vpack.c.b16 %v1480, %v1479
        %v1617 = vpack.c.b16 %v1482, %v1481
        %v1618 = vpack.c.b16 %v1484, %v1483
        %v1619 = vpack.c.b16 %v1486, %v1485
        %v1620 = vpack.c.b16 %v1488, %v1487
        %v1621 = vpack.c.b16 %v1490, %v1489
        %v1622 = vpack.c.b16 %v1492, %v1491
        %v1623 = vpack.c.b16 %v1494, %v1493
        %v1624 = vpack.c.b16 %v1496, %v1495
        %v1625 = vpack.c.b16 %v1498, %v1497
        %v1626 = vpack.c.b16 %v1500, %v1499
        %v1627 = vpack.c.b16 %v1502, %v1501
        %v1628 = vpack.c.b16 %v1504, %v1503
        %v1629 = vpack.c.b16 %v1506, %v1505
        %v1630 = vpack.c.b16 %v1508, %v1507
        %v1631 = vpack.c.b16 %v1510, %v1509
        %v1632 = vpack.c.b16 %v1512, %v1511
        %v1633 = vpack.c.b16 %v1514, %v1513
        %v1634 = vpack.c.b16 %v1516, %v1515
        %v1635 = vpack.c.b16 %v1518, %v1517
        %v1636 = vpack.c.b16 %v1520, %v1519
        %v1637 = vpack.c.b16 %v1522, %v1521
        %v1638 = vpack.c.b16 %v1524, %v1523
        %v1639 = vpack.c.b16 %v1526, %v1525
        %v1640 = vpack.c.b16 %v1528, %v1527
        %v1641 = vpack.c.b16 %v1530, %v1529
        %v1642 = vpack.c.b16 %v1532, %v1531
        %v1643 = vpack.c.b16 %v1534, %v1533
        %v1644 = vpack.c.b16 %v1536, %v1535
        %v1645 = vpack.c.b16 %v1538, %v1537
        %v1646 = vpack.c.b16 %v1540, %v1539
        %v1647 = vpack.c.b16 %v1542, %v1541
        %v1648 = vpack.c.b16 %v1544, %v1543
        %v1649 = vpack.c.b16 %v1546, %v1545
        %v1650 = vpack.c.b16 %v1548, %v1547
        %v1651 = vpack.c.b16 %v1550, %v1549
        %v1652 = vpack.c.b16 %v1552, %v1551
        %v1653 = vpack.c.b16 %v1554, %v1553
        %v1654 = vpack.c.b16 %v1556, %v1555
        %v1655 = vpack.c.b16 %v1558, %v1557
        %v1656 = vpack.c.b16 %v1560, %v1559
        %v1657 = vpack.c.b16 %v1562, %v1561
        %v1658 = vpack.c.b16 %v1564, %v1563
        %v1659 = vpack.c.b16 %v1566, %v1565
        %v1660 = vpack.c.b16 %v1568, %v1567
        %v1661 = vpack.c.b16 %v1570, %v1569
        %v1662 = vpack.c.b16 %v1572, %v1571
        %v1663 = vpack.c.b16 %v1574, %v1573
        %v1664 = vpack.c.b16 %v1576, %v1575
        %v1665 = vpack.c.b16 %v1578, %v1577
        %v1666 = vpack.c.b16 %v1580, %v1579
        %v1667 = vpack.c.b16 %v1582, %v1581
        %v1668 = vpack.c.b16 %v1584, %v1583
        %v1669 = vpack.c.b16 %v1586, %v1585
        %v1670 = vpack.c.b16 %v1588, %v1587
        %v1671 = vpack.c.b16 %v1590, %v1589
        %v1672 = vpack.c.b16 %v1592, %v1591
        %v1673 = vpack.c.b16 %v1594, %v1593
        %v1674 = vpack.c.b16 %v1596, %v1595
        %v1675 = vpack.c.b16 %v1598, %v1597
        %v1676 = vpack.c.b16 %v1600, %v1599
        %v1677 = vpack.c.b16 %v1602, %v1601
        %v1678 = vpack.c.b16 %v1604, %v1603
        %v1679 = vpack.c.b16 %v1606, %v1605
        %v1680 = vpack.c.b16 %v1608, %v1607
        %1753 = vmatprep.subr.bf16.mxu0 0
        %1754 = vmatpush1.bf16.msra.mxu0 %v1609
        %1755 = vmatprep.subr.bf16.mxu0 0
        %1756 = vmatpush1.bf16.msra.mxu0 %v1610
        %1757 = vmatprep.subr.bf16.mxu0 0
        %1758 = vmatpush1.bf16.msra.mxu0 %v1611
        %1759 = vmatprep.subr.bf16.mxu0 0
        %1760 = vmatpush1.bf16.msra.mxu0 %v1612
        %1761 = vmatprep.subr.bf16.mxu0 0
        %1762 = vmatpush1.bf16.msra.mxu0 %v1613
        %1763 = vmatprep.subr.bf16.mxu0 0
        %1764 = vmatpush1.bf16.msra.mxu0 %v1614
        %1765 = vmatprep.subr.bf16.mxu0 0
        %1766 = vmatpush1.bf16.msra.mxu0 %v1615
        %1767 = vmatprep.subr.bf16.mxu0 0
        %1768 = vmatpush1.bf16.msra.mxu0 %v1616
        %1769 = vmatprep.subr.bf16.mxu0 0
        %1770 = vmatpush1.bf16.msra.mxu0 %v1617
        %1771 = vmatprep.subr.bf16.mxu0 0
        %1772 = vmatpush1.bf16.msra.mxu0 %v1618
        %1773 = vmatprep.subr.bf16.mxu0 0
        %1774 = vmatpush1.bf16.msra.mxu0 %v1619
        %1775 = vmatprep.subr.bf16.mxu0 0
        %1776 = vmatpush1.bf16.msra.mxu0 %v1620
        %1777 = vmatprep.subr.bf16.mxu0 0
        %1778 = vmatpush1.bf16.msra.mxu0 %v1621
        %1779 = vmatprep.subr.bf16.mxu0 0
        %1780 = vmatpush1.bf16.msra.mxu0 %v1622
        %1781 = vmatprep.subr.bf16.mxu0 0
        %1782 = vmatpush1.bf16.msra.mxu0 %v1623
        %1783 = vmatprep.subr.bf16.mxu0 0
        %1784 = vmatpush1.bf16.msra.mxu0 %v1624
        %1785 = vmatprep.mubr.bf16.mxu0 %v1034
        %1786 = vmatmul.mubr.bf16.gmra.mrb[0].mxu0 %v1033
        %v1787 = vpop.f32.mrb[0].mxu0
        %v1788 = vadd.f32 0.0, %v1787
        %v1789 = vpop.f32.mrb[0].mxu0
        %v1790 = vpop.f32.mrb[0].mxu0
        %v1791 = vadd.f32 0.0, %v1790
        %v1792 = vpop.f32.mrb[0].mxu0
        %1793 = vmatprep.mubr.bf16.mxu0 %v1043
        %1794 = vmatmul.mubr.bf16.gmra.mrb[0].mxu0 %v1042
        %v1795 = vpop.f32.mrb[0].mxu0
        %v1796 = vadd.f32 0.0, %v1795
        %v1797 = vpop.f32.mrb[0].mxu0
        %v1798 = vpop.f32.mrb[0].mxu0
        %v1799 = vadd.f32 0.0, %v1798
        %v1800 = vpop.f32.mrb[0].mxu0
        %1801 = vmatprep.mubr.bf16.mxu0 %v1052
        %1802 = vmatmul.mubr.bf16.gmra.mrb[0].mxu0 %v1051
        %v1803 = vpop.f32.mrb[0].mxu0
        %v1804 = vadd.f32 0.0, %v1803
        %v1805 = vpop.f32.mrb[0].mxu0
        %v1806 = vpop.f32.mrb[0].mxu0
        %v1807 = vadd.f32 0.0, %v1806
        %v1808 = vpop.f32.mrb[0].mxu0
        %1809 = vmatprep.mubr.bf16.mxu0 %v1061
        %1810 = vmatmul.mubr.bf16.gmra.mrb[0].mxu0 %v1060
        %v1811 = vpop.f32.mrb[0].mxu0
        %v1812 = vadd.f32 0.0, %v1811
        %v1813 = vpop.f32.mrb[0].mxu0
        %v1814 = vpop.f32.mrb[0].mxu0
        %v1815 = vadd.f32 0.0, %v1814
        %v1816 = vpop.f32.mrb[0].mxu0
        %1817 = vmatprep.mubr.bf16.mxu0 %v1070
        %1818 = vmatmul.mubr.bf16.gmra.mrb[0].mxu0 %v1069
        %v1819 = vpop.f32.mrb[0].mxu0
        %v1820 = vadd.f32 0.0, %v1819
        %v1821 = vpop.f32.mrb[0].mxu0
        %v1822 = vpop.f32.mrb[0].mxu0
        %v1823 = vadd.f32 0.0, %v1822
        %v1824 = vpop.f32.mrb[0].mxu0
        %1825 = vmatprep.mubr.bf16.mxu0 %v1079
        %1826 = vmatmul.mubr.bf16.gmra.mrb[0].mxu0 %v1078
        %v1827 = vpop.f32.mrb[0].mxu0
        %v1828 = vadd.f32 0.0, %v1827
        %v1829 = vpop.f32.mrb[0].mxu0
        %v1830 = vpop.f32.mrb[0].mxu0
        %v1831 = vadd.f32 0.0, %v1830
        %v1832 = vpop.f32.mrb[0].mxu0
        %1833 = vmatprep.mubr.bf16.mxu0 %v1088
        %1834 = vmatmul.mubr.bf16.gmra.mrb[0].mxu0 %v1087
        %v1835 = vpop.f32.mrb[0].mxu0
        %v1836 = vadd.f32 0.0, %v1835
        %v1837 = vpop.f32.mrb[0].mxu0
        %v1838 = vpop.f32.mrb[0].mxu0
        %v1839 = vadd.f32 0.0, %v1838
        %v1840 = vpop.f32.mrb[0].mxu0
        %1841 = vmatprep.mubr.bf16.mxu0 %v1097
        %1842 = vmatmul.mubr.bf16.gmra.mrb[0].mxu0 %v1096
        %v1843 = vpop.f32.mrb[0].mxu0
        %v1844 = vadd.f32 0.0, %v1843
        %v1845 = vpop.f32.mrb[0].mxu0
        %v1846 = vpop.f32.mrb[0].mxu0
        %v1847 = vadd.f32 0.0, %v1846
        %v1848 = vpop.f32.mrb[0].mxu0
        %1849 = vmatprep.mubr.bf16.mxu0 %v1106
        %1850 = vmatmul.mubr.bf16.gmra.mrb[0].mxu0 %v1105
        %v1851 = vpop.f32.mrb[0].mxu0
        %v1852 = vadd.f32 0.0, %v1851
        %v1853 = vpop.f32.mrb[0].mxu0
        %v1854 = vpop.f32.mrb[0].mxu0
        %v1855 = vadd.f32 0.0, %v1854
        %v1856 = vpop.f32.mrb[0].mxu0
        %1857 = vmatprep.mubr.bf16.mxu0 %v1115
        %1858 = vmatmul.mubr.bf16.gmra.mrb[0].mxu0 %v1114
        %v1859 = vpop.f32.mrb[0].mxu0
        %v1860 = vadd.f32 0.0, %v1859
        %v1861 = vpop.f32.mrb[0].mxu0
        %v1862 = vpop.f32.mrb[0].mxu0
        %v1863 = vadd.f32 0.0, %v1862
        %v1864 = vpop.f32.mrb[0].mxu0
        %1865 = vmatprep.mubr.bf16.mxu0 %v1124
        %1866 = vmatmul.mubr.bf16.gmra.mrb[0].mxu0 %v1123
        %v1867 = vpop.f32.mrb[0].mxu0
        %v1868 = vadd.f32 0.0, %v1867
        %v1869 = vpop.f32.mrb[0].mxu0
        %v1870 = vpop.f32.mrb[0].mxu0
        %v1871 = vadd.f32 0.0, %v1870
        %v1872 = vpop.f32.mrb[0].mxu0
        %1873 = vmatprep.mubr.bf16.mxu0 %v1133
        %1874 = vmatmul.mubr.bf16.gmra.mrb[0].mxu0 %v1132
        %v1875 = vpop.f32.mrb[0].mxu0
        %v1876 = vadd.f32 0.0, %v1875
        %v1877 = vpop.f32.mrb[0].mxu0
        %v1878 = vpop.f32.mrb[0].mxu0
        %v1879 = vadd.f32 0.0, %v1878
        %v1880 = vpop.f32.mrb[0].mxu0
        %1881 = vmatprep.mubr.bf16.mxu0 %v1142
        %1882 = vmatmul.mubr.bf16.gmra.mrb[0].mxu0 %v1141
        %v1883 = vpop.f32.mrb[0].mxu0
        %v1884 = vadd.f32 0.0, %v1883
        %v1885 = vpop.f32.mrb[0].mxu0
        %v1886 = vpop.f32.mrb[0].mxu0
        %v1887 = vadd.f32 0.0, %v1886
        %v1888 = vpop.f32.mrb[0].mxu0
        %1889 = vmatprep.mubr.bf16.mxu0 %v1151
        %1890 = vmatmul.mubr.bf16.gmra.mrb[0].mxu0 %v1150
        %v1891 = vpop.f32.mrb[0].mxu0
        %v1892 = vadd.f32 0.0, %v1891
        %v1893 = vpop.f32.mrb[0].mxu0
        %v1894 = vpop.f32.mrb[0].mxu0
        %v1895 = vadd.f32 0.0, %v1894
        %v1896 = vpop.f32.mrb[0].mxu0
        %1897 = vmatprep.mubr.bf16.mxu0 %v1160
        %1898 = vmatmul.mubr.bf16.gmra.mrb[0].mxu0 %v1159
        %v1899 = vpop.f32.mrb[0].mxu0
        %v1900 = vadd.f32 0.0, %v1899
        %v1901 = vpop.f32.mrb[0].mxu0
        %v1902 = vpop.f32.mrb[0].mxu0
        %v1903 = vadd.f32 0.0, %v1902
        %v1904 = vpop.f32.mrb[0].mxu0
        %1905 = vmatprep.mubr.bf16.mxu0 %v1169
        %1906 = vmatmul.mubr.bf16.gmra.mrb[0].mxu0 %v1168
        %v1907 = vpop.f32.mrb[0].mxu0
        %v1908 = vadd.f32 0.0, %v1907
        %v1909 = vpop.f32.mrb[0].mxu0
        %v1910 = vpop.f32.mrb[0].mxu0
        %v1911 = vadd.f32 0.0, %v1910
        %v1912 = vpop.f32.mrb[0].mxu0
        %1913 = vdwg.mxu0
        %1914 = vmatprep.subr.bf16.mxu0 0
        %1915 = vmatpush1.bf16.msra.mxu0 %v1625
        %1916 = vmatprep.subr.bf16.mxu0 0
        %1917 = vmatpush1.bf16.msra.mxu0 %v1626
        %1918 = vmatprep.subr.bf16.mxu0 0
        %1919 = vmatpush1.bf16.msra.mxu0 %v1627
        %1920 = vmatprep.subr.bf16.mxu0 0
        %1921 = vmatpush1.bf16.msra.mxu0 %v1628
        %1922 = vmatprep.subr.bf16.mxu0 0
        %1923 = vmatpush1.bf16.msra.mxu0 %v1629
        %1924 = vmatprep.subr.bf16.mxu0 0
        %1925 = vmatpush1.bf16.msra.mxu0 %v1630
        %1926 = vmatprep.subr.bf16.mxu0 0
        %1927 = vmatpush1.bf16.msra.mxu0 %v1631
        %1928 = vmatprep.subr.bf16.mxu0 0
        %1929 = vmatpush1.bf16.msra.mxu0 %v1632
        %1930 = vmatprep.subr.bf16.mxu0 0
        %1931 = vmatpush1.bf16.msra.mxu0 %v1633
        %1932 = vmatprep.subr.bf16.mxu0 0
        %1933 = vmatpush1.bf16.msra.mxu0 %v1634
        %1934 = vmatprep.subr.bf16.mxu0 0
        %1935 = vmatpush1.bf16.msra.mxu0 %v1635
        %1936 = vmatprep.subr.bf16.mxu0 0
        %1937 = vmatpush1.bf16.msra.mxu0 %v1636
        %1938 = vmatprep.subr.bf16.mxu0 0
        %1939 = vmatpush1.bf16.msra.mxu0 %v1637
        %1940 = vmatprep.subr.bf16.mxu0 0
        %1941 = vmatpush1.bf16.msra.mxu0 %v1638
        %1942 = vmatprep.subr.bf16.mxu0 0
        %1943 = vmatpush1.bf16.msra.mxu0 %v1639
        %1944 = vmatprep.subr.bf16.mxu0 0
        %1945 = vmatpush1.bf16.msra.mxu0 %v1640
        %1946 = vmatprep.mubr.bf16.mxu0 %v1036
        %1947 = vmatmul.mubr.bf16.gmra.mrb[0].mxu0 %v1035
        %v1948 = vpop.f32.mrb[0].mxu0
        %v1949 = vadd.f32 %v1788, %v1948
        %v1950 = vpop.f32.mrb[0].mxu0
        %v1951 = vpop.f32.mrb[0].mxu0
        %v1952 = vadd.f32 %v1791, %v1951
        %v1953 = vpop.f32.mrb[0].mxu0
        %1954 = vmatprep.mubr.bf16.mxu0 %v1045
        %1955 = vmatmul.mubr.bf16.gmra.mrb[0].mxu0 %v1044
        %v1956 = vpop.f32.mrb[0].mxu0
        %v1957 = vadd.f32 %v1796, %v1956
        %v1958 = vpop.f32.mrb[0].mxu0
        %v1959 = vpop.f32.mrb[0].mxu0
        %v1960 = vadd.f32 %v1799, %v1959
        %v1961 = vpop.f32.mrb[0].mxu0
        %1962 = vmatprep.mubr.bf16.mxu0 %v1054
        %1963 = vmatmul.mubr.bf16.gmra.mrb[0].mxu0 %v1053
        %v1964 = vpop.f32.mrb[0].mxu0
        %v1965 = vadd.f32 %v1804, %v1964
        %v1966 = vpop.f32.mrb[0].mxu0
        %v1967 = vpop.f32.mrb[0].mxu0
        %v1968 = vadd.f32 %v1807, %v1967
        %v1969 = vpop.f32.mrb[0].mxu0
        %1970 = vmatprep.mubr.bf16.mxu0 %v1063
        %1971 = vmatmul.mubr.bf16.gmra.mrb[0].mxu0 %v1062
        %v1972 = vpop.f32.mrb[0].mxu0
        %v1973 = vadd.f32 %v1812, %v1972
        %v1974 = vpop.f32.mrb[0].mxu0
        %v1975 = vpop.f32.mrb[0].mxu0
        %v1976 = vadd.f32 %v1815, %v1975
        %v1977 = vpop.f32.mrb[0].mxu0
        %1978 = vmatprep.mubr.bf16.mxu0 %v1072
        %1979 = vmatmul.mubr.bf16.gmra.mrb[0].mxu0 %v1071
        %v1980 = vpop.f32.mrb[0].mxu0
        %v1981 = vadd.f32 %v1820, %v1980
        %v1982 = vpop.f32.mrb[0].mxu0
        %v1983 = vpop.f32.mrb[0].mxu0
        %v1984 = vadd.f32 %v1823, %v1983
        %v1985 = vpop.f32.mrb[0].mxu0
        %1986 = vmatprep.mubr.bf16.mxu0 %v1081
        %1987 = vmatmul.mubr.bf16.gmra.mrb[0].mxu0 %v1080
        %v1988 = vpop.f32.mrb[0].mxu0
        %v1989 = vadd.f32 %v1828, %v1988
        %v1990 = vpop.f32.mrb[0].mxu0
        %v1991 = vpop.f32.mrb[0].mxu0
        %v1992 = vadd.f32 %v1831, %v1991
        %v1993 = vpop.f32.mrb[0].mxu0
        %1994 = vmatprep.mubr.bf16.mxu0 %v1090
        %1995 = vmatmul.mubr.bf16.gmra.mrb[0].mxu0 %v1089
        %v1996 = vpop.f32.mrb[0].mxu0
        %v1997 = vadd.f32 %v1836, %v1996
        %v1998 = vpop.f32.mrb[0].mxu0
        %v1999 = vpop.f32.mrb[0].mxu0
        %v2000 = vadd.f32 %v1839, %v1999
        %v2001 = vpop.f32.mrb[0].mxu0
        %2002 = vmatprep.mubr.bf16.mxu0 %v1099
        %2003 = vmatmul.mubr.bf16.gmra.mrb[0].mxu0 %v1098
        %v2004 = vpop.f32.mrb[0].mxu0
        %v2005 = vadd.f32 %v1844, %v2004
        %v2006 = vpop.f32.mrb[0].mxu0
        %v2007 = vpop.f32.mrb[0].mxu0
        %v2008 = vadd.f32 %v1847, %v2007
        %v2009 = vpop.f32.mrb[0].mxu0
        %2010 = vmatprep.mubr.bf16.mxu0 %v1108
        %2011 = vmatmul.mubr.bf16.gmra.mrb[0].mxu0 %v1107
        %v2012 = vpop.f32.mrb[0].mxu0
        %v2013 = vadd.f32 %v1852, %v2012
        %v2014 = vpop.f32.mrb[0].mxu0
        %v2015 = vpop.f32.mrb[0].mxu0
        %v2016 = vadd.f32 %v1855, %v2015
        %v2017 = vpop.f32.mrb[0].mxu0
        %2018 = vmatprep.mubr.bf16.mxu0 %v1117
        %2019 = vmatmul.mubr.bf16.gmra.mrb[0].mxu0 %v1116
        %v2020 = vpop.f32.mrb[0].mxu0
        %v2021 = vadd.f32 %v1860, %v2020
        %v2022 = vpop.f32.mrb[0].mxu0
        %v2023 = vpop.f32.mrb[0].mxu0
        %v2024 = vadd.f32 %v1863, %v2023
        %v2025 = vpop.f32.mrb[0].mxu0
        %2026 = vmatprep.mubr.bf16.mxu0 %v1126
        %2027 = vmatmul.mubr.bf16.gmra.mrb[0].mxu0 %v1125
        %v2028 = vpop.f32.mrb[0].mxu0
        %v2029 = vadd.f32 %v1868, %v2028
        %v2030 = vpop.f32.mrb[0].mxu0
        %v2031 = vpop.f32.mrb[0].mxu0
        %v2032 = vadd.f32 %v1871, %v2031
        %v2033 = vpop.f32.mrb[0].mxu0
        %2034 = vmatprep.mubr.bf16.mxu0 %v1135
        %2035 = vmatmul.mubr.bf16.gmra.mrb[0].mxu0 %v1134
        %v2036 = vpop.f32.mrb[0].mxu0
        %v2037 = vadd.f32 %v1876, %v2036
        %v2038 = vpop.f32.mrb[0].mxu0
        %v2039 = vpop.f32.mrb[0].mxu0
        %v2040 = vadd.f32 %v1879, %v2039
        %v2041 = vpop.f32.mrb[0].mxu0
        %2042 = vmatprep.mubr.bf16.mxu0 %v1144
        %2043 = vmatmul.mubr.bf16.gmra.mrb[0].mxu0 %v1143
        %v2044 = vpop.f32.mrb[0].mxu0
        %v2045 = vadd.f32 %v1884, %v2044
        %v2046 = vpop.f32.mrb[0].mxu0
        %v2047 = vpop.f32.mrb[0].mxu0
        %v2048 = vadd.f32 %v1887, %v2047
        %v2049 = vpop.f32.mrb[0].mxu0
        %2050 = vmatprep.mubr.bf16.mxu0 %v1153
        %2051 = vmatmul.mubr.bf16.gmra.mrb[0].mxu0 %v1152
        %v2052 = vpop.f32.mrb[0].mxu0
        %v2053 = vadd.f32 %v1892, %v2052
        %v2054 = vpop.f32.mrb[0].mxu0
        %v2055 = vpop.f32.mrb[0].mxu0
        %v2056 = vadd.f32 %v1895, %v2055
        %v2057 = vpop.f32.mrb[0].mxu0
        %2058 = vmatprep.mubr.bf16.mxu0 %v1162
        %2059 = vmatmul.mubr.bf16.gmra.mrb[0].mxu0 %v1161
        %v2060 = vpop.f32.mrb[0].mxu0
        %v2061 = vadd.f32 %v1900, %v2060
        %v2062 = vpop.f32.mrb[0].mxu0
        %v2063 = vpop.f32.mrb[0].mxu0
        %v2064 = vadd.f32 %v1903, %v2063
        %v2065 = vpop.f32.mrb[0].mxu0
        %2066 = vmatprep.mubr.bf16.mxu0 %v1171
        %2067 = vmatmul.mubr.bf16.gmra.mrb[0].mxu0 %v1170
        %v2068 = vpop.f32.mrb[0].mxu0
        %v2069 = vadd.f32 %v1908, %v2068
        %v2070 = vpop.f32.mrb[0].mxu0
        %v2071 = vpop.f32.mrb[0].mxu0
        %v2072 = vadd.f32 %v1911, %v2071
        %v2073 = vpop.f32.mrb[0].mxu0
        %2074 = vdwg.mxu0
        %2075 = vmatprep.subr.bf16.mxu0 0
        %2076 = vmatpush1.bf16.msra.mxu0 %v1641
        %2077 = vmatprep.subr.bf16.mxu0 0
        %2078 = vmatpush1.bf16.msra.mxu0 %v1642
        %2079 = vmatprep.subr.bf16.mxu0 0
        %2080 = vmatpush1.bf16.msra.mxu0 %v1643
        %2081 = vmatprep.subr.bf16.mxu0 0
        %2082 = vmatpush1.bf16.msra.mxu0 %v1644
        %2083 = vmatprep.subr.bf16.mxu0 0
        %2084 = vmatpush1.bf16.msra.mxu0 %v1645
        %2085 = vmatprep.subr.bf16.mxu0 0
        %2086 = vmatpush1.bf16.msra.mxu0 %v1646
        %2087 = vmatprep.subr.bf16.mxu0 0
        %2088 = vmatpush1.bf16.msra.mxu0 %v1647
        %2089 = vmatprep.subr.bf16.mxu0 0
        %2090 = vmatpush1.bf16.msra.mxu0 %v1648
        %2091 = vmatprep.subr.bf16.mxu0 0
        %2092 = vmatpush1.bf16.msra.mxu0 %v1649
        %2093 = vmatprep.subr.bf16.mxu0 0
        %2094 = vmatpush1.bf16.msra.mxu0 %v1650
        %2095 = vmatprep.subr.bf16.mxu0 0
        %2096 = vmatpush1.bf16.msra.mxu0 %v1651
        %2097 = vmatprep.subr.bf16.mxu0 0
        %2098 = vmatpush1.bf16.msra.mxu0 %v1652
        %2099 = vmatprep.subr.bf16.mxu0 0
        %2100 = vmatpush1.bf16.msra.mxu0 %v1653
        %2101 = vmatprep.subr.bf16.mxu0 0
        %2102 = vmatpush1.bf16.msra.mxu0 %v1654
        %2103 = vmatprep.subr.bf16.mxu0 0
        %2104 = vmatpush1.bf16.msra.mxu0 %v1655
        %2105 = vmatprep.subr.bf16.mxu0 0
        %2106 = vmatpush1.bf16.msra.mxu0 %v1656
        %2107 = vmatprep.mubr.bf16.mxu0 %v1038
        %2108 = vmatmul.mubr.bf16.gmra.mrb[0].mxu0 %v1037
        %v2109 = vpop.f32.mrb[0].mxu0
        %v2110 = vadd.f32 %v1949, %v2109
        %v2111 = vpop.f32.mrb[0].mxu0
        %v2112 = vpop.f32.mrb[0].mxu0
        %v2113 = vadd.f32 %v1952, %v2112
        %v2114 = vpop.f32.mrb[0].mxu0
        %2115 = vmatprep.mubr.bf16.mxu0 %v1047
        %2116 = vmatmul.mubr.bf16.gmra.mrb[0].mxu0 %v1046
        %v2117 = vpop.f32.mrb[0].mxu0
        %v2118 = vadd.f32 %v1957, %v2117
        %v2119 = vpop.f32.mrb[0].mxu0
        %v2120 = vpop.f32.mrb[0].mxu0
        %v2121 = vadd.f32 %v1960, %v2120
        %v2122 = vpop.f32.mrb[0].mxu0
        %2123 = vmatprep.mubr.bf16.mxu0 %v1056
        %2124 = vmatmul.mubr.bf16.gmra.mrb[0].mxu0 %v1055
        %v2125 = vpop.f32.mrb[0].mxu0
        %v2126 = vadd.f32 %v1965, %v2125
        %v2127 = vpop.f32.mrb[0].mxu0
        %v2128 = vpop.f32.mrb[0].mxu0
        %v2129 = vadd.f32 %v1968, %v2128
        %v2130 = vpop.f32.mrb[0].mxu0
        %2131 = vmatprep.mubr.bf16.mxu0 %v1065
        %2132 = vmatmul.mubr.bf16.gmra.mrb[0].mxu0 %v1064
        %v2133 = vpop.f32.mrb[0].mxu0
        %v2134 = vadd.f32 %v1973, %v2133
        %v2135 = vpop.f32.mrb[0].mxu0
        %v2136 = vpop.f32.mrb[0].mxu0
        %v2137 = vadd.f32 %v1976, %v2136
        %v2138 = vpop.f32.mrb[0].mxu0
        %2139 = vmatprep.mubr.bf16.mxu0 %v1074
        %2140 = vmatmul.mubr.bf16.gmra.mrb[0].mxu0 %v1073
        %v2141 = vpop.f32.mrb[0].mxu0
        %v2142 = vadd.f32 %v1981, %v2141
        %v2143 = vpop.f32.mrb[0].mxu0
        %v2144 = vpop.f32.mrb[0].mxu0
        %v2145 = vadd.f32 %v1984, %v2144
        %v2146 = vpop.f32.mrb[0].mxu0
        %2147 = vmatprep.mubr.bf16.mxu0 %v1083
        %2148 = vmatmul.mubr.bf16.gmra.mrb[0].mxu0 %v1082
        %v2149 = vpop.f32.mrb[0].mxu0
        %v2150 = vadd.f32 %v1989, %v2149
        %v2151 = vpop.f32.mrb[0].mxu0
        %v2152 = vpop.f32.mrb[0].mxu0
        %v2153 = vadd.f32 %v1992, %v2152
        %v2154 = vpop.f32.mrb[0].mxu0
        %2155 = vmatprep.mubr.bf16.mxu0 %v1092
        %2156 = vmatmul.mubr.bf16.gmra.mrb[0].mxu0 %v1091
        %v2157 = vpop.f32.mrb[0].mxu0
        %v2158 = vadd.f32 %v1997, %v2157
        %v2159 = vpop.f32.mrb[0].mxu0
        %v2160 = vpop.f32.mrb[0].mxu0
        %v2161 = vadd.f32 %v2000, %v2160
        %v2162 = vpop.f32.mrb[0].mxu0
        %2163 = vmatprep.mubr.bf16.mxu0 %v1101
        %2164 = vmatmul.mubr.bf16.gmra.mrb[0].mxu0 %v1100
        %v2165 = vpop.f32.mrb[0].mxu0
        %v2166 = vadd.f32 %v2005, %v2165
        %v2167 = vpop.f32.mrb[0].mxu0
        %v2168 = vpop.f32.mrb[0].mxu0
        %v2169 = vadd.f32 %v2008, %v2168
        %v2170 = vpop.f32.mrb[0].mxu0
        %2171 = vmatprep.mubr.bf16.mxu0 %v1110
        %2172 = vmatmul.mubr.bf16.gmra.mrb[0].mxu0 %v1109
        %v2173 = vpop.f32.mrb[0].mxu0
        %v2174 = vadd.f32 %v2013, %v2173
        %v2175 = vpop.f32.mrb[0].mxu0
        %v2176 = vpop.f32.mrb[0].mxu0
        %v2177 = vadd.f32 %v2016, %v2176
        %v2178 = vpop.f32.mrb[0].mxu0
        %2179 = vmatprep.mubr.bf16.mxu0 %v1119
        %2180 = vmatmul.mubr.bf16.gmra.mrb[0].mxu0 %v1118
        %v2181 = vpop.f32.mrb[0].mxu0
        %v2182 = vadd.f32 %v2021, %v2181
        %v2183 = vpop.f32.mrb[0].mxu0
        %v2184 = vpop.f32.mrb[0].mxu0
        %v2185 = vadd.f32 %v2024, %v2184
        %v2186 = vpop.f32.mrb[0].mxu0
        %2187 = vmatprep.mubr.bf16.mxu0 %v1128
        %2188 = vmatmul.mubr.bf16.gmra.mrb[0].mxu0 %v1127
        %v2189 = vpop.f32.mrb[0].mxu0
        %v2190 = vadd.f32 %v2029, %v2189
        %v2191 = vpop.f32.mrb[0].mxu0
        %v2192 = vpop.f32.mrb[0].mxu0
        %v2193 = vadd.f32 %v2032, %v2192
        %v2194 = vpop.f32.mrb[0].mxu0
        %2195 = vmatprep.mubr.bf16.mxu0 %v1137
        %2196 = vmatmul.mubr.bf16.gmra.mrb[0].mxu0 %v1136
        %v2197 = vpop.f32.mrb[0].mxu0
        %v2198 = vadd.f32 %v2037, %v2197
        %v2199 = vpop.f32.mrb[0].mxu0
        %v2200 = vpop.f32.mrb[0].mxu0
        %v2201 = vadd.f32 %v2040, %v2200
        %v2202 = vpop.f32.mrb[0].mxu0
        %2203 = vmatprep.mubr.bf16.mxu0 %v1146
        %2204 = vmatmul.mubr.bf16.gmra.mrb[0].mxu0 %v1145
        %v2205 = vpop.f32.mrb[0].mxu0
        %v2206 = vadd.f32 %v2045, %v2205
        %v2207 = vpop.f32.mrb[0].mxu0
        %v2208 = vpop.f32.mrb[0].mxu0
        %v2209 = vadd.f32 %v2048, %v2208
        %v2210 = vpop.f32.mrb[0].mxu0
        %2211 = vmatprep.mubr.bf16.mxu0 %v1155
        %2212 = vmatmul.mubr.bf16.gmra.mrb[0].mxu0 %v1154
        %v2213 = vpop.f32.mrb[0].mxu0
        %v2214 = vadd.f32 %v2053, %v2213
        %v2215 = vpop.f32.mrb[0].mxu0
        %v2216 = vpop.f32.mrb[0].mxu0
        %v2217 = vadd.f32 %v2056, %v2216
        %v2218 = vpop.f32.mrb[0].mxu0
        %2219 = vmatprep.mubr.bf16.mxu0 %v1164
        %2220 = vmatmul.mubr.bf16.gmra.mrb[0].mxu0 %v1163
        %v2221 = vpop.f32.mrb[0].mxu0
        %v2222 = vadd.f32 %v2061, %v2221
        %v2223 = vpop.f32.mrb[0].mxu0
        %v2224 = vpop.f32.mrb[0].mxu0
        %v2225 = vadd.f32 %v2064, %v2224
        %v2226 = vpop.f32.mrb[0].mxu0
        %2227 = vmatprep.mubr.bf16.mxu0 %v1173
        %2228 = vmatmul.mubr.bf16.gmra.mrb[0].mxu0 %v1172
        %v2229 = vpop.f32.mrb[0].mxu0
        %v2230 = vadd.f32 %v2069, %v2229
        %v2231 = vpop.f32.mrb[0].mxu0
        %v2232 = vpop.f32.mrb[0].mxu0
        %v2233 = vadd.f32 %v2072, %v2232
        %v2234 = vpop.f32.mrb[0].mxu0
        %2235 = vdwg.mxu0
        %2236 = vmatprep.subr.bf16.mxu0 0
        %2237 = vmatpush1.bf16.msra.mxu0 %v1657
        %2238 = vmatprep.subr.bf16.mxu0 0
        %2239 = vmatpush1.bf16.msra.mxu0 %v1658
        %2240 = vmatprep.subr.bf16.mxu0 0
        %2241 = vmatpush1.bf16.msra.mxu0 %v1659
        %2242 = vmatprep.subr.bf16.mxu0 0
        %2243 = vmatpush1.bf16.msra.mxu0 %v1660
        %2244 = vmatprep.subr.bf16.mxu0 0
        %2245 = vmatpush1.bf16.msra.mxu0 %v1661
        %2246 = vmatprep.subr.bf16.mxu0 0
        %2247 = vmatpush1.bf16.msra.mxu0 %v1662
        %2248 = vmatprep.subr.bf16.mxu0 0
        %2249 = vmatpush1.bf16.msra.mxu0 %v1663
        %2250 = vmatprep.subr.bf16.mxu0 0
        %2251 = vmatpush1.bf16.msra.mxu0 %v1664
        %2252 = vmatprep.subr.bf16.mxu0 0
        %2253 = vmatpush1.bf16.msra.mxu0 %v1665
        %2254 = vmatprep.subr.bf16.mxu0 0
        %2255 = vmatpush1.bf16.msra.mxu0 %v1666
        %2256 = vmatprep.subr.bf16.mxu0 0
        %2257 = vmatpush1.bf16.msra.mxu0 %v1667
        %2258 = vmatprep.subr.bf16.mxu0 0
        %2259 = vmatpush1.bf16.msra.mxu0 %v1668
        %2260 = vmatprep.subr.bf16.mxu0 0
        %2261 = vmatpush1.bf16.msra.mxu0 %v1669
        %2262 = vmatprep.subr.bf16.mxu0 0
        %2263 = vmatpush1.bf16.msra.mxu0 %v1670
        %2264 = vmatprep.subr.bf16.mxu0 0
        %2265 = vmatpush1.bf16.msra.mxu0 %v1671
        %2266 = vmatprep.subr.bf16.mxu0 0
        %2267 = vmatpush1.bf16.msra.mxu0 %v1672
        %2268 = vmatprep.mubr.bf16.mxu0 %v1040
        %2269 = vmatmul.mubr.bf16.gmra.mrb[0].mxu0 %v1039
        %v2270 = vpop.f32.mrb[0].mxu0
        %v2271 = vadd.f32 %v2110, %v2270
        %v2272 = vpop.f32.mrb[0].mxu0
        %v2273 = vpop.f32.mrb[0].mxu0
        %v2274 = vadd.f32 %v2113, %v2273
        %v2275 = vpop.f32.mrb[0].mxu0
        %2276 = vmatprep.mubr.bf16.mxu0 %v1049
        %2277 = vmatmul.mubr.bf16.gmra.mrb[0].mxu0 %v1048
        %v2278 = vpop.f32.mrb[0].mxu0
        %v2279 = vadd.f32 %v2118, %v2278
        %v2280 = vpop.f32.mrb[0].mxu0
        %v2281 = vpop.f32.mrb[0].mxu0
        %v2282 = vadd.f32 %v2121, %v2281
        %v2283 = vpop.f32.mrb[0].mxu0
        %2284 = vmatprep.mubr.bf16.mxu0 %v1058
        %2285 = vmatmul.mubr.bf16.gmra.mrb[0].mxu0 %v1057
        %v2286 = vpop.f32.mrb[0].mxu0
        %v2287 = vadd.f32 %v2126, %v2286
        %v2288 = vpop.f32.mrb[0].mxu0
        %v2289 = vpop.f32.mrb[0].mxu0
        %v2290 = vadd.f32 %v2129, %v2289
        %v2291 = vpop.f32.mrb[0].mxu0
        %2292 = vmatprep.mubr.bf16.mxu0 %v1067
        %2293 = vmatmul.mubr.bf16.gmra.mrb[0].mxu0 %v1066
        %v2294 = vpop.f32.mrb[0].mxu0
        %v2295 = vadd.f32 %v2134, %v2294
        %v2296 = vpop.f32.mrb[0].mxu0
        %v2297 = vpop.f32.mrb[0].mxu0
        %v2298 = vadd.f32 %v2137, %v2297
        %v2299 = vpop.f32.mrb[0].mxu0
        %2300 = vmatprep.mubr.bf16.mxu0 %v1076
        %2301 = vmatmul.mubr.bf16.gmra.mrb[0].mxu0 %v1075
        %v2302 = vpop.f32.mrb[0].mxu0
        %v2303 = vadd.f32 %v2142, %v2302
        %v2304 = vpop.f32.mrb[0].mxu0
        %v2305 = vpop.f32.mrb[0].mxu0
        %v2306 = vadd.f32 %v2145, %v2305
        %v2307 = vpop.f32.mrb[0].mxu0
        %2308 = vmatprep.mubr.bf16.mxu0 %v1085
        %2309 = vmatmul.mubr.bf16.gmra.mrb[0].mxu0 %v1084
        %v2310 = vpop.f32.mrb[0].mxu0
        %v2311 = vadd.f32 %v2150, %v2310
        %v2312 = vpop.f32.mrb[0].mxu0
        %v2313 = vpop.f32.mrb[0].mxu0
        %v2314 = vadd.f32 %v2153, %v2313
        %v2315 = vpop.f32.mrb[0].mxu0
        %2316 = vmatprep.mubr.bf16.mxu0 %v1094
        %2317 = vmatmul.mubr.bf16.gmra.mrb[0].mxu0 %v1093
        %v2318 = vpop.f32.mrb[0].mxu0
        %v2319 = vadd.f32 %v2158, %v2318
        %v2320 = vpop.f32.mrb[0].mxu0
        %v2321 = vpop.f32.mrb[0].mxu0
        %v2322 = vadd.f32 %v2161, %v2321
        %v2323 = vpop.f32.mrb[0].mxu0
        %2324 = vmatprep.mubr.bf16.mxu0 %v1103
        %2325 = vmatmul.mubr.bf16.gmra.mrb[0].mxu0 %v1102
        %v2326 = vpop.f32.mrb[0].mxu0
        %v2327 = vadd.f32 %v2166, %v2326
        %v2328 = vpop.f32.mrb[0].mxu0
        %v2329 = vpop.f32.mrb[0].mxu0
        %v2330 = vadd.f32 %v2169, %v2329
        %v2331 = vpop.f32.mrb[0].mxu0
        %2332 = vmatprep.mubr.bf16.mxu0 %v1112
        %2333 = vmatmul.mubr.bf16.gmra.mrb[0].mxu0 %v1111
        %v2334 = vpop.f32.mrb[0].mxu0
        %v2335 = vadd.f32 %v2174, %v2334
        %v2336 = vpop.f32.mrb[0].mxu0
        %v2337 = vpop.f32.mrb[0].mxu0
        %v2338 = vadd.f32 %v2177, %v2337
        %v2339 = vpop.f32.mrb[0].mxu0
        %2340 = vmatprep.mubr.bf16.mxu0 %v1121
        %2341 = vmatmul.mubr.bf16.gmra.mrb[0].mxu0 %v1120
        %v2342 = vpop.f32.mrb[0].mxu0
        %v2343 = vadd.f32 %v2182, %v2342
        %v2344 = vpop.f32.mrb[0].mxu0
        %v2345 = vpop.f32.mrb[0].mxu0
        %v2346 = vadd.f32 %v2185, %v2345
        %v2347 = vpop.f32.mrb[0].mxu0
        %2348 = vmatprep.mubr.bf16.mxu0 %v1130
        %2349 = vmatmul.mubr.bf16.gmra.mrb[0].mxu0 %v1129
        %v2350 = vpop.f32.mrb[0].mxu0
        %v2351 = vadd.f32 %v2190, %v2350
        %v2352 = vpop.f32.mrb[0].mxu0
        %v2353 = vpop.f32.mrb[0].mxu0
        %v2354 = vadd.f32 %v2193, %v2353
        %v2355 = vpop.f32.mrb[0].mxu0
        %2356 = vmatprep.mubr.bf16.mxu0 %v1139
        %2357 = vmatmul.mubr.bf16.gmra.mrb[0].mxu0 %v1138
        %v2358 = vpop.f32.mrb[0].mxu0
        %v2359 = vadd.f32 %v2198, %v2358
        %v2360 = vpop.f32.mrb[0].mxu0
        %v2361 = vpop.f32.mrb[0].mxu0
        %v2362 = vadd.f32 %v2201, %v2361
        %v2363 = vpop.f32.mrb[0].mxu0
        %2364 = vmatprep.mubr.bf16.mxu0 %v1148
        %2365 = vmatmul.mubr.bf16.gmra.mrb[0].mxu0 %v1147
        %v2366 = vpop.f32.mrb[0].mxu0
        %v2367 = vadd.f32 %v2206, %v2366
        %v2368 = vpop.f32.mrb[0].mxu0
        %v2369 = vpop.f32.mrb[0].mxu0
        %v2370 = vadd.f32 %v2209, %v2369
        %v2371 = vpop.f32.mrb[0].mxu0
        %2372 = vmatprep.mubr.bf16.mxu0 %v1157
        %2373 = vmatmul.mubr.bf16.gmra.mrb[0].mxu0 %v1156
        %v2374 = vpop.f32.mrb[0].mxu0
        %v2375 = vadd.f32 %v2214, %v2374
        %v2376 = vpop.f32.mrb[0].mxu0
        %v2377 = vpop.f32.mrb[0].mxu0
        %v2378 = vadd.f32 %v2217, %v2377
        %v2379 = vpop.f32.mrb[0].mxu0
        %2380 = vmatprep.mubr.bf16.mxu0 %v1166
        %2381 = vmatmul.mubr.bf16.gmra.mrb[0].mxu0 %v1165
        %v2382 = vpop.f32.mrb[0].mxu0
        %v2383 = vadd.f32 %v2222, %v2382
        %v2384 = vpop.f32.mrb[0].mxu0
        %v2385 = vpop.f32.mrb[0].mxu0
        %v2386 = vadd.f32 %v2225, %v2385
        %v2387 = vpop.f32.mrb[0].mxu0
        %2388 = vmatprep.mubr.bf16.mxu0 %v1175
        %2389 = vmatmul.mubr.bf16.gmra.mrb[0].mxu0 %v1174
        %v2390 = vpop.f32.mrb[0].mxu0
        %v2391 = vadd.f32 %v2230, %v2390
        %v2392 = vpop.f32.mrb[0].mxu0
        %v2393 = vpop.f32.mrb[0].mxu0
        %v2394 = vadd.f32 %v2233, %v2393
        %v2395 = vpop.f32.mrb[0].mxu0
        %2396 = vdwg.mxu0
        %2397 = vmatprep.subr.bf16.mxu0 0
        %2398 = vmatpush1.bf16.msra.mxu0 %v1673
        %2399 = vmatprep.subr.bf16.mxu0 0
        %2400 = vmatpush1.bf16.msra.mxu0 %v1674
        %2401 = vmatprep.subr.bf16.mxu0 0
        %2402 = vmatpush1.bf16.msra.mxu0 %v1675
        %2403 = vmatprep.subr.bf16.mxu0 0
        %2404 = vmatpush1.bf16.msra.mxu0 %v1676
        %2405 = vmatprep.subr.bf16.mxu0 0
        %2406 = vmatpush1.bf16.msra.mxu0 %v1677
        %2407 = vmatprep.subr.bf16.mxu0 0
        %2408 = vmatpush1.bf16.msra.mxu0 %v1678
        %2409 = vmatprep.subr.bf16.mxu0 0
        %2410 = vmatpush1.bf16.msra.mxu0 %v1679
        %2411 = vmatprep.subr.bf16.mxu0 0
        %2412 = vmatpush1.bf16.msra.mxu0 %v1680
        %2413 = vmatprep.subr.bf16.mxu0 0
        %2414 = vmatpush1.bf16.msra.mxu0 0
        %2415 = vmatprep.subr.bf16.mxu0 0
        %2416 = vmatpush1.bf16.msra.mxu0 0
        %2417 = vmatprep.subr.bf16.mxu0 0
        %2418 = vmatpush1.bf16.msra.mxu0 0
        %2419 = vmatprep.subr.bf16.mxu0 0
        %2420 = vmatpush1.bf16.msra.mxu0 0
        %2421 = vmatprep.subr.bf16.mxu0 0
        %2422 = vmatpush1.bf16.msra.mxu0 0
        %2423 = vmatprep.subr.bf16.mxu0 0
        %2424 = vmatpush1.bf16.msra.mxu0 0
        %2425 = vmatprep.subr.bf16.mxu0 0
        %2426 = vmatpush1.bf16.msra.mxu0 0
        %2427 = vmatprep.subr.bf16.mxu0 0
        %2428 = vmatpush1.bf16.msra.mxu0 0
        %2429 = vmatprep.mubr.bf16.mxu0 0
        %2430 = vmatmul.mubr.bf16.gmra.mrb[0].mxu0 %v1041
        %v2431 = vpop.f32.mrb[0].mxu0
        %v2432 = vadd.f32 %v2271, %v2431
        %v2433 = vpop.f32.mrb[0].mxu0
        %v2434 = vpop.f32.mrb[0].mxu0
        %v2435 = vadd.f32 %v2274, %v2434
        %v2436 = vpop.f32.mrb[0].mxu0
        %2437 = vmatprep.mubr.bf16.mxu0 0
        %2438 = vmatmul.mubr.bf16.gmra.mrb[0].mxu0 %v1050
        %v2439 = vpop.f32.mrb[0].mxu0
        %v2440 = vadd.f32 %v2279, %v2439
        %v2441 = vpop.f32.mrb[0].mxu0
        %v2442 = vpop.f32.mrb[0].mxu0
        %v2443 = vadd.f32 %v2282, %v2442
        %v2444 = vpop.f32.mrb[0].mxu0
        %2445 = vmatprep.mubr.bf16.mxu0 0
        %2446 = vmatmul.mubr.bf16.gmra.mrb[0].mxu0 %v1059
        %v2447 = vpop.f32.mrb[0].mxu0
        %v2448 = vadd.f32 %v2287, %v2447
        %v2449 = vpop.f32.mrb[0].mxu0
        %v2450 = vpop.f32.mrb[0].mxu0
        %v2451 = vadd.f32 %v2290, %v2450
        %v2452 = vpop.f32.mrb[0].mxu0
        %2453 = vmatprep.mubr.bf16.mxu0 0
        %2454 = vmatmul.mubr.bf16.gmra.mrb[0].mxu0 %v1068
        %v2455 = vpop.f32.mrb[0].mxu0
        %v2456 = vadd.f32 %v2295, %v2455
        %v2457 = vpop.f32.mrb[0].mxu0
        %v2458 = vpop.f32.mrb[0].mxu0
        %v2459 = vadd.f32 %v2298, %v2458
        %v2460 = vpop.f32.mrb[0].mxu0
        %2461 = vmatprep.mubr.bf16.mxu0 0
        %2462 = vmatmul.mubr.bf16.gmra.mrb[0].mxu0 %v1077
        %v2463 = vpop.f32.mrb[0].mxu0
        %v2464 = vadd.f32 %v2303, %v2463
        %v2465 = vpop.f32.mrb[0].mxu0
        %v2466 = vpop.f32.mrb[0].mxu0
        %v2467 = vadd.f32 %v2306, %v2466
        %v2468 = vpop.f32.mrb[0].mxu0
        %2469 = vmatprep.mubr.bf16.mxu0 0
        %2470 = vmatmul.mubr.bf16.gmra.mrb[0].mxu0 %v1086
        %v2471 = vpop.f32.mrb[0].mxu0
        %v2472 = vadd.f32 %v2311, %v2471
        %v2473 = vpop.f32.mrb[0].mxu0
        %v2474 = vpop.f32.mrb[0].mxu0
        %v2475 = vadd.f32 %v2314, %v2474
        %v2476 = vpop.f32.mrb[0].mxu0
        %2477 = vmatprep.mubr.bf16.mxu0 0
        %2478 = vmatmul.mubr.bf16.gmra.mrb[0].mxu0 %v1095
        %v2479 = vpop.f32.mrb[0].mxu0
        %v2480 = vadd.f32 %v2319, %v2479
        %v2481 = vpop.f32.mrb[0].mxu0
        %v2482 = vpop.f32.mrb[0].mxu0
        %v2483 = vadd.f32 %v2322, %v2482
        %v2484 = vpop.f32.mrb[0].mxu0
        %2485 = vmatprep.mubr.bf16.mxu0 0
        %2486 = vmatmul.mubr.bf16.gmra.mrb[0].mxu0 %v1104
        %v2487 = vpop.f32.mrb[0].mxu0
        %v2488 = vadd.f32 %v2327, %v2487
        %v2489 = vpop.f32.mrb[0].mxu0
        %v2490 = vpop.f32.mrb[0].mxu0
        %v2491 = vadd.f32 %v2330, %v2490
        %v2492 = vpop.f32.mrb[0].mxu0
        %2493 = vmatprep.mubr.bf16.mxu0 0
        %2494 = vmatmul.mubr.bf16.gmra.mrb[0].mxu0 %v1113
        %v2495 = vpop.f32.mrb[0].mxu0
        %v2496 = vadd.f32 %v2335, %v2495
        %v2497 = vpop.f32.mrb[0].mxu0
        %v2498 = vpop.f32.mrb[0].mxu0
        %v2499 = vadd.f32 %v2338, %v2498
        %v2500 = vpop.f32.mrb[0].mxu0
        %2501 = vmatprep.mubr.bf16.mxu0 0
        %2502 = vmatmul.mubr.bf16.gmra.mrb[0].mxu0 %v1122
        %v2503 = vpop.f32.mrb[0].mxu0
        %v2504 = vadd.f32 %v2343, %v2503
        %v2505 = vpop.f32.mrb[0].mxu0
        %v2506 = vpop.f32.mrb[0].mxu0
        %v2507 = vadd.f32 %v2346, %v2506
        %v2508 = vpop.f32.mrb[0].mxu0
        %2509 = vmatprep.mubr.bf16.mxu0 0
        %2510 = vmatmul.mubr.bf16.gmra.mrb[0].mxu0 %v1131
        %v2511 = vpop.f32.mrb[0].mxu0
        %v2512 = vadd.f32 %v2351, %v2511
        %v2513 = vpop.f32.mrb[0].mxu0
        %v2514 = vpop.f32.mrb[0].mxu0
        %v2515 = vadd.f32 %v2354, %v2514
        %v2516 = vpop.f32.mrb[0].mxu0
        %2517 = vmatprep.mubr.bf16.mxu0 0
        %2518 = vmatmul.mubr.bf16.gmra.mrb[0].mxu0 %v1140
        %v2519 = vpop.f32.mrb[0].mxu0
        %v2520 = vadd.f32 %v2359, %v2519
        %v2521 = vpop.f32.mrb[0].mxu0
        %v2522 = vpop.f32.mrb[0].mxu0
        %v2523 = vadd.f32 %v2362, %v2522
        %v2524 = vpop.f32.mrb[0].mxu0
        %2525 = vmatprep.mubr.bf16.mxu0 0
        %2526 = vmatmul.mubr.bf16.gmra.mrb[0].mxu0 %v1149
        %v2527 = vpop.f32.mrb[0].mxu0
        %v2528 = vadd.f32 %v2367, %v2527
        %v2529 = vpop.f32.mrb[0].mxu0
        %v2530 = vpop.f32.mrb[0].mxu0
        %v2531 = vadd.f32 %v2370, %v2530
        %v2532 = vpop.f32.mrb[0].mxu0
        %2533 = vmatprep.mubr.bf16.mxu0 0
        %2534 = vmatmul.mubr.bf16.gmra.mrb[0].mxu0 %v1158
        %v2535 = vpop.f32.mrb[0].mxu0
        %v2536 = vadd.f32 %v2375, %v2535
        %v2537 = vpop.f32.mrb[0].mxu0
        %v2538 = vpop.f32.mrb[0].mxu0
        %v2539 = vadd.f32 %v2378, %v2538
        %v2540 = vpop.f32.mrb[0].mxu0
        %2541 = vmatprep.mubr.bf16.mxu0 0
        %2542 = vmatmul.mubr.bf16.gmra.mrb[0].mxu0 %v1167
        %v2543 = vpop.f32.mrb[0].mxu0
        %v2544 = vadd.f32 %v2383, %v2543
        %v2545 = vpop.f32.mrb[0].mxu0
        %v2546 = vpop.f32.mrb[0].mxu0
        %v2547 = vadd.f32 %v2386, %v2546
        %v2548 = vpop.f32.mrb[0].mxu0
        %2549 = vmatprep.mubr.bf16.mxu0 0
        %2550 = vmatmul.mubr.bf16.gmra.mrb[0].mxu0 %v1176
        %v2551 = vpop.f32.mrb[0].mxu0
        %v2552 = vadd.f32 %v2391, %v2551
        %v2553 = vpop.f32.mrb[0].mxu0
        %v2554 = vpop.f32.mrb[0].mxu0
        %v2555 = vadd.f32 %v2394, %v2554
        %v2556 = vpop.f32.mrb[0].mxu0
        %2557 = vdwg.mxu0
        %v2558 = vld [vmem:[%s3] sm:$0x1]
        %v2560 = vlaneseq
        %v2561 = vshrl.u32 %v2560, 7
        %v2562 = vsub.s32 0, %v2561
        %v2563 = vrot.slane %v2558, %v2562
        %v2565 = vmul.f32 %v2432, %v2563
        %v2566 = vmul.f32 %v2435, %v2563
        %v2567 = vmul.f32 %v2440, %v2563
        %v2568 = vmul.f32 %v2443, %v2563
        %v2569 = vmul.f32 %v2448, %v2563
        %v2570 = vmul.f32 %v2451, %v2563
        %v2571 = vmul.f32 %v2456, %v2563
        %v2572 = vmul.f32 %v2459, %v2563
        %v2573 = vmul.f32 %v2464, %v2563
        %v2574 = vmul.f32 %v2467, %v2563
        %v2575 = vmul.f32 %v2472, %v2563
        %v2576 = vmul.f32 %v2475, %v2563
        %v2577 = vmul.f32 %v2480, %v2563
        %v2578 = vmul.f32 %v2483, %v2563
        %v2579 = vmul.f32 %v2488, %v2563
        %v2580 = vmul.f32 %v2491, %v2563
        %v2581 = vmul.f32 %v2496, %v2563
        %v2582 = vmul.f32 %v2499, %v2563
        %v2583 = vmul.f32 %v2504, %v2563
        %v2584 = vmul.f32 %v2507, %v2563
        %v2585 = vmul.f32 %v2512, %v2563
        %v2586 = vmul.f32 %v2515, %v2563
        %v2587 = vmul.f32 %v2520, %v2563
        %v2588 = vmul.f32 %v2523, %v2563
        %v2589 = vmul.f32 %v2528, %v2563
        %v2590 = vmul.f32 %v2531, %v2563
        %v2591 = vmul.f32 %v2536, %v2563
        %v2592 = vmul.f32 %v2539, %v2563
        %v2593 = vmul.f32 %v2544, %v2563
        %v2594 = vmul.f32 %v2547, %v2563
        %v2595 = vmul.f32 %v2552, %v2563
        %v2596 = vmul.f32 %v2555, %v2563
        %v2597 = vld [vmem:[%s4] sm:$0x1]
        %v2599 = vlaneseq
        %v2600 = vshrl.u32 %v2599, 7
        %v2601 = vsub.s32 0, %v2600
        %v2602 = vrot.slane %v2597, %v2601
        %v2604 = vadd.f32 %v2565, %v2602
        %v2605 = vadd.f32 %v2566, %v2602
        %v2606 = vadd.f32 %v2567, %v2602
        %v2607 = vadd.f32 %v2568, %v2602
        %v2608 = vadd.f32 %v2569, %v2602
        %v2609 = vadd.f32 %v2570, %v2602
        %v2610 = vadd.f32 %v2571, %v2602
        %v2611 = vadd.f32 %v2572, %v2602
        %v2612 = vadd.f32 %v2573, %v2602
        %v2613 = vadd.f32 %v2574, %v2602
        %v2614 = vadd.f32 %v2575, %v2602
        %v2615 = vadd.f32 %v2576, %v2602
        %v2616 = vadd.f32 %v2577, %v2602
        %v2617 = vadd.f32 %v2578, %v2602
        %v2618 = vadd.f32 %v2579, %v2602
        %v2619 = vadd.f32 %v2580, %v2602
        %v2620 = vadd.f32 %v2581, %v2602
        %v2621 = vadd.f32 %v2582, %v2602
        %v2622 = vadd.f32 %v2583, %v2602
        %v2623 = vadd.f32 %v2584, %v2602
        %v2624 = vadd.f32 %v2585, %v2602
        %v2625 = vadd.f32 %v2586, %v2602
        %v2626 = vadd.f32 %v2587, %v2602
        %v2627 = vadd.f32 %v2588, %v2602
        %v2628 = vadd.f32 %v2589, %v2602
        %v2629 = vadd.f32 %v2590, %v2602
        %v2630 = vadd.f32 %v2591, %v2602
        %v2631 = vadd.f32 %v2592, %v2602
        %v2632 = vadd.f32 %v2593, %v2602
        %v2633 = vadd.f32 %v2594, %v2602
        %v2634 = vadd.f32 %v2595, %v2602
        %v2635 = vadd.f32 %v2596, %v2602
        %v2636 = vmax.f32 %v2604, 0.0
        %v2637 = vmax.f32 %v2605, 0.0
        %v2638 = vmax.f32 %v2606, 0.0
        %v2639 = vmax.f32 %v2607, 0.0
        %v2640 = vmax.f32 %v2608, 0.0
        %v2641 = vmax.f32 %v2609, 0.0
        %v2642 = vmax.f32 %v2610, 0.0
        %v2643 = vmax.f32 %v2611, 0.0
        %v2644 = vmax.f32 %v2612, 0.0
        %v2645 = vmax.f32 %v2613, 0.0
        %v2646 = vmax.f32 %v2614, 0.0
        %v2647 = vmax.f32 %v2615, 0.0
        %v2648 = vmax.f32 %v2616, 0.0
        %v2649 = vmax.f32 %v2617, 0.0
        %v2650 = vmax.f32 %v2618, 0.0
        %v2651 = vmax.f32 %v2619, 0.0
        %v2652 = vmax.f32 %v2620, 0.0
        %v2653 = vmax.f32 %v2621, 0.0
        %v2654 = vmax.f32 %v2622, 0.0
        %v2655 = vmax.f32 %v2623, 0.0
        %v2656 = vmax.f32 %v2624, 0.0
        %v2657 = vmax.f32 %v2625, 0.0
        %v2658 = vmax.f32 %v2626, 0.0
        %v2659 = vmax.f32 %v2627, 0.0
        %v2660 = vmax.f32 %v2628, 0.0
        %v2661 = vmax.f32 %v2629, 0.0
        %v2662 = vmax.f32 %v2630, 0.0
        %v2663 = vmax.f32 %v2631, 0.0
        %v2664 = vmax.f32 %v2632, 0.0
        %v2665 = vmax.f32 %v2633, 0.0
        %v2666 = vmax.f32 %v2634, 0.0
        %v2667 = vmax.f32 %v2635, 0.0
        %v2668 = vmin.f32 %v2636, 20.0
        %v2669 = vmin.f32 %v2637, 20.0
        %v2670 = vmin.f32 %v2638, 20.0
        %v2671 = vmin.f32 %v2639, 20.0
        %v2672 = vmin.f32 %v2640, 20.0
        %v2673 = vmin.f32 %v2641, 20.0
        %v2674 = vmin.f32 %v2642, 20.0
        %v2675 = vmin.f32 %v2643, 20.0
        %v2676 = vmin.f32 %v2644, 20.0
        %v2677 = vmin.f32 %v2645, 20.0
        %v2678 = vmin.f32 %v2646, 20.0
        %v2679 = vmin.f32 %v2647, 20.0
        %v2680 = vmin.f32 %v2648, 20.0
        %v2681 = vmin.f32 %v2649, 20.0
        %v2682 = vmin.f32 %v2650, 20.0
        %v2683 = vmin.f32 %v2651, 20.0
        %v2684 = vmin.f32 %v2652, 20.0
        %v2685 = vmin.f32 %v2653, 20.0
        %v2686 = vmin.f32 %v2654, 20.0
        %v2687 = vmin.f32 %v2655, 20.0
        %v2688 = vmin.f32 %v2656, 20.0
        %v2689 = vmin.f32 %v2657, 20.0
        %v2690 = vmin.f32 %v2658, 20.0
        %v2691 = vmin.f32 %v2659, 20.0
        %v2692 = vmin.f32 %v2660, 20.0
        %v2693 = vmin.f32 %v2661, 20.0
        %v2694 = vmin.f32 %v2662, 20.0
        %v2695 = vmin.f32 %v2663, 20.0
        %v2696 = vmin.f32 %v2664, 20.0
        %v2697 = vmin.f32 %v2665, 20.0
        %v2698 = vmin.f32 %v2666, 20.0
        %v2699 = vmin.f32 %v2667, 20.0
        %2700 = vst [vmem:[#allocation4] sm:$0xff] 0.0
        %2701 = vst [vmem:[#allocation4 + $0x8] sm:$0xff] 0.0
        %2702 = vst [vmem:[#allocation4 + $0x10] sm:$0x3] 0.0
        %2703 = vst [vmem:[#allocation4 + $0x18] sm:$0xff] 0.0
        %2704 = vst [vmem:[#allocation4 + $0x20] sm:$0xff] 0.0
        %2705 = vst [vmem:[#allocation4 + $0x28] sm:$0x3] 0.0
        %2706 = vst [vmem:[#allocation4 + $0x30] sm:$0xff] 0.0
        %2707 = vst [vmem:[#allocation4 + $0x38] sm:$0xff] 0.0
        %2708 = vst [vmem:[#allocation4 + $0x40] sm:$0x3] 0.0
        %2709 = vst [vmem:[#allocation4 + $0x48] sm:$0xff] 0.0
        %2710 = vst [vmem:[#allocation4 + $0x50] sm:$0xff] 0.0
        %2711 = vst [vmem:[#allocation4 + $0x58] sm:$0x3] 0.0
        %2712 = vst [vmem:[#allocation4 + $0x60] sm:$0xff] 0.0
        %2713 = vst [vmem:[#allocation4 + $0x68] sm:$0xff] 0.0
        %2714 = vst [vmem:[#allocation4 + $0x70] sm:$0x3] 0.0
        %2715 = vst [vmem:[#allocation4 + $0x78] sm:$0xff] 0.0
        %2716 = vst [vmem:[#allocation4 + $0x80] sm:$0xff] 0.0
        %2717 = vst [vmem:[#allocation4 + $0x88] sm:$0x3] 0.0
        %2718 = vst [vmem:[#allocation4 + $0x90] sm:$0xff] 0.0
        %2719 = vst [vmem:[#allocation4 + $0x98] sm:$0xff] 0.0
        %2720 = vst [vmem:[#allocation4 + $0xa0] sm:$0x3] 0.0
        %2721 = vst [vmem:[#allocation4 + $0xa8] sm:$0xff] 0.0
        %2722 = vst [vmem:[#allocation4 + $0xb0] sm:$0xff] 0.0
        %2723 = vst [vmem:[#allocation4 + $0xb8] sm:$0x3] 0.0
        %2724 = vst [vmem:[#allocation4 + $0xc0] sm:$0xff] 0.0
        %2725 = vst [vmem:[#allocation4 + $0xc8] sm:$0xff] 0.0
        %2726 = vst [vmem:[#allocation4 + $0xd0] sm:$0x3] 0.0
        %2727 = vst [vmem:[#allocation4 + $0xd8] sm:$0xff] 0.0
        %2728 = vst [vmem:[#allocation4 + $0xe0] sm:$0xff] 0.0
        %2729 = vst [vmem:[#allocation4 + $0xe8] sm:$0x3] 0.0
        %2730 = vst [vmem:[#allocation4 + $0xf0] sm:$0xff] 0.0
        %2731 = vst [vmem:[#allocation4 + $0xf8] sm:$0xff] 0.0
        %2732 = vst [vmem:[#allocation4 + $0x100] sm:$0x3] 0.0
        %2733 = vst [vmem:[#allocation4 + $0x108] sm:$0xff] 0.0
        %2734 = vst [vmem:[#allocation4 + $0x110] sm:$0xff] 0.0
        %2735 = vst [vmem:[#allocation4 + $0x118] sm:$0x3] 0.0
        %2736 = vst [vmem:[#allocation4 + $0x120] sm:$0xff] 0.0
        %2737 = vst [vmem:[#allocation4 + $0x128] sm:$0xff] 0.0
        %2738 = vst [vmem:[#allocation4 + $0x130] sm:$0x3] 0.0
        %2739 = vst [vmem:[#allocation4 + $0x138] sm:$0xff] 0.0
        %2740 = vst [vmem:[#allocation4 + $0x140] sm:$0xff] 0.0
        %2741 = vst [vmem:[#allocation4 + $0x148] sm:$0x3] 0.0
        %2742 = vst [vmem:[#allocation4 + $0x150] sm:$0xff] 0.0
        %2743 = vst [vmem:[#allocation4 + $0x158] sm:$0xff] 0.0
        %2744 = vst [vmem:[#allocation4 + $0x160] sm:$0x3] 0.0
        %2745 = vst [vmem:[#allocation4 + $0x168] sm:$0xff] 0.0
        %2746 = vst [vmem:[#allocation4 + $0x170] sm:$0xff] 0.0
        %2747 = vst [vmem:[#allocation4 + $0x178] sm:$0x3] 0.0
        %2748 = vst [vmem:[#allocation4 + $0x180] sm:$0xff] 0.0
        %2749 = vst [vmem:[#allocation4 + $0x188] sm:$0xff] 0.0
        %2750 = vst [vmem:[#allocation4 + $0x190] sm:$0x3] 0.0
        %2751 = vst [vmem:[#allocation4 + $0x198] sm:$0xff] 0.0
        %2752 = vst [vmem:[#allocation4 + $0x1a0] sm:$0xff] 0.0
        %2753 = vst [vmem:[#allocation4 + $0x1a8] sm:$0x3] 0.0
        %s2754 = scalar_lea.vmem [#allocation4], 24
        %2755 = vst [vmem:[%s2754 + $0x1] sm:$0xff] %v2668
        %2756 = vst [vmem:[%s2754 + $0x9] sm:$0xff] %v2669
        %2757 = vst [vmem:[%s2754 + $0x19] sm:$0xff] %v2670
        %2758 = vst [vmem:[%s2754 + $0x21] sm:$0xff] %v2671
        %2759 = vst [vmem:[%s2754 + $0x31] sm:$0xff] %v2672
        %2760 = vst [vmem:[%s2754 + $0x39] sm:$0xff] %v2673
        %2761 = vst [vmem:[%s2754 + $0x49] sm:$0xff] %v2674
        %2762 = vst [vmem:[%s2754 + $0x51] sm:$0xff] %v2675
        %2763 = vst [vmem:[%s2754 + $0x61] sm:$0xff] %v2676
        %2764 = vst [vmem:[%s2754 + $0x69] sm:$0xff] %v2677
        %2765 = vst [vmem:[%s2754 + $0x79] sm:$0xff] %v2678
        %2766 = vst [vmem:[%s2754 + $0x81] sm:$0xff] %v2679
        %2767 = vst [vmem:[%s2754 + $0x91] sm:$0xff] %v2680
        %2768 = vst [vmem:[%s2754 + $0x99] sm:$0xff] %v2681
        %2769 = vst [vmem:[%s2754 + $0xa9] sm:$0xff] %v2682
        %2770 = vst [vmem:[%s2754 + $0xb1] sm:$0xff] %v2683
        %2771 = vst [vmem:[%s2754 + $0xc1] sm:$0xff] %v2684
        %2772 = vst [vmem:[%s2754 + $0xc9] sm:$0xff] %v2685
        %2773 = vst [vmem:[%s2754 + $0xd9] sm:$0xff] %v2686
        %2774 = vst [vmem:[%s2754 + $0xe1] sm:$0xff] %v2687
        %2775 = vst [vmem:[%s2754 + $0xf1] sm:$0xff] %v2688
        %2776 = vst [vmem:[%s2754 + $0xf9] sm:$0xff] %v2689
        %2777 = vst [vmem:[%s2754 + $0x109] sm:$0xff] %v2690
        %2778 = vst [vmem:[%s2754 + $0x111] sm:$0xff] %v2691
        %2779 = vst [vmem:[%s2754 + $0x121] sm:$0xff] %v2692
        %2780 = vst [vmem:[%s2754 + $0x129] sm:$0xff] %v2693
        %2781 = vst [vmem:[%s2754 + $0x139] sm:$0xff] %v2694
        %2782 = vst [vmem:[%s2754 + $0x141] sm:$0xff] %v2695
        %2783 = vst [vmem:[%s2754 + $0x151] sm:$0xff] %v2696
        %2784 = vst [vmem:[%s2754 + $0x159] sm:$0xff] %v2697
        %2785 = vst [vmem:[%s2754 + $0x169] sm:$0xff] %v2698
        %2786 = vst [vmem:[%s2754 + $0x171] sm:$0xff] %v2699
        %v2787 = vld [vmem:[#allocation4] sm:$0xff]
        %v2788 = vld [vmem:[#allocation4 + $0x8] sm:$0xff]
        %v2789 = vld [vmem:[#allocation4 + $0x18] sm:$0xff]
        %v2790 = vld [vmem:[#allocation4 + $0x20] sm:$0xff]
        %v2791 = vld [vmem:[#allocation4 + $0x30] sm:$0xff]
        %v2792 = vld [vmem:[#allocation4 + $0x38] sm:$0xff]
        %v2793 = vld [vmem:[#allocation4 + $0x48] sm:$0xff]
        %v2794 = vld [vmem:[#allocation4 + $0x50] sm:$0xff]
        %v2795 = vld [vmem:[#allocation4 + $0x60] sm:$0xff]
        %v2796 = vld [vmem:[#allocation4 + $0x68] sm:$0xff]
        %v2797 = vld [vmem:[#allocation4 + $0x78] sm:$0xff]
        %v2798 = vld [vmem:[#allocation4 + $0x80] sm:$0xff]
        %v2799 = vld [vmem:[#allocation4 + $0x90] sm:$0xff]
        %v2800 = vld [vmem:[#allocation4 + $0x98] sm:$0xff]
        %v2801 = vld [vmem:[#allocation4 + $0xa8] sm:$0xff]
        %v2802 = vld [vmem:[#allocation4 + $0xb0] sm:$0xff]
        %v2803 = vld [vmem:[#allocation4 + $0xc0] sm:$0xff]
        %v2804 = vld [vmem:[#allocation4 + $0xc8] sm:$0xff]
        %v2805 = vld [vmem:[#allocation4 + $0xd8] sm:$0xff]
        %v2806 = vld [vmem:[#allocation4 + $0xe0] sm:$0xff]
        %v2807 = vld [vmem:[#allocation4 + $0xf0] sm:$0xff]
        %v2808 = vld [vmem:[#allocation4 + $0xf8] sm:$0xff]
        %v2809 = vld [vmem:[#allocation4 + $0x108] sm:$0xff]
        %v2810 = vld [vmem:[#allocation4 + $0x110] sm:$0xff]
        %v2811 = vld [vmem:[#allocation4 + $0x120] sm:$0xff]
        %v2812 = vld [vmem:[#allocation4 + $0x128] sm:$0xff]
        %v2813 = vld [vmem:[#allocation4 + $0x138] sm:$0xff]
        %v2814 = vld [vmem:[#allocation4 + $0x140] sm:$0xff]
        %v2815 = vld [vmem:[#allocation4 + $0x150] sm:$0xff]
        %v2816 = vld [vmem:[#allocation4 + $0x158] sm:$0xff]
        %v2817 = vld [vmem:[#allocation4 + $0x168] sm:$0xff]
        %v2818 = vld [vmem:[#allocation4 + $0x170] sm:$0xff]
        %v2819 = vpack.c.bf16 %v2788, %v2787
        %v2820 = vpack.c.bf16 %v2790, %v2789
        %v2821 = vpack.c.bf16 %v2792, %v2791
        %v2822 = vpack.c.bf16 %v2794, %v2793
        %v2823 = vpack.c.bf16 %v2796, %v2795
        %v2824 = vpack.c.bf16 %v2798, %v2797
        %v2825 = vpack.c.bf16 %v2800, %v2799
        %v2826 = vpack.c.bf16 %v2802, %v2801
        %v2827 = vpack.c.bf16 %v2804, %v2803
        %v2828 = vpack.c.bf16 %v2806, %v2805
        %v2829 = vpack.c.bf16 %v2808, %v2807
        %v2830 = vpack.c.bf16 %v2810, %v2809
        %v2831 = vpack.c.bf16 %v2812, %v2811
        %v2832 = vpack.c.bf16 %v2814, %v2813
        %v2833 = vpack.c.bf16 %v2816, %v2815
        %v2834 = vpack.c.bf16 %v2818, %v2817
        %2835 = vst [vmem:[#allocation3] sm:$0xff] %v2819
        %2836 = vst [vmem:[#allocation3 + $0x48] sm:$0xff] %v2820
        %2837 = vst [vmem:[#allocation3 + $0x90] sm:$0xff] %v2821
        %2838 = vst [vmem:[#allocation3 + $0xd8] sm:$0xff] %v2822
        %2839 = vst [vmem:[#allocation3 + $0x120] sm:$0xff] %v2823
        %2840 = vst [vmem:[#allocation3 + $0x168] sm:$0xff] %v2824
        %2841 = vst [vmem:[#allocation3 + $0x1b0] sm:$0xff] %v2825
        %2842 = vst [vmem:[#allocation3 + $0x1f8] sm:$0xff] %v2826
        %2843 = vst [vmem:[#allocation3 + $0x240] sm:$0xff] %v2827
        %2844 = vst [vmem:[#allocation3 + $0x288] sm:$0xff] %v2828
        %2845 = vst [vmem:[#allocation3 + $0x2d0] sm:$0xff] %v2829
        %2846 = vst [vmem:[#allocation3 + $0x318] sm:$0xff] %v2830
        %2847 = vst [vmem:[#allocation3 + $0x360] sm:$0xff] %v2831
        %2848 = vst [vmem:[#allocation3 + $0x3a8] sm:$0xff] %v2832
        %2849 = vst [vmem:[#allocation3 + $0x3f0] sm:$0xff] %v2833
        %2850 = vst [vmem:[#allocation3 + $0x438] sm:$0xff] %v2834
        %v2851 = vld [vmem:[#allocation4 + $0x1] sm:$0xff]
        %v2852 = vld [vmem:[#allocation4 + $0x9] sm:$0xff]
        %v2853 = vld [vmem:[#allocation4 + $0x19] sm:$0xff]
        %v2854 = vld [vmem:[#allocation4 + $0x21] sm:$0xff]
        %v2855 = vld [vmem:[#allocation4 + $0x31] sm:$0xff]
        %v2856 = vld [vmem:[#allocation4 + $0x39] sm:$0xff]
        %v2857 = vld [vmem:[#allocation4 + $0x49] sm:$0xff]
        %v2858 = vld [vmem:[#allocation4 + $0x51] sm:$0xff]
        %v2859 = vld [vmem:[#allocation4 + $0x61] sm:$0xff]
        %v2860 = vld [vmem:[#allocation4 + $0x69] sm:$0xff]
        %v2861 = vld [vmem:[#allocation4 + $0x79] sm:$0xff]
        %v2862 = vld [vmem:[#allocation4 + $0x81] sm:$0xff]
        %v2863 = vld [vmem:[#allocation4 + $0x91] sm:$0xff]
        %v2864 = vld [vmem:[#allocation4 + $0x99] sm:$0xff]
        %v2865 = vld [vmem:[#allocation4 + $0xa9] sm:$0xff]
        %v2866 = vld [vmem:[#allocation4 + $0xb1] sm:$0xff]
        %v2867 = vld [vmem:[#allocation4 + $0xc1] sm:$0xff]
        %v2868 = vld [vmem:[#allocation4 + $0xc9] sm:$0xff]
        %v2869 = vld [vmem:[#allocation4 + $0xd9] sm:$0xff]
        %v2870 = vld [vmem:[#allocation4 + $0xe1] sm:$0xff]
        %v2871 = vld [vmem:[#allocation4 + $0xf1] sm:$0xff]
        %v2872 = vld [vmem:[#allocation4 + $0xf9] sm:$0xff]
        %v2873 = vld [vmem:[#allocation4 + $0x109] sm:$0xff]
        %v2874 = vld [vmem:[#allocation4 + $0x111] sm:$0xff]
        %v2875 = vld [vmem:[#allocation4 + $0x121] sm:$0xff]
        %v2876 = vld [vmem:[#allocation4 + $0x129] sm:$0xff]
        %v2877 = vld [vmem:[#allocation4 + $0x139] sm:$0xff]
        %v2878 = vld [vmem:[#allocation4 + $0x141] sm:$0xff]
        %v2879 = vld [vmem:[#allocation4 + $0x151] sm:$0xff]
        %v2880 = vld [vmem:[#allocation4 + $0x159] sm:$0xff]
        %v2881 = vld [vmem:[#allocation4 + $0x169] sm:$0xff]
        %v2882 = vld [vmem:[#allocation4 + $0x171] sm:$0xff]
        %v2883 = vpack.c.bf16 %v2852, %v2851
        %v2884 = vpack.c.bf16 %v2854, %v2853
        %v2885 = vpack.c.bf16 %v2856, %v2855
        %v2886 = vpack.c.bf16 %v2858, %v2857
        %v2887 = vpack.c.bf16 %v2860, %v2859
        %v2888 = vpack.c.bf16 %v2862, %v2861
        %v2889 = vpack.c.bf16 %v2864, %v2863
        %v2890 = vpack.c.bf16 %v2866, %v2865
        %v2891 = vpack.c.bf16 %v2868, %v2867
        %v2892 = vpack.c.bf16 %v2870, %v2869
        %v2893 = vpack.c.bf16 %v2872, %v2871
        %v2894 = vpack.c.bf16 %v2874, %v2873
        %v2895 = vpack.c.bf16 %v2876, %v2875
        %v2896 = vpack.c.bf16 %v2878, %v2877
        %v2897 = vpack.c.bf16 %v2880, %v2879
        %v2898 = vpack.c.bf16 %v2882, %v2881
        %2899 = vst [vmem:[#allocation3 + $0x8] sm:$0xff] %v2883
        %2900 = vst [vmem:[#allocation3 + $0x50] sm:$0xff] %v2884
        %2901 = vst [vmem:[#allocation3 + $0x98] sm:$0xff] %v2885
        %2902 = vst [vmem:[#allocation3 + $0xe0] sm:$0xff] %v2886
        %2903 = vst [vmem:[#allocation3 + $0x128] sm:$0xff] %v2887
        %2904 = vst [vmem:[#allocation3 + $0x170] sm:$0xff] %v2888
        %2905 = vst [vmem:[#allocation3 + $0x1b8] sm:$0xff] %v2889
        %2906 = vst [vmem:[#allocation3 + $0x200] sm:$0xff] %v2890
        %2907 = vst [vmem:[#allocation3 + $0x248] sm:$0xff] %v2891
        %2908 = vst [vmem:[#allocation3 + $0x290] sm:$0xff] %v2892
        %2909 = vst [vmem:[#allocation3 + $0x2d8] sm:$0xff] %v2893
        %2910 = vst [vmem:[#allocation3 + $0x320] sm:$0xff] %v2894
        %2911 = vst [vmem:[#allocation3 + $0x368] sm:$0xff] %v2895
        %2912 = vst [vmem:[#allocation3 + $0x3b0] sm:$0xff] %v2896
        %2913 = vst [vmem:[#allocation3 + $0x3f8] sm:$0xff] %v2897
        %2914 = vst [vmem:[#allocation3 + $0x440] sm:$0xff] %v2898
        %v2915 = vld [vmem:[#allocation4 + $0x2] sm:$0xff]
        %v2916 = vld [vmem:[#allocation4 + $0xa] sm:$0xff]
        %v2917 = vld [vmem:[#allocation4 + $0x1a] sm:$0xff]
        %v2918 = vld [vmem:[#allocation4 + $0x22] sm:$0xff]
        %v2919 = vld [vmem:[#allocation4 + $0x32] sm:$0xff]
        %v2920 = vld [vmem:[#allocation4 + $0x3a] sm:$0xff]
        %v2921 = vld [vmem:[#allocation4 + $0x4a] sm:$0xff]
        %v2922 = vld [vmem:[#allocation4 + $0x52] sm:$0xff]
        %v2923 = vld [vmem:[#allocation4 + $0x62] sm:$0xff]
        %v2924 = vld [vmem:[#allocation4 + $0x6a] sm:$0xff]
        %v2925 = vld [vmem:[#allocation4 + $0x7a] sm:$0xff]
        %v2926 = vld [vmem:[#allocation4 + $0x82] sm:$0xff]
        %v2927 = vld [vmem:[#allocation4 + $0x92] sm:$0xff]
        %v2928 = vld [vmem:[#allocation4 + $0x9a] sm:$0xff]
        %v2929 = vld [vmem:[#allocation4 + $0xaa] sm:$0xff]
        %v2930 = vld [vmem:[#allocation4 + $0xb2] sm:$0xff]
        %v2931 = vld [vmem:[#allocation4 + $0xc2] sm:$0xff]
        %v2932 = vld [vmem:[#allocation4 + $0xca] sm:$0xff]
        %v2933 = vld [vmem:[#allocation4 + $0xda] sm:$0xff]
        %v2934 = vld [vmem:[#allocation4 + $0xe2] sm:$0xff]
        %v2935 = vld [vmem:[#allocation4 + $0xf2] sm:$0xff]
        %v2936 = vld [vmem:[#allocation4 + $0xfa] sm:$0xff]
        %v2937 = vld [vmem:[#allocation4 + $0x10a] sm:$0xff]
        %v2938 = vld [vmem:[#allocation4 + $0x112] sm:$0xff]
        %v2939 = vld [vmem:[#allocation4 + $0x122] sm:$0xff]
        %v2940 = vld [vmem:[#allocation4 + $0x12a] sm:$0xff]
        %v2941 = vld [vmem:[#allocation4 + $0x13a] sm:$0xff]
        %v2942 = vld [vmem:[#allocation4 + $0x142] sm:$0xff]
        %v2943 = vld [vmem:[#allocation4 + $0x152] sm:$0xff]
        %v2944 = vld [vmem:[#allocation4 + $0x15a] sm:$0xff]
        %v2945 = vld [vmem:[#allocation4 + $0x16a] sm:$0xff]
        %v2946 = vld [vmem:[#allocation4 + $0x172] sm:$0xff]
        %v2947 = vpack.c.bf16 %v2916, %v2915
        %v2948 = vpack.c.bf16 %v2918, %v2917
        %v2949 = vpack.c.bf16 %v2920, %v2919
        %v2950 = vpack.c.bf16 %v2922, %v2921
        %v2951 = vpack.c.bf16 %v2924, %v2923
        %v2952 = vpack.c.bf16 %v2926, %v2925
        %v2953 = vpack.c.bf16 %v2928, %v2927
        %v2954 = vpack.c.bf16 %v2930, %v2929
        %v2955 = vpack.c.bf16 %v2932, %v2931
        %v2956 = vpack.c.bf16 %v2934, %v2933
        %v2957 = vpack.c.bf16 %v2936, %v2935
        %v2958 = vpack.c.bf16 %v2938, %v2937
        %v2959 = vpack.c.bf16 %v2940, %v2939
        %v2960 = vpack.c.bf16 %v2942, %v2941
        %v2961 = vpack.c.bf16 %v2944, %v2943
        %v2962 = vpack.c.bf16 %v2946, %v2945
        %2963 = vst [vmem:[#allocation3 + $0x10] sm:$0xff] %v2947
        %2964 = vst [vmem:[#allocation3 + $0x58] sm:$0xff] %v2948
        %2965 = vst [vmem:[#allocation3 + $0xa0] sm:$0xff] %v2949
        %2966 = vst [vmem:[#allocation3 + $0xe8] sm:$0xff] %v2950
        %2967 = vst [vmem:[#allocation3 + $0x130] sm:$0xff] %v2951
        %2968 = vst [vmem:[#allocation3 + $0x178] sm:$0xff] %v2952
        %2969 = vst [vmem:[#allocation3 + $0x1c0] sm:$0xff] %v2953
        %2970 = vst [vmem:[#allocation3 + $0x208] sm:$0xff] %v2954
        %2971 = vst [vmem:[#allocation3 + $0x250] sm:$0xff] %v2955
        %2972 = vst [vmem:[#allocation3 + $0x298] sm:$0xff] %v2956
        %2973 = vst [vmem:[#allocation3 + $0x2e0] sm:$0xff] %v2957
        %2974 = vst [vmem:[#allocation3 + $0x328] sm:$0xff] %v2958
        %2975 = vst [vmem:[#allocation3 + $0x370] sm:$0xff] %v2959
        %2976 = vst [vmem:[#allocation3 + $0x3b8] sm:$0xff] %v2960
        %2977 = vst [vmem:[#allocation3 + $0x400] sm:$0xff] %v2961
        %2978 = vst [vmem:[#allocation3 + $0x448] sm:$0xff] %v2962
        %v2979 = vld [vmem:[%s2754] sm:$0xff]
        %v2980 = vld [vmem:[%s2754 + $0x8] sm:$0xff]
        %v2981 = vld [vmem:[%s2754 + $0x18] sm:$0xff]
        %v2982 = vld [vmem:[%s2754 + $0x20] sm:$0xff]
        %v2983 = vld [vmem:[%s2754 + $0x30] sm:$0xff]
        %v2984 = vld [vmem:[%s2754 + $0x38] sm:$0xff]
        %v2985 = vld [vmem:[%s2754 + $0x48] sm:$0xff]
        %v2986 = vld [vmem:[%s2754 + $0x50] sm:$0xff]
        %v2987 = vld [vmem:[%s2754 + $0x60] sm:$0xff]
        %v2988 = vld [vmem:[%s2754 + $0x68] sm:$0xff]
        %v2989 = vld [vmem:[%s2754 + $0x78] sm:$0xff]
        %v2990 = vld [vmem:[%s2754 + $0x80] sm:$0xff]
        %v2991 = vld [vmem:[%s2754 + $0x90] sm:$0xff]
        %v2992 = vld [vmem:[%s2754 + $0x98] sm:$0xff]
        %v2993 = vld [vmem:[%s2754 + $0xa8] sm:$0xff]
        %v2994 = vld [vmem:[%s2754 + $0xb0] sm:$0xff]
        %v2995 = vld [vmem:[%s2754 + $0xc0] sm:$0xff]
        %v2996 = vld [vmem:[%s2754 + $0xc8] sm:$0xff]
        %v2997 = vld [vmem:[%s2754 + $0xd8] sm:$0xff]
        %v2998 = vld [vmem:[%s2754 + $0xe0] sm:$0xff]
        %v2999 = vld [vmem:[%s2754 + $0xf0] sm:$0xff]
        %v3000 = vld [vmem:[%s2754 + $0xf8] sm:$0xff]
        %v3001 = vld [vmem:[%s2754 + $0x108] sm:$0xff]
        %v3002 = vld [vmem:[%s2754 + $0x110] sm:$0xff]
        %v3003 = vld [vmem:[%s2754 + $0x120] sm:$0xff]
        %v3004 = vld [vmem:[%s2754 + $0x128] sm:$0xff]
        %v3005 = vld [vmem:[%s2754 + $0x138] sm:$0xff]
        %v3006 = vld [vmem:[%s2754 + $0x140] sm:$0xff]
        %v3007 = vld [vmem:[%s2754 + $0x150] sm:$0xff]
        %v3008 = vld [vmem:[%s2754 + $0x158] sm:$0xff]
        %v3009 = vld [vmem:[%s2754 + $0x168] sm:$0xff]
        %v3010 = vld [vmem:[%s2754 + $0x170] sm:$0xff]
        %v3011 = vpack.c.bf16 %v2980, %v2979
        %v3012 = vpack.c.bf16 %v2982, %v2981
        %v3013 = vpack.c.bf16 %v2984, %v2983
        %v3014 = vpack.c.bf16 %v2986, %v2985
        %v3015 = vpack.c.bf16 %v2988, %v2987
        %v3016 = vpack.c.bf16 %v2990, %v2989
        %v3017 = vpack.c.bf16 %v2992, %v2991
        %v3018 = vpack.c.bf16 %v2994, %v2993
        %v3019 = vpack.c.bf16 %v2996, %v2995
        %v3020 = vpack.c.bf16 %v2998, %v2997
        %v3021 = vpack.c.bf16 %v3000, %v2999
        %v3022 = vpack.c.bf16 %v3002, %v3001
        %v3023 = vpack.c.bf16 %v3004, %v3003
        %v3024 = vpack.c.bf16 %v3006, %v3005
        %v3025 = vpack.c.bf16 %v3008, %v3007
        %v3026 = vpack.c.bf16 %v3010, %v3009
        %3027 = vst [vmem:[#allocation3 + $0x18] sm:$0xff] %v3011
        %3028 = vst [vmem:[#allocation3 + $0x60] sm:$0xff] %v3012
        %3029 = vst [vmem:[#allocation3 + $0xa8] sm:$0xff] %v3013
        %3030 = vst [vmem:[#allocation3 + $0xf0] sm:$0xff] %v3014
        %3031 = vst [vmem:[#allocation3 + $0x138] sm:$0xff] %v3015
        %3032 = vst [vmem:[#allocation3 + $0x180] sm:$0xff] %v3016
        %3033 = vst [vmem:[#allocation3 + $0x1c8] sm:$0xff] %v3017
        %3034 = vst [vmem:[#allocation3 + $0x210] sm:$0xff] %v3018
        %3035 = vst [vmem:[#allocation3 + $0x258] sm:$0xff] %v3019
        %3036 = vst [vmem:[#allocation3 + $0x2a0] sm:$0xff] %v3020
        %3037 = vst [vmem:[#allocation3 + $0x2e8] sm:$0xff] %v3021
        %3038 = vst [vmem:[#allocation3 + $0x330] sm:$0xff] %v3022
        %3039 = vst [vmem:[#allocation3 + $0x378] sm:$0xff] %v3023
        %3040 = vst [vmem:[#allocation3 + $0x3c0] sm:$0xff] %v3024
        %3041 = vst [vmem:[#allocation3 + $0x408] sm:$0xff] %v3025
        %3042 = vst [vmem:[#allocation3 + $0x450] sm:$0xff] %v3026
        %v3043 = vld [vmem:[%s2754 + $0x1] sm:$0xff]
        %v3044 = vld [vmem:[%s2754 + $0x9] sm:$0xff]
        %v3045 = vld [vmem:[%s2754 + $0x19] sm:$0xff]
        %v3046 = vld [vmem:[%s2754 + $0x21] sm:$0xff]
        %v3047 = vld [vmem:[%s2754 + $0x31] sm:$0xff]
        %v3048 = vld [vmem:[%s2754 + $0x39] sm:$0xff]
        %v3049 = vld [vmem:[%s2754 + $0x49] sm:$0xff]
        %v3050 = vld [vmem:[%s2754 + $0x51] sm:$0xff]
        %v3051 = vld [vmem:[%s2754 + $0x61] sm:$0xff]
        %v3052 = vld [vmem:[%s2754 + $0x69] sm:$0xff]
        %v3053 = vld [vmem:[%s2754 + $0x79] sm:$0xff]
        %v3054 = vld [vmem:[%s2754 + $0x81] sm:$0xff]
        %v3055 = vld [vmem:[%s2754 + $0x91] sm:$0xff]
        %v3056 = vld [vmem:[%s2754 + $0x99] sm:$0xff]
        %v3057 = vld [vmem:[%s2754 + $0xa9] sm:$0xff]
        %v3058 = vld [vmem:[%s2754 + $0xb1] sm:$0xff]
        %v3059 = vld [vmem:[%s2754 + $0xc1] sm:$0xff]
        %v3060 = vld [vmem:[%s2754 + $0xc9] sm:$0xff]
        %v3061 = vld [vmem:[%s2754 + $0xd9] sm:$0xff]
        %v3062 = vld [vmem:[%s2754 + $0xe1] sm:$0xff]
        %v3063 = vld [vmem:[%s2754 + $0xf1] sm:$0xff]
        %v3064 = vld [vmem:[%s2754 + $0xf9] sm:$0xff]
        %v3065 = vld [vmem:[%s2754 + $0x109] sm:$0xff]
        %v3066 = vld [vmem:[%s2754 + $0x111] sm:$0xff]
        %v3067 = vld [vmem:[%s2754 + $0x121] sm:$0xff]
        %v3068 = vld [vmem:[%s2754 + $0x129] sm:$0xff]
        %v3069 = vld [vmem:[%s2754 + $0x139] sm:$0xff]
        %v3070 = vld [vmem:[%s2754 + $0x141] sm:$0xff]
        %v3071 = vld [vmem:[%s2754 + $0x151] sm:$0xff]
        %v3072 = vld [vmem:[%s2754 + $0x159] sm:$0xff]
        %v3073 = vld [vmem:[%s2754 + $0x169] sm:$0xff]
        %v3074 = vld [vmem:[%s2754 + $0x171] sm:$0xff]
        %v3075 = vpack.c.bf16 %v3044, %v3043
        %v3076 = vpack.c.bf16 %v3046, %v3045
        %v3077 = vpack.c.bf16 %v3048, %v3047
        %v3078 = vpack.c.bf16 %v3050, %v3049
        %v3079 = vpack.c.bf16 %v3052, %v3051
        %v3080 = vpack.c.bf16 %v3054, %v3053
        %v3081 = vpack.c.bf16 %v3056, %v3055
        %v3082 = vpack.c.bf16 %v3058, %v3057
        %v3083 = vpack.c.bf16 %v3060, %v3059
        %v3084 = vpack.c.bf16 %v3062, %v3061
        %v3085 = vpack.c.bf16 %v3064, %v3063
        %v3086 = vpack.c.bf16 %v3066, %v3065
        %v3087 = vpack.c.bf16 %v3068, %v3067
        %v3088 = vpack.c.bf16 %v3070, %v3069
        %v3089 = vpack.c.bf16 %v3072, %v3071
        %v3090 = vpack.c.bf16 %v3074, %v3073
        %3091 = vst [vmem:[#allocation3 + $0x20] sm:$0xff] %v3075
        %3092 = vst [vmem:[#allocation3 + $0x68] sm:$0xff] %v3076
        %3093 = vst [vmem:[#allocation3 + $0xb0] sm:$0xff] %v3077
        %3094 = vst [vmem:[#allocation3 + $0xf8] sm:$0xff] %v3078
        %3095 = vst [vmem:[#allocation3 + $0x140] sm:$0xff] %v3079
        %3096 = vst [vmem:[#allocation3 + $0x188] sm:$0xff] %v3080
        %3097 = vst [vmem:[#allocation3 + $0x1d0] sm:$0xff] %v3081
        %3098 = vst [vmem:[#allocation3 + $0x218] sm:$0xff] %v3082
        %3099 = vst [vmem:[#allocation3 + $0x260] sm:$0xff] %v3083
        %3100 = vst [vmem:[#allocation3 + $0x2a8] sm:$0xff] %v3084
        %3101 = vst [vmem:[#allocation3 + $0x2f0] sm:$0xff] %v3085
        %3102 = vst [vmem:[#allocation3 + $0x338] sm:$0xff] %v3086
        %3103 = vst [vmem:[#allocation3 + $0x380] sm:$0xff] %v3087
        %3104 = vst [vmem:[#allocation3 + $0x3c8] sm:$0xff] %v3088
        %3105 = vst [vmem:[#allocation3 + $0x410] sm:$0xff] %v3089
        %3106 = vst [vmem:[#allocation3 + $0x458] sm:$0xff] %v3090
        %v3107 = vld [vmem:[%s2754 + $0x2] sm:$0xff]
        %v3108 = vld [vmem:[%s2754 + $0xa] sm:$0xff]
        %v3109 = vld [vmem:[%s2754 + $0x1a] sm:$0xff]
        %v3110 = vld [vmem:[%s2754 + $0x22] sm:$0xff]
        %v3111 = vld [vmem:[%s2754 + $0x32] sm:$0xff]
        %v3112 = vld [vmem:[%s2754 + $0x3a] sm:$0xff]
        %v3113 = vld [vmem:[%s2754 + $0x4a] sm:$0xff]
        %v3114 = vld [vmem:[%s2754 + $0x52] sm:$0xff]
        %v3115 = vld [vmem:[%s2754 + $0x62] sm:$0xff]
        %v3116 = vld [vmem:[%s2754 + $0x6a] sm:$0xff]
        %v3117 = vld [vmem:[%s2754 + $0x7a] sm:$0xff]
        %v3118 = vld [vmem:[%s2754 + $0x82] sm:$0xff]
        %v3119 = vld [vmem:[%s2754 + $0x92] sm:$0xff]
        %v3120 = vld [vmem:[%s2754 + $0x9a] sm:$0xff]
        %v3121 = vld [vmem:[%s2754 + $0xaa] sm:$0xff]
        %v3122 = vld [vmem:[%s2754 + $0xb2] sm:$0xff]
        %v3123 = vld [vmem:[%s2754 + $0xc2] sm:$0xff]
        %v3124 = vld [vmem:[%s2754 + $0xca] sm:$0xff]
        %v3125 = vld [vmem:[%s2754 + $0xda] sm:$0xff]
        %v3126 = vld [vmem:[%s2754 + $0xe2] sm:$0xff]
        %v3127 = vld [vmem:[%s2754 + $0xf2] sm:$0xff]
        %v3128 = vld [vmem:[%s2754 + $0xfa] sm:$0xff]
        %v3129 = vld [vmem:[%s2754 + $0x10a] sm:$0xff]
        %v3130 = vld [vmem:[%s2754 + $0x112] sm:$0xff]
        %v3131 = vld [vmem:[%s2754 + $0x122] sm:$0xff]
        %v3132 = vld [vmem:[%s2754 + $0x12a] sm:$0xff]
        %v3133 = vld [vmem:[%s2754 + $0x13a] sm:$0xff]
        %v3134 = vld [vmem:[%s2754 + $0x142] sm:$0xff]
        %v3135 = vld [vmem:[%s2754 + $0x152] sm:$0xff]
        %v3136 = vld [vmem:[%s2754 + $0x15a] sm:$0xff]
        %v3137 = vld [vmem:[%s2754 + $0x16a] sm:$0xff]
        %v3138 = vld [vmem:[%s2754 + $0x172] sm:$0xff]
        %v3139 = vpack.c.bf16 %v3108, %v3107
        %v3140 = vpack.c.bf16 %v3110, %v3109
        %v3141 = vpack.c.bf16 %v3112, %v3111
        %v3142 = vpack.c.bf16 %v3114, %v3113
        %v3143 = vpack.c.bf16 %v3116, %v3115
        %v3144 = vpack.c.bf16 %v3118, %v3117
        %v3145 = vpack.c.bf16 %v3120, %v3119
        %v3146 = vpack.c.bf16 %v3122, %v3121
        %v3147 = vpack.c.bf16 %v3124, %v3123
        %v3148 = vpack.c.bf16 %v3126, %v3125
        %v3149 = vpack.c.bf16 %v3128, %v3127
        %v3150 = vpack.c.bf16 %v3130, %v3129
        %v3151 = vpack.c.bf16 %v3132, %v3131
        %v3152 = vpack.c.bf16 %v3134, %v3133
        %v3153 = vpack.c.bf16 %v3136, %v3135
        %v3154 = vpack.c.bf16 %v3138, %v3137
        %3155 = vst [vmem:[#allocation3 + $0x28] sm:$0xff] %v3139
        %3156 = vst [vmem:[#allocation3 + $0x70] sm:$0xff] %v3140
        %3157 = vst [vmem:[#allocation3 + $0xb8] sm:$0xff] %v3141
        %3158 = vst [vmem:[#allocation3 + $0x100] sm:$0xff] %v3142
        %3159 = vst [vmem:[#allocation3 + $0x148] sm:$0xff] %v3143
        %3160 = vst [vmem:[#allocation3 + $0x190] sm:$0xff] %v3144
        %3161 = vst [vmem:[#allocation3 + $0x1d8] sm:$0xff] %v3145
        %3162 = vst [vmem:[#allocation3 + $0x220] sm:$0xff] %v3146
        %3163 = vst [vmem:[#allocation3 + $0x268] sm:$0xff] %v3147
        %3164 = vst [vmem:[#allocation3 + $0x2b0] sm:$0xff] %v3148
        %3165 = vst [vmem:[#allocation3 + $0x2f8] sm:$0xff] %v3149
        %3166 = vst [vmem:[#allocation3 + $0x340] sm:$0xff] %v3150
        %3167 = vst [vmem:[#allocation3 + $0x388] sm:$0xff] %v3151
        %3168 = vst [vmem:[#allocation3 + $0x3d0] sm:$0xff] %v3152
        %3169 = vst [vmem:[#allocation3 + $0x418] sm:$0xff] %v3153
        %3170 = vst [vmem:[#allocation3 + $0x460] sm:$0xff] %v3154
        %s3171 = scalar_lea.vmem [#allocation4], 48
        %v3172 = vld [vmem:[%s3171] sm:$0xff]
        %v3173 = vld [vmem:[%s3171 + $0x8] sm:$0xff]
        %v3174 = vld [vmem:[%s3171 + $0x18] sm:$0xff]
        %v3175 = vld [vmem:[%s3171 + $0x20] sm:$0xff]
        %v3176 = vld [vmem:[%s3171 + $0x30] sm:$0xff]
        %v3177 = vld [vmem:[%s3171 + $0x38] sm:$0xff]
        %v3178 = vld [vmem:[%s3171 + $0x48] sm:$0xff]
        %v3179 = vld [vmem:[%s3171 + $0x50] sm:$0xff]
        %v3180 = vld [vmem:[%s3171 + $0x60] sm:$0xff]
        %v3181 = vld [vmem:[%s3171 + $0x68] sm:$0xff]
        %v3182 = vld [vmem:[%s3171 + $0x78] sm:$0xff]
        %v3183 = vld [vmem:[%s3171 + $0x80] sm:$0xff]
        %v3184 = vld [vmem:[%s3171 + $0x90] sm:$0xff]
        %v3185 = vld [vmem:[%s3171 + $0x98] sm:$0xff]
        %v3186 = vld [vmem:[%s3171 + $0xa8] sm:$0xff]
        %v3187 = vld [vmem:[%s3171 + $0xb0] sm:$0xff]
        %v3188 = vld [vmem:[%s3171 + $0xc0] sm:$0xff]
        %v3189 = vld [vmem:[%s3171 + $0xc8] sm:$0xff]
        %v3190 = vld [vmem:[%s3171 + $0xd8] sm:$0xff]
        %v3191 = vld [vmem:[%s3171 + $0xe0] sm:$0xff]
        %v3192 = vld [vmem:[%s3171 + $0xf0] sm:$0xff]
        %v3193 = vld [vmem:[%s3171 + $0xf8] sm:$0xff]
        %v3194 = vld [vmem:[%s3171 + $0x108] sm:$0xff]
        %v3195 = vld [vmem:[%s3171 + $0x110] sm:$0xff]
        %v3196 = vld [vmem:[%s3171 + $0x120] sm:$0xff]
        %v3197 = vld [vmem:[%s3171 + $0x128] sm:$0xff]
        %v3198 = vld [vmem:[%s3171 + $0x138] sm:$0xff]
        %v3199 = vld [vmem:[%s3171 + $0x140] sm:$0xff]
        %v3200 = vld [vmem:[%s3171 + $0x150] sm:$0xff]
        %v3201 = vld [vmem:[%s3171 + $0x158] sm:$0xff]
        %v3202 = vld [vmem:[%s3171 + $0x168] sm:$0xff]
        %v3203 = vld [vmem:[%s3171 + $0x170] sm:$0xff]
        %v3204 = vpack.c.bf16 %v3173, %v3172
        %v3205 = vpack.c.bf16 %v3175, %v3174
        %v3206 = vpack.c.bf16 %v3177, %v3176
        %v3207 = vpack.c.bf16 %v3179, %v3178
        %v3208 = vpack.c.bf16 %v3181, %v3180
        %v3209 = vpack.c.bf16 %v3183, %v3182
        %v3210 = vpack.c.bf16 %v3185, %v3184
        %v3211 = vpack.c.bf16 %v3187, %v3186
        %v3212 = vpack.c.bf16 %v3189, %v3188
        %v3213 = vpack.c.bf16 %v3191, %v3190
        %v3214 = vpack.c.bf16 %v3193, %v3192
        %v3215 = vpack.c.bf16 %v3195, %v3194
        %v3216 = vpack.c.bf16 %v3197, %v3196
        %v3217 = vpack.c.bf16 %v3199, %v3198
        %v3218 = vpack.c.bf16 %v3201, %v3200
        %v3219 = vpack.c.bf16 %v3203, %v3202
        %3220 = vst [vmem:[#allocation3 + $0x30] sm:$0xff] %v3204
        %3221 = vst [vmem:[#allocation3 + $0x78] sm:$0xff] %v3205
        %3222 = vst [vmem:[#allocation3 + $0xc0] sm:$0xff] %v3206
        %3223 = vst [vmem:[#allocation3 + $0x108] sm:$0xff] %v3207
        %3224 = vst [vmem:[#allocation3 + $0x150] sm:$0xff] %v3208
        %3225 = vst [vmem:[#allocation3 + $0x198] sm:$0xff] %v3209
        %3226 = vst [vmem:[#allocation3 + $0x1e0] sm:$0xff] %v3210
        %3227 = vst [vmem:[#allocation3 + $0x228] sm:$0xff] %v3211
        %3228 = vst [vmem:[#allocation3 + $0x270] sm:$0xff] %v3212
        %3229 = vst [vmem:[#allocation3 + $0x2b8] sm:$0xff] %v3213
        %3230 = vst [vmem:[#allocation3 + $0x300] sm:$0xff] %v3214
        %3231 = vst [vmem:[#allocation3 + $0x348] sm:$0xff] %v3215
        %3232 = vst [vmem:[#allocation3 + $0x390] sm:$0xff] %v3216
        %3233 = vst [vmem:[#allocation3 + $0x3d8] sm:$0xff] %v3217
        %3234 = vst [vmem:[#allocation3 + $0x420] sm:$0xff] %v3218
        %3235 = vst [vmem:[#allocation3 + $0x468] sm:$0xff] %v3219
        %v3236 = vld [vmem:[%s3171 + $0x1] sm:$0xff]
        %v3237 = vld [vmem:[%s3171 + $0x9] sm:$0xff]
        %v3238 = vld [vmem:[%s3171 + $0x19] sm:$0xff]
        %v3239 = vld [vmem:[%s3171 + $0x21] sm:$0xff]
        %v3240 = vld [vmem:[%s3171 + $0x31] sm:$0xff]
        %v3241 = vld [vmem:[%s3171 + $0x39] sm:$0xff]
        %v3242 = vld [vmem:[%s3171 + $0x49] sm:$0xff]
        %v3243 = vld [vmem:[%s3171 + $0x51] sm:$0xff]
        %v3244 = vld [vmem:[%s3171 + $0x61] sm:$0xff]
        %v3245 = vld [vmem:[%s3171 + $0x69] sm:$0xff]
        %v3246 = vld [vmem:[%s3171 + $0x79] sm:$0xff]
        %v3247 = vld [vmem:[%s3171 + $0x81] sm:$0xff]
        %v3248 = vld [vmem:[%s3171 + $0x91] sm:$0xff]
        %v3249 = vld [vmem:[%s3171 + $0x99] sm:$0xff]
        %v3250 = vld [vmem:[%s3171 + $0xa9] sm:$0xff]
        %v3251 = vld [vmem:[%s3171 + $0xb1] sm:$0xff]
        %v3252 = vld [vmem:[%s3171 + $0xc1] sm:$0xff]
        %v3253 = vld [vmem:[%s3171 + $0xc9] sm:$0xff]
        %v3254 = vld [vmem:[%s3171 + $0xd9] sm:$0xff]
        %v3255 = vld [vmem:[%s3171 + $0xe1] sm:$0xff]
        %v3256 = vld [vmem:[%s3171 + $0xf1] sm:$0xff]
        %v3257 = vld [vmem:[%s3171 + $0xf9] sm:$0xff]
        %v3258 = vld [vmem:[%s3171 + $0x109] sm:$0xff]
        %v3259 = vld [vmem:[%s3171 + $0x111] sm:$0xff]
        %v3260 = vld [vmem:[%s3171 + $0x121] sm:$0xff]
        %v3261 = vld [vmem:[%s3171 + $0x129] sm:$0xff]
        %v3262 = vld [vmem:[%s3171 + $0x139] sm:$0xff]
        %v3263 = vld [vmem:[%s3171 + $0x141] sm:$0xff]
        %v3264 = vld [vmem:[%s3171 + $0x151] sm:$0xff]
        %v3265 = vld [vmem:[%s3171 + $0x159] sm:$0xff]
        %v3266 = vld [vmem:[%s3171 + $0x169] sm:$0xff]
        %v3267 = vld [vmem:[%s3171 + $0x171] sm:$0xff]
        %v3268 = vpack.c.bf16 %v3237, %v3236
        %v3269 = vpack.c.bf16 %v3239, %v3238
        %v3270 = vpack.c.bf16 %v3241, %v3240
        %v3271 = vpack.c.bf16 %v3243, %v3242
        %v3272 = vpack.c.bf16 %v3245, %v3244
        %v3273 = vpack.c.bf16 %v3247, %v3246
        %v3274 = vpack.c.bf16 %v3249, %v3248
        %v3275 = vpack.c.bf16 %v3251, %v3250
        %v3276 = vpack.c.bf16 %v3253, %v3252
        %v3277 = vpack.c.bf16 %v3255, %v3254
        %v3278 = vpack.c.bf16 %v3257, %v3256
        %v3279 = vpack.c.bf16 %v3259, %v3258
        %v3280 = vpack.c.bf16 %v3261, %v3260
        %v3281 = vpack.c.bf16 %v3263, %v3262
        %v3282 = vpack.c.bf16 %v3265, %v3264
        %v3283 = vpack.c.bf16 %v3267, %v3266
        %3284 = vst [vmem:[#allocation3 + $0x38] sm:$0xff] %v3268
        %3285 = vst [vmem:[#allocation3 + $0x80] sm:$0xff] %v3269
        %3286 = vst [vmem:[#allocation3 + $0xc8] sm:$0xff] %v3270
        %3287 = vst [vmem:[#allocation3 + $0x110] sm:$0xff] %v3271
        %3288 = vst [vmem:[#allocation3 + $0x158] sm:$0xff] %v3272
        %3289 = vst [vmem:[#allocation3 + $0x1a0] sm:$0xff] %v3273
        %3290 = vst [vmem:[#allocation3 + $0x1e8] sm:$0xff] %v3274
        %3291 = vst [vmem:[#allocation3 + $0x230] sm:$0xff] %v3275
        %3292 = vst [vmem:[#allocation3 + $0x278] sm:$0xff] %v3276
        %3293 = vst [vmem:[#allocation3 + $0x2c0] sm:$0xff] %v3277
        %3294 = vst [vmem:[#allocation3 + $0x308] sm:$0xff] %v3278
        %3295 = vst [vmem:[#allocation3 + $0x350] sm:$0xff] %v3279
        %3296 = vst [vmem:[#allocation3 + $0x398] sm:$0xff] %v3280
        %3297 = vst [vmem:[#allocation3 + $0x3e0] sm:$0xff] %v3281
        %3298 = vst [vmem:[#allocation3 + $0x428] sm:$0xff] %v3282
        %3299 = vst [vmem:[#allocation3 + $0x470] sm:$0xff] %v3283
        %v3300 = vld [vmem:[%s3171 + $0x2] sm:$0xff]
        %v3301 = vld [vmem:[%s3171 + $0xa] sm:$0xff]
        %v3302 = vld [vmem:[%s3171 + $0x1a] sm:$0xff]
        %v3303 = vld [vmem:[%s3171 + $0x22] sm:$0xff]
        %v3304 = vld [vmem:[%s3171 + $0x32] sm:$0xff]
        %v3305 = vld [vmem:[%s3171 + $0x3a] sm:$0xff]
        %v3306 = vld [vmem:[%s3171 + $0x4a] sm:$0xff]
        %v3307 = vld [vmem:[%s3171 + $0x52] sm:$0xff]
        %v3308 = vld [vmem:[%s3171 + $0x62] sm:$0xff]
        %v3309 = vld [vmem:[%s3171 + $0x6a] sm:$0xff]
        %v3310 = vld [vmem:[%s3171 + $0x7a] sm:$0xff]
        %v3311 = vld [vmem:[%s3171 + $0x82] sm:$0xff]
        %v3312 = vld [vmem:[%s3171 + $0x92] sm:$0xff]
        %v3313 = vld [vmem:[%s3171 + $0x9a] sm:$0xff]
        %v3314 = vld [vmem:[%s3171 + $0xaa] sm:$0xff]
        %v3315 = vld [vmem:[%s3171 + $0xb2] sm:$0xff]
        %v3316 = vld [vmem:[%s3171 + $0xc2] sm:$0xff]
        %v3317 = vld [vmem:[%s3171 + $0xca] sm:$0xff]
        %v3318 = vld [vmem:[%s3171 + $0xda] sm:$0xff]
        %v3319 = vld [vmem:[%s3171 + $0xe2] sm:$0xff]
        %v3320 = vld [vmem:[%s3171 + $0xf2] sm:$0xff]
        %v3321 = vld [vmem:[%s3171 + $0xfa] sm:$0xff]
        %v3322 = vld [vmem:[%s3171 + $0x10a] sm:$0xff]
        %v3323 = vld [vmem:[%s3171 + $0x112] sm:$0xff]
        %v3324 = vld [vmem:[%s3171 + $0x122] sm:$0xff]
        %v3325 = vld [vmem:[%s3171 + $0x12a] sm:$0xff]
        %v3326 = vld [vmem:[%s3171 + $0x13a] sm:$0xff]
        %v3327 = vld [vmem:[%s3171 + $0x142] sm:$0xff]
        %v3328 = vld [vmem:[%s3171 + $0x152] sm:$0xff]
        %v3329 = vld [vmem:[%s3171 + $0x15a] sm:$0xff]
        %v3330 = vld [vmem:[%s3171 + $0x16a] sm:$0xff]
        %v3331 = vld [vmem:[%s3171 + $0x172] sm:$0xff]
        %v3332 = vpack.c.bf16 %v3301, %v3300
        %v3333 = vpack.c.bf16 %v3303, %v3302
        %v3334 = vpack.c.bf16 %v3305, %v3304
        %v3335 = vpack.c.bf16 %v3307, %v3306
        %v3336 = vpack.c.bf16 %v3309, %v3308
        %v3337 = vpack.c.bf16 %v3311, %v3310
        %v3338 = vpack.c.bf16 %v3313, %v3312
        %v3339 = vpack.c.bf16 %v3315, %v3314
        %v3340 = vpack.c.bf16 %v3317, %v3316
        %v3341 = vpack.c.bf16 %v3319, %v3318
        %v3342 = vpack.c.bf16 %v3321, %v3320
        %v3343 = vpack.c.bf16 %v3323, %v3322
        %v3344 = vpack.c.bf16 %v3325, %v3324
        %v3345 = vpack.c.bf16 %v3327, %v3326
        %v3346 = vpack.c.bf16 %v3329, %v3328
        %v3347 = vpack.c.bf16 %v3331, %v3330
        %3348 = vst [vmem:[#allocation3 + $0x40] sm:$0xff] %v3332
        %3349 = vst [vmem:[#allocation3 + $0x88] sm:$0xff] %v3333
        %3350 = vst [vmem:[#allocation3 + $0xd0] sm:$0xff] %v3334
        %3351 = vst [vmem:[#allocation3 + $0x118] sm:$0xff] %v3335
        %3352 = vst [vmem:[#allocation3 + $0x160] sm:$0xff] %v3336
        %3353 = vst [vmem:[#allocation3 + $0x1a8] sm:$0xff] %v3337
        %3354 = vst [vmem:[#allocation3 + $0x1f0] sm:$0xff] %v3338
        %3355 = vst [vmem:[#allocation3 + $0x238] sm:$0xff] %v3339
        %3356 = vst [vmem:[#allocation3 + $0x280] sm:$0xff] %v3340
        %3357 = vst [vmem:[#allocation3 + $0x2c8] sm:$0xff] %v3341
        %3358 = vst [vmem:[#allocation3 + $0x310] sm:$0xff] %v3342
        %3359 = vst [vmem:[#allocation3 + $0x358] sm:$0xff] %v3343
        %3360 = vst [vmem:[#allocation3 + $0x3a0] sm:$0xff] %v3344
        %3361 = vst [vmem:[#allocation3 + $0x3e8] sm:$0xff] %v3345
        %3362 = vst [vmem:[#allocation3 + $0x430] sm:$0xff] %v3346
        %3363 = vst [vmem:[#allocation3 + $0x478] sm:$0xff] %v3347
        %v3364 = vld [vmem:[#allocation3] sm:$0xff]
        %v3365 = vld [vmem:[#allocation3 + $0x8] sm:$0xff]
        %v3366 = vld [vmem:[#allocation3 + $0x10] sm:$0xff]
        %v3367 = vld [vmem:[#allocation3 + $0x18] sm:$0xff]
        %v3368 = vld [vmem:[#allocation3 + $0x20] sm:$0xff]
        %v3369 = vld [vmem:[#allocation3 + $0x28] sm:$0xff]
        %v3370 = vld [vmem:[#allocation3 + $0x30] sm:$0xff]
        %v3371 = vld [vmem:[#allocation3 + $0x38] sm:$0xff]
        %v3372 = vld [vmem:[#allocation3 + $0x40] sm:$0xff]
        %v3373 = vld [vmem:[#allocation3 + $0x48] sm:$0xff]
        %v3374 = vld [vmem:[#allocation3 + $0x50] sm:$0xff]
        %v3375 = vld [vmem:[#allocation3 + $0x58] sm:$0xff]
        %v3376 = vld [vmem:[#allocation3 + $0x60] sm:$0xff]
        %v3377 = vld [vmem:[#allocation3 + $0x68] sm:$0xff]
        %v3378 = vld [vmem:[#allocation3 + $0x70] sm:$0xff]
        %v3379 = vld [vmem:[#allocation3 + $0x78] sm:$0xff]
        %v3380 = vld [vmem:[#allocation3 + $0x80] sm:$0xff]
        %v3381 = vld [vmem:[#allocation3 + $0x88] sm:$0xff]
        %v3382 = vld [vmem:[#allocation3 + $0x90] sm:$0xff]
        %v3383 = vld [vmem:[#allocation3 + $0x98] sm:$0xff]
        %v3384 = vld [vmem:[#allocation3 + $0xa0] sm:$0xff]
        %v3385 = vld [vmem:[#allocation3 + $0xa8] sm:$0xff]
        %v3386 = vld [vmem:[#allocation3 + $0xb0] sm:$0xff]
        %v3387 = vld [vmem:[#allocation3 + $0xb8] sm:$0xff]
        %v3388 = vld [vmem:[#allocation3 + $0xc0] sm:$0xff]
        %v3389 = vld [vmem:[#allocation3 + $0xc8] sm:$0xff]
        %v3390 = vld [vmem:[#allocation3 + $0xd0] sm:$0xff]
        %v3391 = vld [vmem:[#allocation3 + $0xd8] sm:$0xff]
        %v3392 = vld [vmem:[#allocation3 + $0xe0] sm:$0xff]
        %v3393 = vld [vmem:[#allocation3 + $0xe8] sm:$0xff]
        %v3394 = vld [vmem:[#allocation3 + $0xf0] sm:$0xff]
        %v3395 = vld [vmem:[#allocation3 + $0xf8] sm:$0xff]
        %v3396 = vld [vmem:[#allocation3 + $0x100] sm:$0xff]
        %v3397 = vld [vmem:[#allocation3 + $0x108] sm:$0xff]
        %v3398 = vld [vmem:[#allocation3 + $0x110] sm:$0xff]
        %v3399 = vld [vmem:[#allocation3 + $0x118] sm:$0xff]
        %v3400 = vld [vmem:[#allocation3 + $0x120] sm:$0xff]
        %v3401 = vld [vmem:[#allocation3 + $0x128] sm:$0xff]
        %v3402 = vld [vmem:[#allocation3 + $0x130] sm:$0xff]
        %v3403 = vld [vmem:[#allocation3 + $0x138] sm:$0xff]
        %v3404 = vld [vmem:[#allocation3 + $0x140] sm:$0xff]
        %v3405 = vld [vmem:[#allocation3 + $0x148] sm:$0xff]
        %v3406 = vld [vmem:[#allocation3 + $0x150] sm:$0xff]
        %v3407 = vld [vmem:[#allocation3 + $0x158] sm:$0xff]
        %v3408 = vld [vmem:[#allocation3 + $0x160] sm:$0xff]
        %v3409 = vld [vmem:[#allocation3 + $0x168] sm:$0xff]
        %v3410 = vld [vmem:[#allocation3 + $0x170] sm:$0xff]
        %v3411 = vld [vmem:[#allocation3 + $0x178] sm:$0xff]
        %v3412 = vld [vmem:[#allocation3 + $0x180] sm:$0xff]
        %v3413 = vld [vmem:[#allocation3 + $0x188] sm:$0xff]
        %v3414 = vld [vmem:[#allocation3 + $0x190] sm:$0xff]
        %v3415 = vld [vmem:[#allocation3 + $0x198] sm:$0xff]
        %v3416 = vld [vmem:[#allocation3 + $0x1a0] sm:$0xff]
        %v3417 = vld [vmem:[#allocation3 + $0x1a8] sm:$0xff]
        %v3418 = vld [vmem:[#allocation3 + $0x1b0] sm:$0xff]
        %v3419 = vld [vmem:[#allocation3 + $0x1b8] sm:$0xff]
        %v3420 = vld [vmem:[#allocation3 + $0x1c0] sm:$0xff]
        %v3421 = vld [vmem:[#allocation3 + $0x1c8] sm:$0xff]
        %v3422 = vld [vmem:[#allocation3 + $0x1d0] sm:$0xff]
        %v3423 = vld [vmem:[#allocation3 + $0x1d8] sm:$0xff]
        %v3424 = vld [vmem:[#allocation3 + $0x1e0] sm:$0xff]
        %v3425 = vld [vmem:[#allocation3 + $0x1e8] sm:$0xff]
        %v3426 = vld [vmem:[#allocation3 + $0x1f0] sm:$0xff]
        %v3427 = vld [vmem:[#allocation3 + $0x1f8] sm:$0xff]
        %v3428 = vld [vmem:[#allocation3 + $0x200] sm:$0xff]
        %v3429 = vld [vmem:[#allocation3 + $0x208] sm:$0xff]
        %v3430 = vld [vmem:[#allocation3 + $0x210] sm:$0xff]
        %v3431 = vld [vmem:[#allocation3 + $0x218] sm:$0xff]
        %v3432 = vld [vmem:[#allocation3 + $0x220] sm:$0xff]
        %v3433 = vld [vmem:[#allocation3 + $0x228] sm:$0xff]
        %v3434 = vld [vmem:[#allocation3 + $0x230] sm:$0xff]
        %v3435 = vld [vmem:[#allocation3 + $0x238] sm:$0xff]
        %v3436 = vld [vmem:[#allocation3 + $0x240] sm:$0xff]
        %v3437 = vld [vmem:[#allocation3 + $0x248] sm:$0xff]
        %v3438 = vld [vmem:[#allocation3 + $0x250] sm:$0xff]
        %v3439 = vld [vmem:[#allocation3 + $0x258] sm:$0xff]
        %v3440 = vld [vmem:[#allocation3 + $0x260] sm:$0xff]
        %v3441 = vld [vmem:[#allocation3 + $0x268] sm:$0xff]
        %v3442 = vld [vmem:[#allocation3 + $0x270] sm:$0xff]
        %v3443 = vld [vmem:[#allocation3 + $0x278] sm:$0xff]
        %v3444 = vld [vmem:[#allocation3 + $0x280] sm:$0xff]
        %v3445 = vld [vmem:[#allocation3 + $0x288] sm:$0xff]
        %v3446 = vld [vmem:[#allocation3 + $0x290] sm:$0xff]
        %v3447 = vld [vmem:[#allocation3 + $0x298] sm:$0xff]
        %v3448 = vld [vmem:[#allocation3 + $0x2a0] sm:$0xff]
        %v3449 = vld [vmem:[#allocation3 + $0x2a8] sm:$0xff]
        %v3450 = vld [vmem:[#allocation3 + $0x2b0] sm:$0xff]
        %v3451 = vld [vmem:[#allocation3 + $0x2b8] sm:$0xff]
        %v3452 = vld [vmem:[#allocation3 + $0x2c0] sm:$0xff]
        %v3453 = vld [vmem:[#allocation3 + $0x2c8] sm:$0xff]
        %v3454 = vld [vmem:[#allocation3 + $0x2d0] sm:$0xff]
        %v3455 = vld [vmem:[#allocation3 + $0x2d8] sm:$0xff]
        %v3456 = vld [vmem:[#allocation3 + $0x2e0] sm:$0xff]
        %v3457 = vld [vmem:[#allocation3 + $0x2e8] sm:$0xff]
        %v3458 = vld [vmem:[#allocation3 + $0x2f0] sm:$0xff]
        %v3459 = vld [vmem:[#allocation3 + $0x2f8] sm:$0xff]
        %v3460 = vld [vmem:[#allocation3 + $0x300] sm:$0xff]
        %v3461 = vld [vmem:[#allocation3 + $0x308] sm:$0xff]
        %v3462 = vld [vmem:[#allocation3 + $0x310] sm:$0xff]
        %v3463 = vld [vmem:[#allocation3 + $0x318] sm:$0xff]
        %v3464 = vld [vmem:[#allocation3 + $0x320] sm:$0xff]
        %v3465 = vld [vmem:[#allocation3 + $0x328] sm:$0xff]
        %v3466 = vld [vmem:[#allocation3 + $0x330] sm:$0xff]
        %v3467 = vld [vmem:[#allocation3 + $0x338] sm:$0xff]
        %v3468 = vld [vmem:[#allocation3 + $0x340] sm:$0xff]
        %v3469 = vld [vmem:[#allocation3 + $0x348] sm:$0xff]
        %v3470 = vld [vmem:[#allocation3 + $0x350] sm:$0xff]
        %v3471 = vld [vmem:[#allocation3 + $0x358] sm:$0xff]
        %v3472 = vld [vmem:[#allocation3 + $0x360] sm:$0xff]
        %v3473 = vld [vmem:[#allocation3 + $0x368] sm:$0xff]
        %v3474 = vld [vmem:[#allocation3 + $0x370] sm:$0xff]
        %v3475 = vld [vmem:[#allocation3 + $0x378] sm:$0xff]
        %v3476 = vld [vmem:[#allocation3 + $0x380] sm:$0xff]
        %v3477 = vld [vmem:[#allocation3 + $0x388] sm:$0xff]
        %v3478 = vld [vmem:[#allocation3 + $0x390] sm:$0xff]
        %v3479 = vld [vmem:[#allocation3 + $0x398] sm:$0xff]
        %v3480 = vld [vmem:[#allocation3 + $0x3a0] sm:$0xff]
        %v3481 = vld [vmem:[#allocation3 + $0x3a8] sm:$0xff]
        %v3482 = vld [vmem:[#allocation3 + $0x3b0] sm:$0xff]
        %v3483 = vld [vmem:[#allocation3 + $0x3b8] sm:$0xff]
        %v3484 = vld [vmem:[#allocation3 + $0x3c0] sm:$0xff]
        %v3485 = vld [vmem:[#allocation3 + $0x3c8] sm:$0xff]
        %v3486 = vld [vmem:[#allocation3 + $0x3d0] sm:$0xff]
        %v3487 = vld [vmem:[#allocation3 + $0x3d8] sm:$0xff]
        %v3488 = vld [vmem:[#allocation3 + $0x3e0] sm:$0xff]
        %v3489 = vld [vmem:[#allocation3 + $0x3e8] sm:$0xff]
        %v3490 = vld [vmem:[#allocation3 + $0x3f0] sm:$0xff]
        %v3491 = vld [vmem:[#allocation3 + $0x3f8] sm:$0xff]
        %v3492 = vld [vmem:[#allocation3 + $0x400] sm:$0xff]
        %v3493 = vld [vmem:[#allocation3 + $0x408] sm:$0xff]
        %v3494 = vld [vmem:[#allocation3 + $0x410] sm:$0xff]
        %v3495 = vld [vmem:[#allocation3 + $0x418] sm:$0xff]
        %v3496 = vld [vmem:[#allocation3 + $0x420] sm:$0xff]
        %v3497 = vld [vmem:[#allocation3 + $0x428] sm:$0xff]
        %v3498 = vld [vmem:[#allocation3 + $0x430] sm:$0xff]
        %v3499 = vld [vmem:[#allocation3 + $0x438] sm:$0xff]
        %v3500 = vld [vmem:[#allocation3 + $0x440] sm:$0xff]
        %v3501 = vld [vmem:[#allocation3 + $0x448] sm:$0xff]
        %v3502 = vld [vmem:[#allocation3 + $0x450] sm:$0xff]
        %v3503 = vld [vmem:[#allocation3 + $0x458] sm:$0xff]
        %v3504 = vld [vmem:[#allocation3 + $0x460] sm:$0xff]
        %v3505 = vld [vmem:[#allocation3 + $0x468] sm:$0xff]
        %v3506 = vld [vmem:[#allocation3 + $0x470] sm:$0xff]
        %v3507 = vld [vmem:[#allocation3 + $0x478] sm:$0xff]
        %v3508 = vld [vmem:[#allocation5] sm:$0xf]
        %v3509 = vld [vmem:[#allocation5 + $0x4] sm:$0xf]
        %v3510 = vld [vmem:[#allocation5 + $0x8] sm:$0xf]
        %v3511 = vld [vmem:[#allocation5 + $0xc] sm:$0xf]
        %v3512 = vld [vmem:[#allocation5 + $0x10] sm:$0xf]
        %v3513 = vld [vmem:[#allocation5 + $0x14] sm:$0xf]
        %v3514 = vld [vmem:[#allocation5 + $0x18] sm:$0xf]
        %v3515 = vld [vmem:[#allocation5 + $0x1c] sm:$0xf]
        %v3516 = vld [vmem:[#allocation5 + $0x20] sm:$0xf]
        %v3517 = vld [vmem:[#allocation5 + $0x24] sm:$0xf]
        %v3518 = vld [vmem:[#allocation5 + $0x28] sm:$0xf]
        %v3519 = vld [vmem:[#allocation5 + $0x2c] sm:$0xf]
        %v3520 = vld [vmem:[#allocation5 + $0x30] sm:$0xf]
        %v3521 = vld [vmem:[#allocation5 + $0x34] sm:$0xf]
        %v3522 = vld [vmem:[#allocation5 + $0x38] sm:$0xf]
        %v3523 = vld [vmem:[#allocation5 + $0x3c] sm:$0xf]
        %v3524 = vld [vmem:[#allocation5 + $0x40] sm:$0xf]
        %v3525 = vld [vmem:[#allocation5 + $0x44] sm:$0xf]
        %v3526 = vld [vmem:[#allocation5 + $0x48] sm:$0xf]
        %v3527 = vld [vmem:[#allocation5 + $0x4c] sm:$0xf]
        %v3528 = vld [vmem:[#allocation5 + $0x50] sm:$0xf]
        %v3529 = vld [vmem:[#allocation5 + $0x54] sm:$0xf]
        %v3530 = vld [vmem:[#allocation5 + $0x58] sm:$0xf]
        %v3531 = vld [vmem:[#allocation5 + $0x5c] sm:$0xf]
        %v3532 = vld [vmem:[#allocation5 + $0x60] sm:$0xf]
        %v3533 = vld [vmem:[#allocation5 + $0x64] sm:$0xf]
        %v3534 = vld [vmem:[#allocation5 + $0x68] sm:$0xf]
        %v3535 = vld [vmem:[#allocation5 + $0x6c] sm:$0xf]
        %v3536 = vld [vmem:[#allocation5 + $0x70] sm:$0xf]
        %v3537 = vld [vmem:[#allocation5 + $0x74] sm:$0xf]
        %v3538 = vld [vmem:[#allocation5 + $0x78] sm:$0xf]
        %v3539 = vld [vmem:[#allocation5 + $0x7c] sm:$0xf]
        %v3540 = vld [vmem:[#allocation5 + $0x80] sm:$0xf]
        %v3541 = vld [vmem:[#allocation5 + $0x84] sm:$0xf]
        %v3542 = vld [vmem:[#allocation5 + $0x88] sm:$0xf]
        %v3543 = vld [vmem:[#allocation5 + $0x8c] sm:$0xf]
        %v3544 = vld [vmem:[#allocation5 + $0x90] sm:$0xf]
        %v3545 = vld [vmem:[#allocation5 + $0x94] sm:$0xf]
        %v3546 = vld [vmem:[#allocation5 + $0x98] sm:$0xf]
        %v3547 = vld [vmem:[#allocation5 + $0x9c] sm:$0xf]
        %v3548 = vld [vmem:[#allocation5 + $0xa0] sm:$0xf]
        %v3549 = vld [vmem:[#allocation5 + $0xa4] sm:$0xf]
        %v3550 = vld [vmem:[#allocation5 + $0xa8] sm:$0xf]
        %v3551 = vld [vmem:[#allocation5 + $0xac] sm:$0xf]
        %v3552 = vld [vmem:[#allocation5 + $0xb0] sm:$0xf]
        %v3553 = vld [vmem:[#allocation5 + $0xb4] sm:$0xf]
        %v3554 = vld [vmem:[#allocation5 + $0xb8] sm:$0xf]
        %v3555 = vld [vmem:[#allocation5 + $0xbc] sm:$0xf]
        %v3556 = vld [vmem:[#allocation5 + $0xc0] sm:$0xf]
        %v3557 = vld [vmem:[#allocation5 + $0xc4] sm:$0xf]
        %v3558 = vld [vmem:[#allocation5 + $0xc8] sm:$0xf]
        %v3559 = vld [vmem:[#allocation5 + $0xcc] sm:$0xf]
        %v3560 = vld [vmem:[#allocation5 + $0xd0] sm:$0xf]
        %v3561 = vld [vmem:[#allocation5 + $0xd4] sm:$0xf]
        %v3562 = vld [vmem:[#allocation5 + $0xd8] sm:$0xf]
        %v3563 = vld [vmem:[#allocation5 + $0xdc] sm:$0xf]
        %v3564 = vld [vmem:[#allocation5 + $0xe0] sm:$0xf]
        %v3565 = vld [vmem:[#allocation5 + $0xe4] sm:$0xf]
        %v3566 = vld [vmem:[#allocation5 + $0xe8] sm:$0xf]
        %v3567 = vld [vmem:[#allocation5 + $0xec] sm:$0xf]
        %v3568 = vld [vmem:[#allocation5 + $0xf0] sm:$0xf]
        %v3569 = vld [vmem:[#allocation5 + $0xf4] sm:$0xf]
        %v3570 = vld [vmem:[#allocation5 + $0xf8] sm:$0xf]
        %v3571 = vld [vmem:[#allocation5 + $0xfc] sm:$0xf]
        %v3572 = vld [vmem:[#allocation5 + $0x100] sm:$0xf]
        %v3573 = vld [vmem:[#allocation5 + $0x104] sm:$0xf]
        %v3574 = vld [vmem:[#allocation5 + $0x108] sm:$0xf]
        %v3575 = vld [vmem:[#allocation5 + $0x10c] sm:$0xf]
        %v3576 = vld [vmem:[#allocation5 + $0x110] sm:$0xf]
        %v3577 = vld [vmem:[#allocation5 + $0x114] sm:$0xf]
        %v3578 = vld [vmem:[#allocation5 + $0x118] sm:$0xf]
        %v3579 = vld [vmem:[#allocation5 + $0x11c] sm:$0xf]
        %v3580 = vld [vmem:[#allocation5 + $0x120] sm:$0xf]
        %v3581 = vld [vmem:[#allocation5 + $0x124] sm:$0xf]
        %v3582 = vld [vmem:[#allocation5 + $0x128] sm:$0xf]
        %v3583 = vld [vmem:[#allocation5 + $0x12c] sm:$0xf]
        %v3584 = vld [vmem:[#allocation5 + $0x130] sm:$0xf]
        %v3585 = vld [vmem:[#allocation5 + $0x134] sm:$0xf]
        %v3586 = vld [vmem:[#allocation5 + $0x138] sm:$0xf]
        %v3587 = vld [vmem:[#allocation5 + $0x13c] sm:$0xf]
        %v3588 = vld [vmem:[#allocation5 + $0x140] sm:$0xf]
        %v3589 = vld [vmem:[#allocation5 + $0x144] sm:$0xf]
        %v3590 = vld [vmem:[#allocation5 + $0x148] sm:$0xf]
        %v3591 = vld [vmem:[#allocation5 + $0x14c] sm:$0xf]
        %v3592 = vld [vmem:[#allocation5 + $0x150] sm:$0xf]
        %v3593 = vld [vmem:[#allocation5 + $0x154] sm:$0xf]
        %v3594 = vld [vmem:[#allocation5 + $0x158] sm:$0xf]
        %v3595 = vld [vmem:[#allocation5 + $0x15c] sm:$0xf]
        %v3596 = vld [vmem:[#allocation5 + $0x160] sm:$0xf]
        %v3597 = vld [vmem:[#allocation5 + $0x164] sm:$0xf]
        %v3598 = vld [vmem:[#allocation5 + $0x168] sm:$0xf]
        %v3599 = vld [vmem:[#allocation5 + $0x16c] sm:$0xf]
        %v3600 = vld [vmem:[#allocation5 + $0x170] sm:$0xf]
        %v3601 = vld [vmem:[#allocation5 + $0x174] sm:$0xf]
        %v3602 = vld [vmem:[#allocation5 + $0x178] sm:$0xf]
        %v3603 = vld [vmem:[#allocation5 + $0x17c] sm:$0xf]
        %v3604 = vld [vmem:[#allocation5 + $0x180] sm:$0xf]
        %v3605 = vld [vmem:[#allocation5 + $0x184] sm:$0xf]
        %v3606 = vld [vmem:[#allocation5 + $0x188] sm:$0xf]
        %v3607 = vld [vmem:[#allocation5 + $0x18c] sm:$0xf]
        %v3608 = vld [vmem:[#allocation5 + $0x190] sm:$0xf]
        %v3609 = vld [vmem:[#allocation5 + $0x194] sm:$0xf]
        %v3610 = vld [vmem:[#allocation5 + $0x198] sm:$0xf]
        %v3611 = vld [vmem:[#allocation5 + $0x19c] sm:$0xf]
        %v3612 = vld [vmem:[#allocation5 + $0x1a0] sm:$0xf]
        %v3613 = vld [vmem:[#allocation5 + $0x1a4] sm:$0xf]
        %v3614 = vld [vmem:[#allocation5 + $0x1a8] sm:$0xf]
        %v3615 = vld [vmem:[#allocation5 + $0x1ac] sm:$0xf]
        %v3616 = vld [vmem:[#allocation5 + $0x1b0] sm:$0xf]
        %v3617 = vld [vmem:[#allocation5 + $0x1b4] sm:$0xf]
        %v3618 = vld [vmem:[#allocation5 + $0x1b8] sm:$0xf]
        %v3619 = vld [vmem:[#allocation5 + $0x1bc] sm:$0xf]
        %v3620 = vld [vmem:[#allocation5 + $0x1c0] sm:$0xf]
        %v3621 = vld [vmem:[#allocation5 + $0x1c4] sm:$0xf]
        %v3622 = vld [vmem:[#allocation5 + $0x1c8] sm:$0xf]
        %v3623 = vld [vmem:[#allocation5 + $0x1cc] sm:$0xf]
        %v3624 = vld [vmem:[#allocation5 + $0x1d0] sm:$0xf]
        %v3625 = vld [vmem:[#allocation5 + $0x1d4] sm:$0xf]
        %v3626 = vld [vmem:[#allocation5 + $0x1d8] sm:$0xf]
        %v3627 = vld [vmem:[#allocation5 + $0x1dc] sm:$0xf]
        %v3628 = vld [vmem:[#allocation5 + $0x1e0] sm:$0xf]
        %v3629 = vld [vmem:[#allocation5 + $0x1e4] sm:$0xf]
        %v3630 = vld [vmem:[#allocation5 + $0x1e8] sm:$0xf]
        %v3631 = vld [vmem:[#allocation5 + $0x1ec] sm:$0xf]
        %v3632 = vld [vmem:[#allocation5 + $0x1f0] sm:$0xf]
        %v3633 = vld [vmem:[#allocation5 + $0x1f4] sm:$0xf]
        %v3634 = vld [vmem:[#allocation5 + $0x1f8] sm:$0xf]
        %v3635 = vld [vmem:[#allocation5 + $0x1fc] sm:$0xf]
        %v3636 = vld [vmem:[#allocation5 + $0x200] sm:$0xf]
        %v3637 = vld [vmem:[#allocation5 + $0x204] sm:$0xf]
        %v3638 = vld [vmem:[#allocation5 + $0x208] sm:$0xf]
        %v3639 = vld [vmem:[#allocation5 + $0x20c] sm:$0xf]
        %v3640 = vld [vmem:[#allocation5 + $0x210] sm:$0xf]
        %v3641 = vld [vmem:[#allocation5 + $0x214] sm:$0xf]
        %v3642 = vld [vmem:[#allocation5 + $0x218] sm:$0xf]
        %v3643 = vld [vmem:[#allocation5 + $0x21c] sm:$0xf]
        %v3644 = vld [vmem:[#allocation5 + $0x220] sm:$0xf]
        %v3645 = vld [vmem:[#allocation5 + $0x224] sm:$0xf]
        %v3646 = vld [vmem:[#allocation5 + $0x228] sm:$0xf]
        %v3647 = vld [vmem:[#allocation5 + $0x22c] sm:$0xf]
        %v3648 = vld [vmem:[#allocation5 + $0x230] sm:$0xf]
        %v3649 = vld [vmem:[#allocation5 + $0x234] sm:$0xf]
        %v3650 = vld [vmem:[#allocation5 + $0x238] sm:$0xf]
        %v3651 = vld [vmem:[#allocation5 + $0x23c] sm:$0xf]
        %v3796 = vunpack.c.l.b16 %v3508
        %v3797 = vunpack.c.l.b16 %v3509
        %v3798 = vunpack.c.l.b16 %v3510
        %v3799 = vunpack.c.l.b16 %v3511
        %v3800 = vunpack.c.l.b16 %v3512
        %v3801 = vunpack.c.l.b16 %v3513
        %v3802 = vunpack.c.l.b16 %v3514
        %v3803 = vunpack.c.l.b16 %v3515
        %v3804 = vunpack.c.l.b16 %v3516
        %v3805 = vunpack.c.l.b16 %v3517
        %v3806 = vunpack.c.l.b16 %v3518
        %v3807 = vunpack.c.l.b16 %v3519
        %v3808 = vunpack.c.l.b16 %v3520
        %v3809 = vunpack.c.l.b16 %v3521
        %v3810 = vunpack.c.l.b16 %v3522
        %v3811 = vunpack.c.l.b16 %v3523
        %v3812 = vunpack.c.l.b16 %v3524
        %v3813 = vunpack.c.l.b16 %v3525
        %v3814 = vunpack.c.l.b16 %v3526
        %v3815 = vunpack.c.l.b16 %v3527
        %v3816 = vunpack.c.l.b16 %v3528
        %v3817 = vunpack.c.l.b16 %v3529
        %v3818 = vunpack.c.l.b16 %v3530
        %v3819 = vunpack.c.l.b16 %v3531
        %v3820 = vunpack.c.l.b16 %v3532
        %v3821 = vunpack.c.l.b16 %v3533
        %v3822 = vunpack.c.l.b16 %v3534
        %v3823 = vunpack.c.l.b16 %v3535
        %v3824 = vunpack.c.l.b16 %v3536
        %v3825 = vunpack.c.l.b16 %v3537
        %v3826 = vunpack.c.l.b16 %v3538
        %v3827 = vunpack.c.l.b16 %v3539
        %v3828 = vunpack.c.l.b16 %v3540
        %v3829 = vunpack.c.l.b16 %v3541
        %v3830 = vunpack.c.l.b16 %v3542
        %v3831 = vunpack.c.l.b16 %v3543
        %v3832 = vunpack.c.l.b16 %v3544
        %v3833 = vunpack.c.l.b16 %v3545
        %v3834 = vunpack.c.l.b16 %v3546
        %v3835 = vunpack.c.l.b16 %v3547
        %v3836 = vunpack.c.l.b16 %v3548
        %v3837 = vunpack.c.l.b16 %v3549
        %v3838 = vunpack.c.l.b16 %v3550
        %v3839 = vunpack.c.l.b16 %v3551
        %v3840 = vunpack.c.l.b16 %v3552
        %v3841 = vunpack.c.l.b16 %v3553
        %v3842 = vunpack.c.l.b16 %v3554
        %v3843 = vunpack.c.l.b16 %v3555
        %v3844 = vunpack.c.l.b16 %v3556
        %v3845 = vunpack.c.l.b16 %v3557
        %v3846 = vunpack.c.l.b16 %v3558
        %v3847 = vunpack.c.l.b16 %v3559
        %v3848 = vunpack.c.l.b16 %v3560
        %v3849 = vunpack.c.l.b16 %v3561
        %v3850 = vunpack.c.l.b16 %v3562
        %v3851 = vunpack.c.l.b16 %v3563
        %v3852 = vunpack.c.l.b16 %v3564
        %v3853 = vunpack.c.l.b16 %v3565
        %v3854 = vunpack.c.l.b16 %v3566
        %v3855 = vunpack.c.l.b16 %v3567
        %v3856 = vunpack.c.l.b16 %v3568
        %v3857 = vunpack.c.l.b16 %v3569
        %v3858 = vunpack.c.l.b16 %v3570
        %v3859 = vunpack.c.l.b16 %v3571
        %v3860 = vunpack.c.l.b16 %v3572
        %v3861 = vunpack.c.l.b16 %v3573
        %v3862 = vunpack.c.l.b16 %v3574
        %v3863 = vunpack.c.l.b16 %v3575
        %v3864 = vunpack.c.l.b16 %v3576
        %v3865 = vunpack.c.l.b16 %v3577
        %v3866 = vunpack.c.l.b16 %v3578
        %v3867 = vunpack.c.l.b16 %v3579
        %v3868 = vunpack.c.l.b16 %v3580
        %v3869 = vunpack.c.l.b16 %v3581
        %v3870 = vunpack.c.l.b16 %v3582
        %v3871 = vunpack.c.l.b16 %v3583
        %v3872 = vunpack.c.l.b16 %v3584
        %v3873 = vunpack.c.l.b16 %v3585
        %v3874 = vunpack.c.l.b16 %v3586
        %v3875 = vunpack.c.l.b16 %v3587
        %v3876 = vunpack.c.l.b16 %v3588
        %v3877 = vunpack.c.l.b16 %v3589
        %v3878 = vunpack.c.l.b16 %v3590
        %v3879 = vunpack.c.l.b16 %v3591
        %v3880 = vunpack.c.l.b16 %v3592
        %v3881 = vunpack.c.l.b16 %v3593
        %v3882 = vunpack.c.l.b16 %v3594
        %v3883 = vunpack.c.l.b16 %v3595
        %v3884 = vunpack.c.l.b16 %v3596
        %v3885 = vunpack.c.l.b16 %v3597
        %v3886 = vunpack.c.l.b16 %v3598
        %v3887 = vunpack.c.l.b16 %v3599
        %v3888 = vunpack.c.l.b16 %v3600
        %v3889 = vunpack.c.l.b16 %v3601
        %v3890 = vunpack.c.l.b16 %v3602
        %v3891 = vunpack.c.l.b16 %v3603
        %v3892 = vunpack.c.l.b16 %v3604
        %v3893 = vunpack.c.l.b16 %v3605
        %v3894 = vunpack.c.l.b16 %v3606
        %v3895 = vunpack.c.l.b16 %v3607
        %v3896 = vunpack.c.l.b16 %v3608
        %v3897 = vunpack.c.l.b16 %v3609
        %v3898 = vunpack.c.l.b16 %v3610
        %v3899 = vunpack.c.l.b16 %v3611
        %v3900 = vunpack.c.l.b16 %v3612
        %v3901 = vunpack.c.l.b16 %v3613
        %v3902 = vunpack.c.l.b16 %v3614
        %v3903 = vunpack.c.l.b16 %v3615
        %v3904 = vunpack.c.l.b16 %v3616
        %v3905 = vunpack.c.l.b16 %v3617
        %v3906 = vunpack.c.l.b16 %v3618
        %v3907 = vunpack.c.l.b16 %v3619
        %v3908 = vunpack.c.l.b16 %v3620
        %v3909 = vunpack.c.l.b16 %v3621
        %v3910 = vunpack.c.l.b16 %v3622
        %v3911 = vunpack.c.l.b16 %v3623
        %v3912 = vunpack.c.l.b16 %v3624
        %v3913 = vunpack.c.l.b16 %v3625
        %v3914 = vunpack.c.l.b16 %v3626
        %v3915 = vunpack.c.l.b16 %v3627
        %v3916 = vunpack.c.l.b16 %v3628
        %v3917 = vunpack.c.l.b16 %v3629
        %v3918 = vunpack.c.l.b16 %v3630
        %v3919 = vunpack.c.l.b16 %v3631
        %v3920 = vunpack.c.l.b16 %v3632
        %v3921 = vunpack.c.l.b16 %v3633
        %v3922 = vunpack.c.l.b16 %v3634
        %v3923 = vunpack.c.l.b16 %v3635
        %v3924 = vunpack.c.l.b16 %v3636
        %v3925 = vunpack.c.l.b16 %v3637
        %v3926 = vunpack.c.l.b16 %v3638
        %v3927 = vunpack.c.l.b16 %v3639
        %v3928 = vunpack.c.l.b16 %v3640
        %v3929 = vunpack.c.l.b16 %v3641
        %v3930 = vunpack.c.l.b16 %v3642
        %v3931 = vunpack.c.l.b16 %v3643
        %v3932 = vunpack.c.l.b16 %v3644
        %v3933 = vunpack.c.l.b16 %v3645
        %v3934 = vunpack.c.l.b16 %v3646
        %v3935 = vunpack.c.l.b16 %v3647
        %v3936 = vunpack.c.l.b16 %v3648
        %v3937 = vunpack.c.l.b16 %v3649
        %v3938 = vunpack.c.l.b16 %v3650
        %v3939 = vunpack.c.l.b16 %v3651
        %v3940 = vpack.c.b16 %v3797, %v3796
        %v3941 = vpack.c.b16 %v3799, %v3798
        %v3942 = vpack.c.b16 %v3801, %v3800
        %v3943 = vpack.c.b16 %v3803, %v3802
        %v3944 = vpack.c.b16 %v3805, %v3804
        %v3945 = vpack.c.b16 %v3807, %v3806
        %v3946 = vpack.c.b16 %v3809, %v3808
        %v3947 = vpack.c.b16 %v3811, %v3810
        %v3948 = vpack.c.b16 %v3813, %v3812
        %v3949 = vpack.c.b16 %v3815, %v3814
        %v3950 = vpack.c.b16 %v3817, %v3816
        %v3951 = vpack.c.b16 %v3819, %v3818
        %v3952 = vpack.c.b16 %v3821, %v3820
        %v3953 = vpack.c.b16 %v3823, %v3822
        %v3954 = vpack.c.b16 %v3825, %v3824
        %v3955 = vpack.c.b16 %v3827, %v3826
        %v3956 = vpack.c.b16 %v3829, %v3828
        %v3957 = vpack.c.b16 %v3831, %v3830
        %v3958 = vpack.c.b16 %v3833, %v3832
        %v3959 = vpack.c.b16 %v3835, %v3834
        %v3960 = vpack.c.b16 %v3837, %v3836
        %v3961 = vpack.c.b16 %v3839, %v3838
        %v3962 = vpack.c.b16 %v3841, %v3840
        %v3963 = vpack.c.b16 %v3843, %v3842
        %v3964 = vpack.c.b16 %v3845, %v3844
        %v3965 = vpack.c.b16 %v3847, %v3846
        %v3966 = vpack.c.b16 %v3849, %v3848
        %v3967 = vpack.c.b16 %v3851, %v3850
        %v3968 = vpack.c.b16 %v3853, %v3852
        %v3969 = vpack.c.b16 %v3855, %v3854
        %v3970 = vpack.c.b16 %v3857, %v3856
        %v3971 = vpack.c.b16 %v3859, %v3858
        %v3972 = vpack.c.b16 %v3861, %v3860
        %v3973 = vpack.c.b16 %v3863, %v3862
        %v3974 = vpack.c.b16 %v3865, %v3864
        %v3975 = vpack.c.b16 %v3867, %v3866
        %v3976 = vpack.c.b16 %v3869, %v3868
        %v3977 = vpack.c.b16 %v3871, %v3870
        %v3978 = vpack.c.b16 %v3873, %v3872
        %v3979 = vpack.c.b16 %v3875, %v3874
        %v3980 = vpack.c.b16 %v3877, %v3876
        %v3981 = vpack.c.b16 %v3879, %v3878
        %v3982 = vpack.c.b16 %v3881, %v3880
        %v3983 = vpack.c.b16 %v3883, %v3882
        %v3984 = vpack.c.b16 %v3885, %v3884
        %v3985 = vpack.c.b16 %v3887, %v3886
        %v3986 = vpack.c.b16 %v3889, %v3888
        %v3987 = vpack.c.b16 %v3891, %v3890
        %v3988 = vpack.c.b16 %v3893, %v3892
        %v3989 = vpack.c.b16 %v3895, %v3894
        %v3990 = vpack.c.b16 %v3897, %v3896
        %v3991 = vpack.c.b16 %v3899, %v3898
        %v3992 = vpack.c.b16 %v3901, %v3900
        %v3993 = vpack.c.b16 %v3903, %v3902
        %v3994 = vpack.c.b16 %v3905, %v3904
        %v3995 = vpack.c.b16 %v3907, %v3906
        %v3996 = vpack.c.b16 %v3909, %v3908
        %v3997 = vpack.c.b16 %v3911, %v3910
        %v3998 = vpack.c.b16 %v3913, %v3912
        %v3999 = vpack.c.b16 %v3915, %v3914
        %v4000 = vpack.c.b16 %v3917, %v3916
        %v4001 = vpack.c.b16 %v3919, %v3918
        %v4002 = vpack.c.b16 %v3921, %v3920
        %v4003 = vpack.c.b16 %v3923, %v3922
        %v4004 = vpack.c.b16 %v3925, %v3924
        %v4005 = vpack.c.b16 %v3927, %v3926
        %v4006 = vpack.c.b16 %v3929, %v3928
        %v4007 = vpack.c.b16 %v3931, %v3930
        %v4008 = vpack.c.b16 %v3933, %v3932
        %v4009 = vpack.c.b16 %v3935, %v3934
        %v4010 = vpack.c.b16 %v3937, %v3936
        %v4011 = vpack.c.b16 %v3939, %v3938
        %4084 = vmatprep.subr.bf16.mxu0 0
        %4085 = vmatpush1.bf16.msra.mxu0 %v3940
        %4086 = vmatprep.subr.bf16.mxu0 0
        %4087 = vmatpush1.bf16.msra.mxu0 %v3941
        %4088 = vmatprep.subr.bf16.mxu0 0
        %4089 = vmatpush1.bf16.msra.mxu0 %v3942
        %4090 = vmatprep.subr.bf16.mxu0 0
        %4091 = vmatpush1.bf16.msra.mxu0 %v3943
        %4092 = vmatprep.subr.bf16.mxu0 0
        %4093 = vmatpush1.bf16.msra.mxu0 %v3944
        %4094 = vmatprep.subr.bf16.mxu0 0
        %4095 = vmatpush1.bf16.msra.mxu0 %v3945
        %4096 = vmatprep.subr.bf16.mxu0 0
        %4097 = vmatpush1.bf16.msra.mxu0 %v3946
        %4098 = vmatprep.subr.bf16.mxu0 0
        %4099 = vmatpush1.bf16.msra.mxu0 %v3947
        %4100 = vmatprep.subr.bf16.mxu0 0
        %4101 = vmatpush1.bf16.msra.mxu0 %v3948
        %4102 = vmatprep.subr.bf16.mxu0 0
        %4103 = vmatpush1.bf16.msra.mxu0 %v3949
        %4104 = vmatprep.subr.bf16.mxu0 0
        %4105 = vmatpush1.bf16.msra.mxu0 %v3950
        %4106 = vmatprep.subr.bf16.mxu0 0
        %4107 = vmatpush1.bf16.msra.mxu0 %v3951
        %4108 = vmatprep.subr.bf16.mxu0 0
        %4109 = vmatpush1.bf16.msra.mxu0 %v3952
        %4110 = vmatprep.subr.bf16.mxu0 0
        %4111 = vmatpush1.bf16.msra.mxu0 %v3953
        %4112 = vmatprep.subr.bf16.mxu0 0
        %4113 = vmatpush1.bf16.msra.mxu0 %v3954
        %4114 = vmatprep.subr.bf16.mxu0 0
        %4115 = vmatpush1.bf16.msra.mxu0 %v3955
        %4116 = vmatprep.mubr.bf16.mxu0 %v3365
        %4117 = vmatmul.mubr.bf16.gmra.mrb[0].mxu0 %v3364
        %v4118 = vpop.f32.mrb[0].mxu0
        %v4119 = vadd.f32 0.0, %v4118
        %v4120 = vpop.f32.mrb[0].mxu0
        %v4121 = vpop.f32.mrb[0].mxu0
        %v4122 = vadd.f32 0.0, %v4121
        %v4123 = vpop.f32.mrb[0].mxu0
        %4124 = vmatprep.mubr.bf16.mxu0 %v3374
        %4125 = vmatmul.mubr.bf16.gmra.mrb[0].mxu0 %v3373
        %v4126 = vpop.f32.mrb[0].mxu0
        %v4127 = vadd.f32 0.0, %v4126
        %v4128 = vpop.f32.mrb[0].mxu0
        %v4129 = vpop.f32.mrb[0].mxu0
        %v4130 = vadd.f32 0.0, %v4129
        %v4131 = vpop.f32.mrb[0].mxu0
        %4132 = vmatprep.mubr.bf16.mxu0 %v3383
        %4133 = vmatmul.mubr.bf16.gmra.mrb[0].mxu0 %v3382
        %v4134 = vpop.f32.mrb[0].mxu0
        %v4135 = vadd.f32 0.0, %v4134
        %v4136 = vpop.f32.mrb[0].mxu0
        %v4137 = vpop.f32.mrb[0].mxu0
        %v4138 = vadd.f32 0.0, %v4137
        %v4139 = vpop.f32.mrb[0].mxu0
        %4140 = vmatprep.mubr.bf16.mxu0 %v3392
        %4141 = vmatmul.mubr.bf16.gmra.mrb[0].mxu0 %v3391
        %v4142 = vpop.f32.mrb[0].mxu0
        %v4143 = vadd.f32 0.0, %v4142
        %v4144 = vpop.f32.mrb[0].mxu0
        %v4145 = vpop.f32.mrb[0].mxu0
        %v4146 = vadd.f32 0.0, %v4145
        %v4147 = vpop.f32.mrb[0].mxu0
        %4148 = vmatprep.mubr.bf16.mxu0 %v3401
        %4149 = vmatmul.mubr.bf16.gmra.mrb[0].mxu0 %v3400
        %v4150 = vpop.f32.mrb[0].mxu0
        %v4151 = vadd.f32 0.0, %v4150
        %v4152 = vpop.f32.mrb[0].mxu0
        %v4153 = vpop.f32.mrb[0].mxu0
        %v4154 = vadd.f32 0.0, %v4153
        %v4155 = vpop.f32.mrb[0].mxu0
        %4156 = vmatprep.mubr.bf16.mxu0 %v3410
        %4157 = vmatmul.mubr.bf16.gmra.mrb[0].mxu0 %v3409
        %v4158 = vpop.f32.mrb[0].mxu0
        %v4159 = vadd.f32 0.0, %v4158
        %v4160 = vpop.f32.mrb[0].mxu0
        %v4161 = vpop.f32.mrb[0].mxu0
        %v4162 = vadd.f32 0.0, %v4161
        %v4163 = vpop.f32.mrb[0].mxu0
        %4164 = vmatprep.mubr.bf16.mxu0 %v3419
        %4165 = vmatmul.mubr.bf16.gmra.mrb[0].mxu0 %v3418
        %v4166 = vpop.f32.mrb[0].mxu0
        %v4167 = vadd.f32 0.0, %v4166
        %v4168 = vpop.f32.mrb[0].mxu0
        %v4169 = vpop.f32.mrb[0].mxu0
        %v4170 = vadd.f32 0.0, %v4169
        %v4171 = vpop.f32.mrb[0].mxu0
        %4172 = vmatprep.mubr.bf16.mxu0 %v3428
        %4173 = vmatmul.mubr.bf16.gmra.mrb[0].mxu0 %v3427
        %v4174 = vpop.f32.mrb[0].mxu0
        %v4175 = vadd.f32 0.0, %v4174
        %v4176 = vpop.f32.mrb[0].mxu0
        %v4177 = vpop.f32.mrb[0].mxu0
        %v4178 = vadd.f32 0.0, %v4177
        %v4179 = vpop.f32.mrb[0].mxu0
        %4180 = vmatprep.mubr.bf16.mxu0 %v3437
        %4181 = vmatmul.mubr.bf16.gmra.mrb[0].mxu0 %v3436
        %v4182 = vpop.f32.mrb[0].mxu0
        %v4183 = vadd.f32 0.0, %v4182
        %v4184 = vpop.f32.mrb[0].mxu0
        %v4185 = vpop.f32.mrb[0].mxu0
        %v4186 = vadd.f32 0.0, %v4185
        %v4187 = vpop.f32.mrb[0].mxu0
        %4188 = vmatprep.mubr.bf16.mxu0 %v3446
        %4189 = vmatmul.mubr.bf16.gmra.mrb[0].mxu0 %v3445
        %v4190 = vpop.f32.mrb[0].mxu0
        %v4191 = vadd.f32 0.0, %v4190
        %v4192 = vpop.f32.mrb[0].mxu0
        %v4193 = vpop.f32.mrb[0].mxu0
        %v4194 = vadd.f32 0.0, %v4193
        %v4195 = vpop.f32.mrb[0].mxu0
        %4196 = vmatprep.mubr.bf16.mxu0 %v3455
        %4197 = vmatmul.mubr.bf16.gmra.mrb[0].mxu0 %v3454
        %v4198 = vpop.f32.mrb[0].mxu0
        %v4199 = vadd.f32 0.0, %v4198
        %v4200 = vpop.f32.mrb[0].mxu0
        %v4201 = vpop.f32.mrb[0].mxu0
        %v4202 = vadd.f32 0.0, %v4201
        %v4203 = vpop.f32.mrb[0].mxu0
        %4204 = vmatprep.mubr.bf16.mxu0 %v3464
        %4205 = vmatmul.mubr.bf16.gmra.mrb[0].mxu0 %v3463
        %v4206 = vpop.f32.mrb[0].mxu0
        %v4207 = vadd.f32 0.0, %v4206
        %v4208 = vpop.f32.mrb[0].mxu0
        %v4209 = vpop.f32.mrb[0].mxu0
        %v4210 = vadd.f32 0.0, %v4209
        %v4211 = vpop.f32.mrb[0].mxu0
        %4212 = vmatprep.mubr.bf16.mxu0 %v3473
        %4213 = vmatmul.mubr.bf16.gmra.mrb[0].mxu0 %v3472
        %v4214 = vpop.f32.mrb[0].mxu0
        %v4215 = vadd.f32 0.0, %v4214
        %v4216 = vpop.f32.mrb[0].mxu0
        %v4217 = vpop.f32.mrb[0].mxu0
        %v4218 = vadd.f32 0.0, %v4217
        %v4219 = vpop.f32.mrb[0].mxu0
        %4220 = vmatprep.mubr.bf16.mxu0 %v3482
        %4221 = vmatmul.mubr.bf16.gmra.mrb[0].mxu0 %v3481
        %v4222 = vpop.f32.mrb[0].mxu0
        %v4223 = vadd.f32 0.0, %v4222
        %v4224 = vpop.f32.mrb[0].mxu0
        %v4225 = vpop.f32.mrb[0].mxu0
        %v4226 = vadd.f32 0.0, %v4225
        %v4227 = vpop.f32.mrb[0].mxu0
        %4228 = vmatprep.mubr.bf16.mxu0 %v3491
        %4229 = vmatmul.mubr.bf16.gmra.mrb[0].mxu0 %v3490
        %v4230 = vpop.f32.mrb[0].mxu0
        %v4231 = vadd.f32 0.0, %v4230
        %v4232 = vpop.f32.mrb[0].mxu0
        %v4233 = vpop.f32.mrb[0].mxu0
        %v4234 = vadd.f32 0.0, %v4233
        %v4235 = vpop.f32.mrb[0].mxu0
        %4236 = vmatprep.mubr.bf16.mxu0 %v3500
        %4237 = vmatmul.mubr.bf16.gmra.mrb[0].mxu0 %v3499
        %v4238 = vpop.f32.mrb[0].mxu0
        %v4239 = vadd.f32 0.0, %v4238
        %v4240 = vpop.f32.mrb[0].mxu0
        %v4241 = vpop.f32.mrb[0].mxu0
        %v4242 = vadd.f32 0.0, %v4241
        %v4243 = vpop.f32.mrb[0].mxu0
        %4244 = vdwg.mxu0
        %4245 = vmatprep.subr.bf16.mxu0 0
        %4246 = vmatpush1.bf16.msra.mxu0 %v3956
        %4247 = vmatprep.subr.bf16.mxu0 0
        %4248 = vmatpush1.bf16.msra.mxu0 %v3957
        %4249 = vmatprep.subr.bf16.mxu0 0
        %4250 = vmatpush1.bf16.msra.mxu0 %v3958
        %4251 = vmatprep.subr.bf16.mxu0 0
        %4252 = vmatpush1.bf16.msra.mxu0 %v3959
        %4253 = vmatprep.subr.bf16.mxu0 0
        %4254 = vmatpush1.bf16.msra.mxu0 %v3960
        %4255 = vmatprep.subr.bf16.mxu0 0
        %4256 = vmatpush1.bf16.msra.mxu0 %v3961
        %4257 = vmatprep.subr.bf16.mxu0 0
        %4258 = vmatpush1.bf16.msra.mxu0 %v3962
        %4259 = vmatprep.subr.bf16.mxu0 0
        %4260 = vmatpush1.bf16.msra.mxu0 %v3963
        %4261 = vmatprep.subr.bf16.mxu0 0
        %4262 = vmatpush1.bf16.msra.mxu0 %v3964
        %4263 = vmatprep.subr.bf16.mxu0 0
        %4264 = vmatpush1.bf16.msra.mxu0 %v3965
        %4265 = vmatprep.subr.bf16.mxu0 0
        %4266 = vmatpush1.bf16.msra.mxu0 %v3966
        %4267 = vmatprep.subr.bf16.mxu0 0
        %4268 = vmatpush1.bf16.msra.mxu0 %v3967
        %4269 = vmatprep.subr.bf16.mxu0 0
        %4270 = vmatpush1.bf16.msra.mxu0 %v3968
        %4271 = vmatprep.subr.bf16.mxu0 0
        %4272 = vmatpush1.bf16.msra.mxu0 %v3969
        %4273 = vmatprep.subr.bf16.mxu0 0
        %4274 = vmatpush1.bf16.msra.mxu0 %v3970
        %4275 = vmatprep.subr.bf16.mxu0 0
        %4276 = vmatpush1.bf16.msra.mxu0 %v3971
        %4277 = vmatprep.mubr.bf16.mxu0 %v3367
        %4278 = vmatmul.mubr.bf16.gmra.mrb[0].mxu0 %v3366
        %v4279 = vpop.f32.mrb[0].mxu0
        %v4280 = vadd.f32 %v4119, %v4279
        %v4281 = vpop.f32.mrb[0].mxu0
        %v4282 = vpop.f32.mrb[0].mxu0
        %v4283 = vadd.f32 %v4122, %v4282
        %v4284 = vpop.f32.mrb[0].mxu0
        %4285 = vmatprep.mubr.bf16.mxu0 %v3376
        %4286 = vmatmul.mubr.bf16.gmra.mrb[0].mxu0 %v3375
        %v4287 = vpop.f32.mrb[0].mxu0
        %v4288 = vadd.f32 %v4127, %v4287
        %v4289 = vpop.f32.mrb[0].mxu0
        %v4290 = vpop.f32.mrb[0].mxu0
        %v4291 = vadd.f32 %v4130, %v4290
        %v4292 = vpop.f32.mrb[0].mxu0
        %4293 = vmatprep.mubr.bf16.mxu0 %v3385
        %4294 = vmatmul.mubr.bf16.gmra.mrb[0].mxu0 %v3384
        %v4295 = vpop.f32.mrb[0].mxu0
        %v4296 = vadd.f32 %v4135, %v4295
        %v4297 = vpop.f32.mrb[0].mxu0
        %v4298 = vpop.f32.mrb[0].mxu0
        %v4299 = vadd.f32 %v4138, %v4298
        %v4300 = vpop.f32.mrb[0].mxu0
        %4301 = vmatprep.mubr.bf16.mxu0 %v3394
        %4302 = vmatmul.mubr.bf16.gmra.mrb[0].mxu0 %v3393
        %v4303 = vpop.f32.mrb[0].mxu0
        %v4304 = vadd.f32 %v4143, %v4303
        %v4305 = vpop.f32.mrb[0].mxu0
        %v4306 = vpop.f32.mrb[0].mxu0
        %v4307 = vadd.f32 %v4146, %v4306
        %v4308 = vpop.f32.mrb[0].mxu0
        %4309 = vmatprep.mubr.bf16.mxu0 %v3403
        %4310 = vmatmul.mubr.bf16.gmra.mrb[0].mxu0 %v3402
        %v4311 = vpop.f32.mrb[0].mxu0
        %v4312 = vadd.f32 %v4151, %v4311
        %v4313 = vpop.f32.mrb[0].mxu0
        %v4314 = vpop.f32.mrb[0].mxu0
        %v4315 = vadd.f32 %v4154, %v4314
        %v4316 = vpop.f32.mrb[0].mxu0
        %4317 = vmatprep.mubr.bf16.mxu0 %v3412
        %4318 = vmatmul.mubr.bf16.gmra.mrb[0].mxu0 %v3411
        %v4319 = vpop.f32.mrb[0].mxu0
        %v4320 = vadd.f32 %v4159, %v4319
        %v4321 = vpop.f32.mrb[0].mxu0
        %v4322 = vpop.f32.mrb[0].mxu0
        %v4323 = vadd.f32 %v4162, %v4322
        %v4324 = vpop.f32.mrb[0].mxu0
        %4325 = vmatprep.mubr.bf16.mxu0 %v3421
        %4326 = vmatmul.mubr.bf16.gmra.mrb[0].mxu0 %v3420
        %v4327 = vpop.f32.mrb[0].mxu0
        %v4328 = vadd.f32 %v4167, %v4327
        %v4329 = vpop.f32.mrb[0].mxu0
        %v4330 = vpop.f32.mrb[0].mxu0
        %v4331 = vadd.f32 %v4170, %v4330
        %v4332 = vpop.f32.mrb[0].mxu0
        %4333 = vmatprep.mubr.bf16.mxu0 %v3430
        %4334 = vmatmul.mubr.bf16.gmra.mrb[0].mxu0 %v3429
        %v4335 = vpop.f32.mrb[0].mxu0
        %v4336 = vadd.f32 %v4175, %v4335
        %v4337 = vpop.f32.mrb[0].mxu0
        %v4338 = vpop.f32.mrb[0].mxu0
        %v4339 = vadd.f32 %v4178, %v4338
        %v4340 = vpop.f32.mrb[0].mxu0
        %4341 = vmatprep.mubr.bf16.mxu0 %v3439
        %4342 = vmatmul.mubr.bf16.gmra.mrb[0].mxu0 %v3438
        %v4343 = vpop.f32.mrb[0].mxu0
        %v4344 = vadd.f32 %v4183, %v4343
        %v4345 = vpop.f32.mrb[0].mxu0
        %v4346 = vpop.f32.mrb[0].mxu0
        %v4347 = vadd.f32 %v4186, %v4346
        %v4348 = vpop.f32.mrb[0].mxu0
        %4349 = vmatprep.mubr.bf16.mxu0 %v3448
        %4350 = vmatmul.mubr.bf16.gmra.mrb[0].mxu0 %v3447
        %v4351 = vpop.f32.mrb[0].mxu0
        %v4352 = vadd.f32 %v4191, %v4351
        %v4353 = vpop.f32.mrb[0].mxu0
        %v4354 = vpop.f32.mrb[0].mxu0
        %v4355 = vadd.f32 %v4194, %v4354
        %v4356 = vpop.f32.mrb[0].mxu0
        %4357 = vmatprep.mubr.bf16.mxu0 %v3457
        %4358 = vmatmul.mubr.bf16.gmra.mrb[0].mxu0 %v3456
        %v4359 = vpop.f32.mrb[0].mxu0
        %v4360 = vadd.f32 %v4199, %v4359
        %v4361 = vpop.f32.mrb[0].mxu0
        %v4362 = vpop.f32.mrb[0].mxu0
        %v4363 = vadd.f32 %v4202, %v4362
        %v4364 = vpop.f32.mrb[0].mxu0
        %4365 = vmatprep.mubr.bf16.mxu0 %v3466
        %4366 = vmatmul.mubr.bf16.gmra.mrb[0].mxu0 %v3465
        %v4367 = vpop.f32.mrb[0].mxu0
        %v4368 = vadd.f32 %v4207, %v4367
        %v4369 = vpop.f32.mrb[0].mxu0
        %v4370 = vpop.f32.mrb[0].mxu0
        %v4371 = vadd.f32 %v4210, %v4370
        %v4372 = vpop.f32.mrb[0].mxu0
        %4373 = vmatprep.mubr.bf16.mxu0 %v3475
        %4374 = vmatmul.mubr.bf16.gmra.mrb[0].mxu0 %v3474
        %v4375 = vpop.f32.mrb[0].mxu0
        %v4376 = vadd.f32 %v4215, %v4375
        %v4377 = vpop.f32.mrb[0].mxu0
        %v4378 = vpop.f32.mrb[0].mxu0
        %v4379 = vadd.f32 %v4218, %v4378
        %v4380 = vpop.f32.mrb[0].mxu0
        %4381 = vmatprep.mubr.bf16.mxu0 %v3484
        %4382 = vmatmul.mubr.bf16.gmra.mrb[0].mxu0 %v3483
        %v4383 = vpop.f32.mrb[0].mxu0
        %v4384 = vadd.f32 %v4223, %v4383
        %v4385 = vpop.f32.mrb[0].mxu0
        %v4386 = vpop.f32.mrb[0].mxu0
        %v4387 = vadd.f32 %v4226, %v4386
        %v4388 = vpop.f32.mrb[0].mxu0
        %4389 = vmatprep.mubr.bf16.mxu0 %v3493
        %4390 = vmatmul.mubr.bf16.gmra.mrb[0].mxu0 %v3492
        %v4391 = vpop.f32.mrb[0].mxu0
        %v4392 = vadd.f32 %v4231, %v4391
        %v4393 = vpop.f32.mrb[0].mxu0
        %v4394 = vpop.f32.mrb[0].mxu0
        %v4395 = vadd.f32 %v4234, %v4394
        %v4396 = vpop.f32.mrb[0].mxu0
        %4397 = vmatprep.mubr.bf16.mxu0 %v3502
        %4398 = vmatmul.mubr.bf16.gmra.mrb[0].mxu0 %v3501
        %v4399 = vpop.f32.mrb[0].mxu0
        %v4400 = vadd.f32 %v4239, %v4399
        %v4401 = vpop.f32.mrb[0].mxu0
        %v4402 = vpop.f32.mrb[0].mxu0
        %v4403 = vadd.f32 %v4242, %v4402
        %v4404 = vpop.f32.mrb[0].mxu0
        %4405 = vdwg.mxu0
        %4406 = vmatprep.subr.bf16.mxu0 0
        %4407 = vmatpush1.bf16.msra.mxu0 %v3972
        %4408 = vmatprep.subr.bf16.mxu0 0
        %4409 = vmatpush1.bf16.msra.mxu0 %v3973
        %4410 = vmatprep.subr.bf16.mxu0 0
        %4411 = vmatpush1.bf16.msra.mxu0 %v3974
        %4412 = vmatprep.subr.bf16.mxu0 0
        %4413 = vmatpush1.bf16.msra.mxu0 %v3975
        %4414 = vmatprep.subr.bf16.mxu0 0
        %4415 = vmatpush1.bf16.msra.mxu0 %v3976
        %4416 = vmatprep.subr.bf16.mxu0 0
        %4417 = vmatpush1.bf16.msra.mxu0 %v3977
        %4418 = vmatprep.subr.bf16.mxu0 0
        %4419 = vmatpush1.bf16.msra.mxu0 %v3978
        %4420 = vmatprep.subr.bf16.mxu0 0
        %4421 = vmatpush1.bf16.msra.mxu0 %v3979
        %4422 = vmatprep.subr.bf16.mxu0 0
        %4423 = vmatpush1.bf16.msra.mxu0 %v3980
        %4424 = vmatprep.subr.bf16.mxu0 0
        %4425 = vmatpush1.bf16.msra.mxu0 %v3981
        %4426 = vmatprep.subr.bf16.mxu0 0
        %4427 = vmatpush1.bf16.msra.mxu0 %v3982
        %4428 = vmatprep.subr.bf16.mxu0 0
        %4429 = vmatpush1.bf16.msra.mxu0 %v3983
        %4430 = vmatprep.subr.bf16.mxu0 0
        %4431 = vmatpush1.bf16.msra.mxu0 %v3984
        %4432 = vmatprep.subr.bf16.mxu0 0
        %4433 = vmatpush1.bf16.msra.mxu0 %v3985
        %4434 = vmatprep.subr.bf16.mxu0 0
        %4435 = vmatpush1.bf16.msra.mxu0 %v3986
        %4436 = vmatprep.subr.bf16.mxu0 0
        %4437 = vmatpush1.bf16.msra.mxu0 %v3987
        %4438 = vmatprep.mubr.bf16.mxu0 %v3369
        %4439 = vmatmul.mubr.bf16.gmra.mrb[0].mxu0 %v3368
        %v4440 = vpop.f32.mrb[0].mxu0
        %v4441 = vadd.f32 %v4280, %v4440
        %v4442 = vpop.f32.mrb[0].mxu0
        %v4443 = vpop.f32.mrb[0].mxu0
        %v4444 = vadd.f32 %v4283, %v4443
        %v4445 = vpop.f32.mrb[0].mxu0
        %4446 = vmatprep.mubr.bf16.mxu0 %v3378
        %4447 = vmatmul.mubr.bf16.gmra.mrb[0].mxu0 %v3377
        %v4448 = vpop.f32.mrb[0].mxu0
        %v4449 = vadd.f32 %v4288, %v4448
        %v4450 = vpop.f32.mrb[0].mxu0
        %v4451 = vpop.f32.mrb[0].mxu0
        %v4452 = vadd.f32 %v4291, %v4451
        %v4453 = vpop.f32.mrb[0].mxu0
        %4454 = vmatprep.mubr.bf16.mxu0 %v3387
        %4455 = vmatmul.mubr.bf16.gmra.mrb[0].mxu0 %v3386
        %v4456 = vpop.f32.mrb[0].mxu0
        %v4457 = vadd.f32 %v4296, %v4456
        %v4458 = vpop.f32.mrb[0].mxu0
        %v4459 = vpop.f32.mrb[0].mxu0
        %v4460 = vadd.f32 %v4299, %v4459
        %v4461 = vpop.f32.mrb[0].mxu0
        %4462 = vmatprep.mubr.bf16.mxu0 %v3396
        %4463 = vmatmul.mubr.bf16.gmra.mrb[0].mxu0 %v3395
        %v4464 = vpop.f32.mrb[0].mxu0
        %v4465 = vadd.f32 %v4304, %v4464
        %v4466 = vpop.f32.mrb[0].mxu0
        %v4467 = vpop.f32.mrb[0].mxu0
        %v4468 = vadd.f32 %v4307, %v4467
        %v4469 = vpop.f32.mrb[0].mxu0
        %4470 = vmatprep.mubr.bf16.mxu0 %v3405
        %4471 = vmatmul.mubr.bf16.gmra.mrb[0].mxu0 %v3404
        %v4472 = vpop.f32.mrb[0].mxu0
        %v4473 = vadd.f32 %v4312, %v4472
        %v4474 = vpop.f32.mrb[0].mxu0
        %v4475 = vpop.f32.mrb[0].mxu0
        %v4476 = vadd.f32 %v4315, %v4475
        %v4477 = vpop.f32.mrb[0].mxu0
        %4478 = vmatprep.mubr.bf16.mxu0 %v3414
        %4479 = vmatmul.mubr.bf16.gmra.mrb[0].mxu0 %v3413
        %v4480 = vpop.f32.mrb[0].mxu0
        %v4481 = vadd.f32 %v4320, %v4480
        %v4482 = vpop.f32.mrb[0].mxu0
        %v4483 = vpop.f32.mrb[0].mxu0
        %v4484 = vadd.f32 %v4323, %v4483
        %v4485 = vpop.f32.mrb[0].mxu0
        %4486 = vmatprep.mubr.bf16.mxu0 %v3423
        %4487 = vmatmul.mubr.bf16.gmra.mrb[0].mxu0 %v3422
        %v4488 = vpop.f32.mrb[0].mxu0
        %v4489 = vadd.f32 %v4328, %v4488
        %v4490 = vpop.f32.mrb[0].mxu0
        %v4491 = vpop.f32.mrb[0].mxu0
        %v4492 = vadd.f32 %v4331, %v4491
        %v4493 = vpop.f32.mrb[0].mxu0
        %4494 = vmatprep.mubr.bf16.mxu0 %v3432
        %4495 = vmatmul.mubr.bf16.gmra.mrb[0].mxu0 %v3431
        %v4496 = vpop.f32.mrb[0].mxu0
        %v4497 = vadd.f32 %v4336, %v4496
        %v4498 = vpop.f32.mrb[0].mxu0
        %v4499 = vpop.f32.mrb[0].mxu0
        %v4500 = vadd.f32 %v4339, %v4499
        %v4501 = vpop.f32.mrb[0].mxu0
        %4502 = vmatprep.mubr.bf16.mxu0 %v3441
        %4503 = vmatmul.mubr.bf16.gmra.mrb[0].mxu0 %v3440
        %v4504 = vpop.f32.mrb[0].mxu0
        %v4505 = vadd.f32 %v4344, %v4504
        %v4506 = vpop.f32.mrb[0].mxu0
        %v4507 = vpop.f32.mrb[0].mxu0
        %v4508 = vadd.f32 %v4347, %v4507
        %v4509 = vpop.f32.mrb[0].mxu0
        %4510 = vmatprep.mubr.bf16.mxu0 %v3450
        %4511 = vmatmul.mubr.bf16.gmra.mrb[0].mxu0 %v3449
        %v4512 = vpop.f32.mrb[0].mxu0
        %v4513 = vadd.f32 %v4352, %v4512
        %v4514 = vpop.f32.mrb[0].mxu0
        %v4515 = vpop.f32.mrb[0].mxu0
        %v4516 = vadd.f32 %v4355, %v4515
        %v4517 = vpop.f32.mrb[0].mxu0
        %4518 = vmatprep.mubr.bf16.mxu0 %v3459
        %4519 = vmatmul.mubr.bf16.gmra.mrb[0].mxu0 %v3458
        %v4520 = vpop.f32.mrb[0].mxu0
        %v4521 = vadd.f32 %v4360, %v4520
        %v4522 = vpop.f32.mrb[0].mxu0
        %v4523 = vpop.f32.mrb[0].mxu0
        %v4524 = vadd.f32 %v4363, %v4523
        %v4525 = vpop.f32.mrb[0].mxu0
        %4526 = vmatprep.mubr.bf16.mxu0 %v3468
        %4527 = vmatmul.mubr.bf16.gmra.mrb[0].mxu0 %v3467
        %v4528 = vpop.f32.mrb[0].mxu0
        %v4529 = vadd.f32 %v4368, %v4528
        %v4530 = vpop.f32.mrb[0].mxu0
        %v4531 = vpop.f32.mrb[0].mxu0
        %v4532 = vadd.f32 %v4371, %v4531
        %v4533 = vpop.f32.mrb[0].mxu0
        %4534 = vmatprep.mubr.bf16.mxu0 %v3477
        %4535 = vmatmul.mubr.bf16.gmra.mrb[0].mxu0 %v3476
        %v4536 = vpop.f32.mrb[0].mxu0
        %v4537 = vadd.f32 %v4376, %v4536
        %v4538 = vpop.f32.mrb[0].mxu0
        %v4539 = vpop.f32.mrb[0].mxu0
        %v4540 = vadd.f32 %v4379, %v4539
        %v4541 = vpop.f32.mrb[0].mxu0
        %4542 = vmatprep.mubr.bf16.mxu0 %v3486
        %4543 = vmatmul.mubr.bf16.gmra.mrb[0].mxu0 %v3485
        %v4544 = vpop.f32.mrb[0].mxu0
        %v4545 = vadd.f32 %v4384, %v4544
        %v4546 = vpop.f32.mrb[0].mxu0
        %v4547 = vpop.f32.mrb[0].mxu0
        %v4548 = vadd.f32 %v4387, %v4547
        %v4549 = vpop.f32.mrb[0].mxu0
        %4550 = vmatprep.mubr.bf16.mxu0 %v3495
        %4551 = vmatmul.mubr.bf16.gmra.mrb[0].mxu0 %v3494
        %v4552 = vpop.f32.mrb[0].mxu0
        %v4553 = vadd.f32 %v4392, %v4552
        %v4554 = vpop.f32.mrb[0].mxu0
        %v4555 = vpop.f32.mrb[0].mxu0
        %v4556 = vadd.f32 %v4395, %v4555
        %v4557 = vpop.f32.mrb[0].mxu0
        %4558 = vmatprep.mubr.bf16.mxu0 %v3504
        %4559 = vmatmul.mubr.bf16.gmra.mrb[0].mxu0 %v3503
        %v4560 = vpop.f32.mrb[0].mxu0
        %v4561 = vadd.f32 %v4400, %v4560
        %v4562 = vpop.f32.mrb[0].mxu0
        %v4563 = vpop.f32.mrb[0].mxu0
        %v4564 = vadd.f32 %v4403, %v4563
        %v4565 = vpop.f32.mrb[0].mxu0
        %4566 = vdwg.mxu0
        %4567 = vmatprep.subr.bf16.mxu0 0
        %4568 = vmatpush1.bf16.msra.mxu0 %v3988
        %4569 = vmatprep.subr.bf16.mxu0 0
        %4570 = vmatpush1.bf16.msra.mxu0 %v3989
        %4571 = vmatprep.subr.bf16.mxu0 0
        %4572 = vmatpush1.bf16.msra.mxu0 %v3990
        %4573 = vmatprep.subr.bf16.mxu0 0
        %4574 = vmatpush1.bf16.msra.mxu0 %v3991
        %4575 = vmatprep.subr.bf16.mxu0 0
        %4576 = vmatpush1.bf16.msra.mxu0 %v3992
        %4577 = vmatprep.subr.bf16.mxu0 0
        %4578 = vmatpush1.bf16.msra.mxu0 %v3993
        %4579 = vmatprep.subr.bf16.mxu0 0
        %4580 = vmatpush1.bf16.msra.mxu0 %v3994
        %4581 = vmatprep.subr.bf16.mxu0 0
        %4582 = vmatpush1.bf16.msra.mxu0 %v3995
        %4583 = vmatprep.subr.bf16.mxu0 0
        %4584 = vmatpush1.bf16.msra.mxu0 %v3996
        %4585 = vmatprep.subr.bf16.mxu0 0
        %4586 = vmatpush1.bf16.msra.mxu0 %v3997
        %4587 = vmatprep.subr.bf16.mxu0 0
        %4588 = vmatpush1.bf16.msra.mxu0 %v3998
        %4589 = vmatprep.subr.bf16.mxu0 0
        %4590 = vmatpush1.bf16.msra.mxu0 %v3999
        %4591 = vmatprep.subr.bf16.mxu0 0
        %4592 = vmatpush1.bf16.msra.mxu0 %v4000
        %4593 = vmatprep.subr.bf16.mxu0 0
        %4594 = vmatpush1.bf16.msra.mxu0 %v4001
        %4595 = vmatprep.subr.bf16.mxu0 0
        %4596 = vmatpush1.bf16.msra.mxu0 %v4002
        %4597 = vmatprep.subr.bf16.mxu0 0
        %4598 = vmatpush1.bf16.msra.mxu0 %v4003
        %4599 = vmatprep.mubr.bf16.mxu0 %v3371
        %4600 = vmatmul.mubr.bf16.gmra.mrb[0].mxu0 %v3370
        %v4601 = vpop.f32.mrb[0].mxu0
        %v4602 = vadd.f32 %v4441, %v4601
        %v4603 = vpop.f32.mrb[0].mxu0
        %v4604 = vpop.f32.mrb[0].mxu0
        %v4605 = vadd.f32 %v4444, %v4604
        %v4606 = vpop.f32.mrb[0].mxu0
        %4607 = vmatprep.mubr.bf16.mxu0 %v3380
        %4608 = vmatmul.mubr.bf16.gmra.mrb[0].mxu0 %v3379
        %v4609 = vpop.f32.mrb[0].mxu0
        %v4610 = vadd.f32 %v4449, %v4609
        %v4611 = vpop.f32.mrb[0].mxu0
        %v4612 = vpop.f32.mrb[0].mxu0
        %v4613 = vadd.f32 %v4452, %v4612
        %v4614 = vpop.f32.mrb[0].mxu0
        %4615 = vmatprep.mubr.bf16.mxu0 %v3389
        %4616 = vmatmul.mubr.bf16.gmra.mrb[0].mxu0 %v3388
        %v4617 = vpop.f32.mrb[0].mxu0
        %v4618 = vadd.f32 %v4457, %v4617
        %v4619 = vpop.f32.mrb[0].mxu0
        %v4620 = vpop.f32.mrb[0].mxu0
        %v4621 = vadd.f32 %v4460, %v4620
        %v4622 = vpop.f32.mrb[0].mxu0
        %4623 = vmatprep.mubr.bf16.mxu0 %v3398
        %4624 = vmatmul.mubr.bf16.gmra.mrb[0].mxu0 %v3397
        %v4625 = vpop.f32.mrb[0].mxu0
        %v4626 = vadd.f32 %v4465, %v4625
        %v4627 = vpop.f32.mrb[0].mxu0
        %v4628 = vpop.f32.mrb[0].mxu0
        %v4629 = vadd.f32 %v4468, %v4628
        %v4630 = vpop.f32.mrb[0].mxu0
        %4631 = vmatprep.mubr.bf16.mxu0 %v3407
        %4632 = vmatmul.mubr.bf16.gmra.mrb[0].mxu0 %v3406
        %v4633 = vpop.f32.mrb[0].mxu0
        %v4634 = vadd.f32 %v4473, %v4633
        %v4635 = vpop.f32.mrb[0].mxu0
        %v4636 = vpop.f32.mrb[0].mxu0
        %v4637 = vadd.f32 %v4476, %v4636
        %v4638 = vpop.f32.mrb[0].mxu0
        %4639 = vmatprep.mubr.bf16.mxu0 %v3416
        %4640 = vmatmul.mubr.bf16.gmra.mrb[0].mxu0 %v3415
        %v4641 = vpop.f32.mrb[0].mxu0
        %v4642 = vadd.f32 %v4481, %v4641
        %v4643 = vpop.f32.mrb[0].mxu0
        %v4644 = vpop.f32.mrb[0].mxu0
        %v4645 = vadd.f32 %v4484, %v4644
        %v4646 = vpop.f32.mrb[0].mxu0
        %4647 = vmatprep.mubr.bf16.mxu0 %v3425
        %4648 = vmatmul.mubr.bf16.gmra.mrb[0].mxu0 %v3424
        %v4649 = vpop.f32.mrb[0].mxu0
        %v4650 = vadd.f32 %v4489, %v4649
        %v4651 = vpop.f32.mrb[0].mxu0
        %v4652 = vpop.f32.mrb[0].mxu0
        %v4653 = vadd.f32 %v4492, %v4652
        %v4654 = vpop.f32.mrb[0].mxu0
        %4655 = vmatprep.mubr.bf16.mxu0 %v3434
        %4656 = vmatmul.mubr.bf16.gmra.mrb[0].mxu0 %v3433
        %v4657 = vpop.f32.mrb[0].mxu0
        %v4658 = vadd.f32 %v4497, %v4657
        %v4659 = vpop.f32.mrb[0].mxu0
        %v4660 = vpop.f32.mrb[0].mxu0
        %v4661 = vadd.f32 %v4500, %v4660
        %v4662 = vpop.f32.mrb[0].mxu0
        %4663 = vmatprep.mubr.bf16.mxu0 %v3443
        %4664 = vmatmul.mubr.bf16.gmra.mrb[0].mxu0 %v3442
        %v4665 = vpop.f32.mrb[0].mxu0
        %v4666 = vadd.f32 %v4505, %v4665
        %v4667 = vpop.f32.mrb[0].mxu0
        %v4668 = vpop.f32.mrb[0].mxu0
        %v4669 = vadd.f32 %v4508, %v4668
        %v4670 = vpop.f32.mrb[0].mxu0
        %4671 = vmatprep.mubr.bf16.mxu0 %v3452
        %4672 = vmatmul.mubr.bf16.gmra.mrb[0].mxu0 %v3451
        %v4673 = vpop.f32.mrb[0].mxu0
        %v4674 = vadd.f32 %v4513, %v4673
        %v4675 = vpop.f32.mrb[0].mxu0
        %v4676 = vpop.f32.mrb[0].mxu0
        %v4677 = vadd.f32 %v4516, %v4676
        %v4678 = vpop.f32.mrb[0].mxu0
        %4679 = vmatprep.mubr.bf16.mxu0 %v3461
        %4680 = vmatmul.mubr.bf16.gmra.mrb[0].mxu0 %v3460
        %v4681 = vpop.f32.mrb[0].mxu0
        %v4682 = vadd.f32 %v4521, %v4681
        %v4683 = vpop.f32.mrb[0].mxu0
        %v4684 = vpop.f32.mrb[0].mxu0
        %v4685 = vadd.f32 %v4524, %v4684
        %v4686 = vpop.f32.mrb[0].mxu0
        %4687 = vmatprep.mubr.bf16.mxu0 %v3470
        %4688 = vmatmul.mubr.bf16.gmra.mrb[0].mxu0 %v3469
        %v4689 = vpop.f32.mrb[0].mxu0
        %v4690 = vadd.f32 %v4529, %v4689
        %v4691 = vpop.f32.mrb[0].mxu0
        %v4692 = vpop.f32.mrb[0].mxu0
        %v4693 = vadd.f32 %v4532, %v4692
        %v4694 = vpop.f32.mrb[0].mxu0
        %4695 = vmatprep.mubr.bf16.mxu0 %v3479
        %4696 = vmatmul.mubr.bf16.gmra.mrb[0].mxu0 %v3478
        %v4697 = vpop.f32.mrb[0].mxu0
        %v4698 = vadd.f32 %v4537, %v4697
        %v4699 = vpop.f32.mrb[0].mxu0
        %v4700 = vpop.f32.mrb[0].mxu0
        %v4701 = vadd.f32 %v4540, %v4700
        %v4702 = vpop.f32.mrb[0].mxu0
        %4703 = vmatprep.mubr.bf16.mxu0 %v3488
        %4704 = vmatmul.mubr.bf16.gmra.mrb[0].mxu0 %v3487
        %v4705 = vpop.f32.mrb[0].mxu0
        %v4706 = vadd.f32 %v4545, %v4705
        %v4707 = vpop.f32.mrb[0].mxu0
        %v4708 = vpop.f32.mrb[0].mxu0
        %v4709 = vadd.f32 %v4548, %v4708
        %v4710 = vpop.f32.mrb[0].mxu0
        %4711 = vmatprep.mubr.bf16.mxu0 %v3497
        %4712 = vmatmul.mubr.bf16.gmra.mrb[0].mxu0 %v3496
        %v4713 = vpop.f32.mrb[0].mxu0
        %v4714 = vadd.f32 %v4553, %v4713
        %v4715 = vpop.f32.mrb[0].mxu0
        %v4716 = vpop.f32.mrb[0].mxu0
        %v4717 = vadd.f32 %v4556, %v4716
        %v4718 = vpop.f32.mrb[0].mxu0
        %4719 = vmatprep.mubr.bf16.mxu0 %v3506
        %4720 = vmatmul.mubr.bf16.gmra.mrb[0].mxu0 %v3505
        %v4721 = vpop.f32.mrb[0].mxu0
        %v4722 = vadd.f32 %v4561, %v4721
        %v4723 = vpop.f32.mrb[0].mxu0
        %v4724 = vpop.f32.mrb[0].mxu0
        %v4725 = vadd.f32 %v4564, %v4724
        %v4726 = vpop.f32.mrb[0].mxu0
        %4727 = vdwg.mxu0
        %4728 = vmatprep.subr.bf16.mxu0 0
        %4729 = vmatpush1.bf16.msra.mxu0 %v4004
        %4730 = vmatprep.subr.bf16.mxu0 0
        %4731 = vmatpush1.bf16.msra.mxu0 %v4005
        %4732 = vmatprep.subr.bf16.mxu0 0
        %4733 = vmatpush1.bf16.msra.mxu0 %v4006
        %4734 = vmatprep.subr.bf16.mxu0 0
        %4735 = vmatpush1.bf16.msra.mxu0 %v4007
        %4736 = vmatprep.subr.bf16.mxu0 0
        %4737 = vmatpush1.bf16.msra.mxu0 %v4008
        %4738 = vmatprep.subr.bf16.mxu0 0
        %4739 = vmatpush1.bf16.msra.mxu0 %v4009
        %4740 = vmatprep.subr.bf16.mxu0 0
        %4741 = vmatpush1.bf16.msra.mxu0 %v4010
        %4742 = vmatprep.subr.bf16.mxu0 0
        %4743 = vmatpush1.bf16.msra.mxu0 %v4011
        %4744 = vmatprep.subr.bf16.mxu0 0
        %4745 = vmatpush1.bf16.msra.mxu0 0
        %4746 = vmatprep.subr.bf16.mxu0 0
        %4747 = vmatpush1.bf16.msra.mxu0 0
        %4748 = vmatprep.subr.bf16.mxu0 0
        %4749 = vmatpush1.bf16.msra.mxu0 0
        %4750 = vmatprep.subr.bf16.mxu0 0
        %4751 = vmatpush1.bf16.msra.mxu0 0
        %4752 = vmatprep.subr.bf16.mxu0 0
        %4753 = vmatpush1.bf16.msra.mxu0 0
        %4754 = vmatprep.subr.bf16.mxu0 0
        %4755 = vmatpush1.bf16.msra.mxu0 0
        %4756 = vmatprep.subr.bf16.mxu0 0
        %4757 = vmatpush1.bf16.msra.mxu0 0
        %4758 = vmatprep.subr.bf16.mxu0 0
        %4759 = vmatpush1.bf16.msra.mxu0 0
        %4760 = vmatprep.mubr.bf16.mxu0 0
        %4761 = vmatmul.mubr.bf16.gmra.mrb[0].mxu0 %v3372
        %v4762 = vpop.f32.mrb[0].mxu0
        %v4763 = vadd.f32 %v4602, %v4762
        %v4764 = vpop.f32.mrb[0].mxu0
        %v4765 = vpop.f32.mrb[0].mxu0
        %v4766 = vadd.f32 %v4605, %v4765
        %v4767 = vpop.f32.mrb[0].mxu0
        %4768 = vmatprep.mubr.bf16.mxu0 0
        %4769 = vmatmul.mubr.bf16.gmra.mrb[0].mxu0 %v3381
        %v4770 = vpop.f32.mrb[0].mxu0
        %v4771 = vadd.f32 %v4610, %v4770
        %v4772 = vpop.f32.mrb[0].mxu0
        %v4773 = vpop.f32.mrb[0].mxu0
        %v4774 = vadd.f32 %v4613, %v4773
        %v4775 = vpop.f32.mrb[0].mxu0
        %4776 = vmatprep.mubr.bf16.mxu0 0
        %4777 = vmatmul.mubr.bf16.gmra.mrb[0].mxu0 %v3390
        %v4778 = vpop.f32.mrb[0].mxu0
        %v4779 = vadd.f32 %v4618, %v4778
        %v4780 = vpop.f32.mrb[0].mxu0
        %v4781 = vpop.f32.mrb[0].mxu0
        %v4782 = vadd.f32 %v4621, %v4781
        %v4783 = vpop.f32.mrb[0].mxu0
        %4784 = vmatprep.mubr.bf16.mxu0 0
        %4785 = vmatmul.mubr.bf16.gmra.mrb[0].mxu0 %v3399
        %v4786 = vpop.f32.mrb[0].mxu0
        %v4787 = vadd.f32 %v4626, %v4786
        %v4788 = vpop.f32.mrb[0].mxu0
        %v4789 = vpop.f32.mrb[0].mxu0
        %v4790 = vadd.f32 %v4629, %v4789
        %v4791 = vpop.f32.mrb[0].mxu0
        %4792 = vmatprep.mubr.bf16.mxu0 0
        %4793 = vmatmul.mubr.bf16.gmra.mrb[0].mxu0 %v3408
        %v4794 = vpop.f32.mrb[0].mxu0
        %v4795 = vadd.f32 %v4634, %v4794
        %v4796 = vpop.f32.mrb[0].mxu0
        %v4797 = vpop.f32.mrb[0].mxu0
        %v4798 = vadd.f32 %v4637, %v4797
        %v4799 = vpop.f32.mrb[0].mxu0
        %4800 = vmatprep.mubr.bf16.mxu0 0
        %4801 = vmatmul.mubr.bf16.gmra.mrb[0].mxu0 %v3417
        %v4802 = vpop.f32.mrb[0].mxu0
        %v4803 = vadd.f32 %v4642, %v4802
        %v4804 = vpop.f32.mrb[0].mxu0
        %v4805 = vpop.f32.mrb[0].mxu0
        %v4806 = vadd.f32 %v4645, %v4805
        %v4807 = vpop.f32.mrb[0].mxu0
        %4808 = vmatprep.mubr.bf16.mxu0 0
        %4809 = vmatmul.mubr.bf16.gmra.mrb[0].mxu0 %v3426
        %v4810 = vpop.f32.mrb[0].mxu0
        %v4811 = vadd.f32 %v4650, %v4810
        %v4812 = vpop.f32.mrb[0].mxu0
        %v4813 = vpop.f32.mrb[0].mxu0
        %v4814 = vadd.f32 %v4653, %v4813
        %v4815 = vpop.f32.mrb[0].mxu0
        %4816 = vmatprep.mubr.bf16.mxu0 0
        %4817 = vmatmul.mubr.bf16.gmra.mrb[0].mxu0 %v3435
        %v4818 = vpop.f32.mrb[0].mxu0
        %v4819 = vadd.f32 %v4658, %v4818
        %v4820 = vpop.f32.mrb[0].mxu0
        %v4821 = vpop.f32.mrb[0].mxu0
        %v4822 = vadd.f32 %v4661, %v4821
        %v4823 = vpop.f32.mrb[0].mxu0
        %4824 = vmatprep.mubr.bf16.mxu0 0
        %4825 = vmatmul.mubr.bf16.gmra.mrb[0].mxu0 %v3444
        %v4826 = vpop.f32.mrb[0].mxu0
        %v4827 = vadd.f32 %v4666, %v4826
        %v4828 = vpop.f32.mrb[0].mxu0
        %v4829 = vpop.f32.mrb[0].mxu0
        %v4830 = vadd.f32 %v4669, %v4829
        %v4831 = vpop.f32.mrb[0].mxu0
        %4832 = vmatprep.mubr.bf16.mxu0 0
        %4833 = vmatmul.mubr.bf16.gmra.mrb[0].mxu0 %v3453
        %v4834 = vpop.f32.mrb[0].mxu0
        %v4835 = vadd.f32 %v4674, %v4834
        %v4836 = vpop.f32.mrb[0].mxu0
        %v4837 = vpop.f32.mrb[0].mxu0
        %v4838 = vadd.f32 %v4677, %v4837
        %v4839 = vpop.f32.mrb[0].mxu0
        %4840 = vmatprep.mubr.bf16.mxu0 0
        %4841 = vmatmul.mubr.bf16.gmra.mrb[0].mxu0 %v3462
        %v4842 = vpop.f32.mrb[0].mxu0
        %v4843 = vadd.f32 %v4682, %v4842
        %v4844 = vpop.f32.mrb[0].mxu0
        %v4845 = vpop.f32.mrb[0].mxu0
        %v4846 = vadd.f32 %v4685, %v4845
        %v4847 = vpop.f32.mrb[0].mxu0
        %4848 = vmatprep.mubr.bf16.mxu0 0
        %4849 = vmatmul.mubr.bf16.gmra.mrb[0].mxu0 %v3471
        %v4850 = vpop.f32.mrb[0].mxu0
        %v4851 = vadd.f32 %v4690, %v4850
        %v4852 = vpop.f32.mrb[0].mxu0
        %v4853 = vpop.f32.mrb[0].mxu0
        %v4854 = vadd.f32 %v4693, %v4853
        %v4855 = vpop.f32.mrb[0].mxu0
        %4856 = vmatprep.mubr.bf16.mxu0 0
        %4857 = vmatmul.mubr.bf16.gmra.mrb[0].mxu0 %v3480
        %v4858 = vpop.f32.mrb[0].mxu0
        %v4859 = vadd.f32 %v4698, %v4858
        %v4860 = vpop.f32.mrb[0].mxu0
        %v4861 = vpop.f32.mrb[0].mxu0
        %v4862 = vadd.f32 %v4701, %v4861
        %v4863 = vpop.f32.mrb[0].mxu0
        %4864 = vmatprep.mubr.bf16.mxu0 0
        %4865 = vmatmul.mubr.bf16.gmra.mrb[0].mxu0 %v3489
        %v4866 = vpop.f32.mrb[0].mxu0
        %v4867 = vadd.f32 %v4706, %v4866
        %v4868 = vpop.f32.mrb[0].mxu0
        %v4869 = vpop.f32.mrb[0].mxu0
        %v4870 = vadd.f32 %v4709, %v4869
        %v4871 = vpop.f32.mrb[0].mxu0
        %4872 = vmatprep.mubr.bf16.mxu0 0
        %4873 = vmatmul.mubr.bf16.gmra.mrb[0].mxu0 %v3498
        %v4874 = vpop.f32.mrb[0].mxu0
        %v4875 = vadd.f32 %v4714, %v4874
        %v4876 = vpop.f32.mrb[0].mxu0
        %v4877 = vpop.f32.mrb[0].mxu0
        %v4878 = vadd.f32 %v4717, %v4877
        %v4879 = vpop.f32.mrb[0].mxu0
        %4880 = vmatprep.mubr.bf16.mxu0 0
        %4881 = vmatmul.mubr.bf16.gmra.mrb[0].mxu0 %v3507
        %v4882 = vpop.f32.mrb[0].mxu0
        %v4883 = vadd.f32 %v4722, %v4882
        %v4884 = vpop.f32.mrb[0].mxu0
        %v4885 = vpop.f32.mrb[0].mxu0
        %v4886 = vadd.f32 %v4725, %v4885
        %v4887 = vpop.f32.mrb[0].mxu0
        %4888 = vdwg.mxu0
        %v4889 = vld [vmem:[%s647 + $0x1] sm:$0xff]
        %v4890 = vld [vmem:[%s647 + $0x9] sm:$0xff]
        %v4891 = vld [vmem:[%s647 + $0x19] sm:$0xff]
        %v4892 = vld [vmem:[%s647 + $0x21] sm:$0xff]
        %v4893 = vld [vmem:[%s647 + $0x31] sm:$0xff]
        %v4894 = vld [vmem:[%s647 + $0x39] sm:$0xff]
        %v4895 = vld [vmem:[%s647 + $0x49] sm:$0xff]
        %v4896 = vld [vmem:[%s647 + $0x51] sm:$0xff]
        %v4897 = vld [vmem:[%s647 + $0x61] sm:$0xff]
        %v4898 = vld [vmem:[%s647 + $0x69] sm:$0xff]
        %v4899 = vld [vmem:[%s647 + $0x79] sm:$0xff]
        %v4900 = vld [vmem:[%s647 + $0x81] sm:$0xff]
        %v4901 = vld [vmem:[%s647 + $0x91] sm:$0xff]
        %v4902 = vld [vmem:[%s647 + $0x99] sm:$0xff]
        %v4903 = vld [vmem:[%s647 + $0xa9] sm:$0xff]
        %v4904 = vld [vmem:[%s647 + $0xb1] sm:$0xff]
        %v4905 = vld [vmem:[%s647 + $0xc1] sm:$0xff]
        %v4906 = vld [vmem:[%s647 + $0xc9] sm:$0xff]
        %v4907 = vld [vmem:[%s647 + $0xd9] sm:$0xff]
        %v4908 = vld [vmem:[%s647 + $0xe1] sm:$0xff]
        %v4909 = vld [vmem:[%s647 + $0xf1] sm:$0xff]
        %v4910 = vld [vmem:[%s647 + $0xf9] sm:$0xff]
        %v4911 = vld [vmem:[%s647 + $0x109] sm:$0xff]
        %v4912 = vld [vmem:[%s647 + $0x111] sm:$0xff]
        %v4913 = vld [vmem:[%s647 + $0x121] sm:$0xff]
        %v4914 = vld [vmem:[%s647 + $0x129] sm:$0xff]
        %v4915 = vld [vmem:[%s647 + $0x139] sm:$0xff]
        %v4916 = vld [vmem:[%s647 + $0x141] sm:$0xff]
        %v4917 = vld [vmem:[%s647 + $0x151] sm:$0xff]
        %v4918 = vld [vmem:[%s647 + $0x159] sm:$0xff]
        %v4919 = vld [vmem:[%s647 + $0x169] sm:$0xff]
        %v4920 = vld [vmem:[%s647 + $0x171] sm:$0xff]
        %v4921 = vld [vmem:[%s5] sm:$0x1]
        %v4923 = vlaneseq
        %v4924 = vshrl.u32 %v4923, 7
        %v4925 = vsub.s32 0, %v4924
        %v4926 = vrot.slane %v4921, %v4925
        %v4928 = vmul.f32 %v4763, %v4926
        %v4929 = vmul.f32 %v4766, %v4926
        %v4930 = vmul.f32 %v4771, %v4926
        %v4931 = vmul.f32 %v4774, %v4926
        %v4932 = vmul.f32 %v4779, %v4926
        %v4933 = vmul.f32 %v4782, %v4926
        %v4934 = vmul.f32 %v4787, %v4926
        %v4935 = vmul.f32 %v4790, %v4926
        %v4936 = vmul.f32 %v4795, %v4926
        %v4937 = vmul.f32 %v4798, %v4926
        %v4938 = vmul.f32 %v4803, %v4926
        %v4939 = vmul.f32 %v4806, %v4926
        %v4940 = vmul.f32 %v4811, %v4926
        %v4941 = vmul.f32 %v4814, %v4926
        %v4942 = vmul.f32 %v4819, %v4926
        %v4943 = vmul.f32 %v4822, %v4926
        %v4944 = vmul.f32 %v4827, %v4926
        %v4945 = vmul.f32 %v4830, %v4926
        %v4946 = vmul.f32 %v4835, %v4926
        %v4947 = vmul.f32 %v4838, %v4926
        %v4948 = vmul.f32 %v4843, %v4926
        %v4949 = vmul.f32 %v4846, %v4926
        %v4950 = vmul.f32 %v4851, %v4926
        %v4951 = vmul.f32 %v4854, %v4926
        %v4952 = vmul.f32 %v4859, %v4926
        %v4953 = vmul.f32 %v4862, %v4926
        %v4954 = vmul.f32 %v4867, %v4926
        %v4955 = vmul.f32 %v4870, %v4926
        %v4956 = vmul.f32 %v4875, %v4926
        %v4957 = vmul.f32 %v4878, %v4926
        %v4958 = vmul.f32 %v4883, %v4926
        %v4959 = vmul.f32 %v4886, %v4926
        %v4960 = vld [vmem:[%s6] sm:$0x1]
        %v4962 = vlaneseq
        %v4963 = vshrl.u32 %v4962, 7
        %v4964 = vsub.s32 0, %v4963
        %v4965 = vrot.slane %v4960, %v4964
        %v4967 = vadd.f32 %v4928, %v4965
        %v4968 = vadd.f32 %v4929, %v4965
        %v4969 = vadd.f32 %v4930, %v4965
        %v4970 = vadd.f32 %v4931, %v4965
        %v4971 = vadd.f32 %v4932, %v4965
        %v4972 = vadd.f32 %v4933, %v4965
        %v4973 = vadd.f32 %v4934, %v4965
        %v4974 = vadd.f32 %v4935, %v4965
        %v4975 = vadd.f32 %v4936, %v4965
        %v4976 = vadd.f32 %v4937, %v4965
        %v4977 = vadd.f32 %v4938, %v4965
        %v4978 = vadd.f32 %v4939, %v4965
        %v4979 = vadd.f32 %v4940, %v4965
        %v4980 = vadd.f32 %v4941, %v4965
        %v4981 = vadd.f32 %v4942, %v4965
        %v4982 = vadd.f32 %v4943, %v4965
        %v4983 = vadd.f32 %v4944, %v4965
        %v4984 = vadd.f32 %v4945, %v4965
        %v4985 = vadd.f32 %v4946, %v4965
        %v4986 = vadd.f32 %v4947, %v4965
        %v4987 = vadd.f32 %v4948, %v4965
        %v4988 = vadd.f32 %v4949, %v4965
        %v4989 = vadd.f32 %v4950, %v4965
        %v4990 = vadd.f32 %v4951, %v4965
        %v4991 = vadd.f32 %v4952, %v4965
        %v4992 = vadd.f32 %v4953, %v4965
        %v4993 = vadd.f32 %v4954, %v4965
        %v4994 = vadd.f32 %v4955, %v4965
        %v4995 = vadd.f32 %v4956, %v4965
        %v4996 = vadd.f32 %v4957, %v4965
        %v4997 = vadd.f32 %v4958, %v4965
        %v4998 = vadd.f32 %v4959, %v4965
        %v4999 = vadd.f32 %v4967, %v4889
        %v5000 = vadd.f32 %v4968, %v4890
        %v5001 = vadd.f32 %v4969, %v4891
        %v5002 = vadd.f32 %v4970, %v4892
        %v5003 = vadd.f32 %v4971, %v4893
        %v5004 = vadd.f32 %v4972, %v4894
        %v5005 = vadd.f32 %v4973, %v4895
        %v5006 = vadd.f32 %v4974, %v4896
        %v5007 = vadd.f32 %v4975, %v4897
        %v5008 = vadd.f32 %v4976, %v4898
        %v5009 = vadd.f32 %v4977, %v4899
        %v5010 = vadd.f32 %v4978, %v4900
        %v5011 = vadd.f32 %v4979, %v4901
        %v5012 = vadd.f32 %v4980, %v4902
        %v5013 = vadd.f32 %v4981, %v4903
        %v5014 = vadd.f32 %v4982, %v4904
        %v5015 = vadd.f32 %v4983, %v4905
        %v5016 = vadd.f32 %v4984, %v4906
        %v5017 = vadd.f32 %v4985, %v4907
        %v5018 = vadd.f32 %v4986, %v4908
        %v5019 = vadd.f32 %v4987, %v4909
        %v5020 = vadd.f32 %v4988, %v4910
        %v5021 = vadd.f32 %v4989, %v4911
        %v5022 = vadd.f32 %v4990, %v4912
        %v5023 = vadd.f32 %v4991, %v4913
        %v5024 = vadd.f32 %v4992, %v4914
        %v5025 = vadd.f32 %v4993, %v4915
        %v5026 = vadd.f32 %v4994, %v4916
        %v5027 = vadd.f32 %v4995, %v4917
        %v5028 = vadd.f32 %v4996, %v4918
        %v5029 = vadd.f32 %v4997, %v4919
        %v5030 = vadd.f32 %v4998, %v4920
        %v5031 = vmax.f32 %v4999, 0.0
        %v5032 = vmax.f32 %v5000, 0.0
        %v5033 = vmax.f32 %v5001, 0.0
        %v5034 = vmax.f32 %v5002, 0.0
        %v5035 = vmax.f32 %v5003, 0.0
        %v5036 = vmax.f32 %v5004, 0.0
        %v5037 = vmax.f32 %v5005, 0.0
        %v5038 = vmax.f32 %v5006, 0.0
        %v5039 = vmax.f32 %v5007, 0.0
        %v5040 = vmax.f32 %v5008, 0.0
        %v5041 = vmax.f32 %v5009, 0.0
        %v5042 = vmax.f32 %v5010, 0.0
        %v5043 = vmax.f32 %v5011, 0.0
        %v5044 = vmax.f32 %v5012, 0.0
        %v5045 = vmax.f32 %v5013, 0.0
        %v5046 = vmax.f32 %v5014, 0.0
        %v5047 = vmax.f32 %v5015, 0.0
        %v5048 = vmax.f32 %v5016, 0.0
        %v5049 = vmax.f32 %v5017, 0.0
        %v5050 = vmax.f32 %v5018, 0.0
        %v5051 = vmax.f32 %v5019, 0.0
        %v5052 = vmax.f32 %v5020, 0.0
        %v5053 = vmax.f32 %v5021, 0.0
        %v5054 = vmax.f32 %v5022, 0.0
        %v5055 = vmax.f32 %v5023, 0.0
        %v5056 = vmax.f32 %v5024, 0.0
        %v5057 = vmax.f32 %v5025, 0.0
        %v5058 = vmax.f32 %v5026, 0.0
        %v5059 = vmax.f32 %v5027, 0.0
        %v5060 = vmax.f32 %v5028, 0.0
        %v5061 = vmax.f32 %v5029, 0.0
        %v5062 = vmax.f32 %v5030, 0.0
        %v5063 = vmin.f32 %v5031, 20.0
        %v5064 = vmin.f32 %v5032, 20.0
        %v5065 = vmin.f32 %v5033, 20.0
        %v5066 = vmin.f32 %v5034, 20.0
        %v5067 = vmin.f32 %v5035, 20.0
        %v5068 = vmin.f32 %v5036, 20.0
        %v5069 = vmin.f32 %v5037, 20.0
        %v5070 = vmin.f32 %v5038, 20.0
        %v5071 = vmin.f32 %v5039, 20.0
        %v5072 = vmin.f32 %v5040, 20.0
        %v5073 = vmin.f32 %v5041, 20.0
        %v5074 = vmin.f32 %v5042, 20.0
        %v5075 = vmin.f32 %v5043, 20.0
        %v5076 = vmin.f32 %v5044, 20.0
        %v5077 = vmin.f32 %v5045, 20.0
        %v5078 = vmin.f32 %v5046, 20.0
        %v5079 = vmin.f32 %v5047, 20.0
        %v5080 = vmin.f32 %v5048, 20.0
        %v5081 = vmin.f32 %v5049, 20.0
        %v5082 = vmin.f32 %v5050, 20.0
        %v5083 = vmin.f32 %v5051, 20.0
        %v5084 = vmin.f32 %v5052, 20.0
        %v5085 = vmin.f32 %v5053, 20.0
        %v5086 = vmin.f32 %v5054, 20.0
        %v5087 = vmin.f32 %v5055, 20.0
        %v5088 = vmin.f32 %v5056, 20.0
        %v5089 = vmin.f32 %v5057, 20.0
        %v5090 = vmin.f32 %v5058, 20.0
        %v5091 = vmin.f32 %v5059, 20.0
        %v5092 = vmin.f32 %v5060, 20.0
        %v5093 = vmin.f32 %v5061, 20.0
        %v5094 = vmin.f32 %v5062, 20.0
        %5095 = vst [vmem:[%s286] sm:$0xff] %v5063
        %5096 = vst [vmem:[%s286 + $0x8] sm:$0xff] %v5064
        %5097 = vst [vmem:[%s286 + $0x10] sm:$0xff] %v5065
        %5098 = vst [vmem:[%s286 + $0x18] sm:$0xff] %v5066
        %5099 = vst [vmem:[%s286 + $0x20] sm:$0xff] %v5067
        %5100 = vst [vmem:[%s286 + $0x28] sm:$0xff] %v5068
        %5101 = vst [vmem:[%s286 + $0x30] sm:$0xff] %v5069
        %5102 = vst [vmem:[%s286 + $0x38] sm:$0xff] %v5070
        %5103 = vst [vmem:[%s286 + $0x40] sm:$0xff] %v5071
        %5104 = vst [vmem:[%s286 + $0x48] sm:$0xff] %v5072
        %5105 = vst [vmem:[%s286 + $0x50] sm:$0xff] %v5073
        %5106 = vst [vmem:[%s286 + $0x58] sm:$0xff] %v5074
        %5107 = vst [vmem:[%s286 + $0x60] sm:$0xff] %v5075
        %5108 = vst [vmem:[%s286 + $0x68] sm:$0xff] %v5076
        %5109 = vst [vmem:[%s286 + $0x70] sm:$0xff] %v5077
        %5110 = vst [vmem:[%s286 + $0x78] sm:$0xff] %v5078
        %5111 = vst [vmem:[%s286 + $0x80] sm:$0xff] %v5079
        %5112 = vst [vmem:[%s286 + $0x88] sm:$0xff] %v5080
        %5113 = vst [vmem:[%s286 + $0x90] sm:$0xff] %v5081
        %5114 = vst [vmem:[%s286 + $0x98] sm:$0xff] %v5082
        %5115 = vst [vmem:[%s286 + $0xa0] sm:$0xff] %v5083
        %5116 = vst [vmem:[%s286 + $0xa8] sm:$0xff] %v5084
        %5117 = vst [vmem:[%s286 + $0xb0] sm:$0xff] %v5085
        %5118 = vst [vmem:[%s286 + $0xb8] sm:$0xff] %v5086
        %5119 = vst [vmem:[%s286 + $0xc0] sm:$0xff] %v5087
        %5120 = vst [vmem:[%s286 + $0xc8] sm:$0xff] %v5088
        %5121 = vst [vmem:[%s286 + $0xd0] sm:$0xff] %v5089
        %5122 = vst [vmem:[%s286 + $0xd8] sm:$0xff] %v5090
        %5123 = vst [vmem:[%s286 + $0xe0] sm:$0xff] %v5091
        %5124 = vst [vmem:[%s286 + $0xe8] sm:$0xff] %v5092
        %5125 = vst [vmem:[%s286 + $0xf0] sm:$0xff] %v5093
        %5126 = vst [vmem:[%s286 + $0xf8] sm:$0xff] %v5094
        %s5127 = sand.u32 %s182, 1
        %s5128 = scalar_lea.sflag [#allocation7], %s5127
        %s5129 = sand.u32 %s182, 1
        %s5130 = smul.addr %s5129, 256
        %s5131 = scalar_lea.vmem [#allocation8], %s5130
        // Predicated region
        $region53: #{tpu_custom_call.1} parent=47 // pred_check
          %p5132 = pneg %p192
        $region54: #{tpu_custom_call.1} parent=47 // pred_check_branch
          %5134 = sbr.rel (%p5132) target = $region56
        $region55: #{tpu_custom_call.1} parent=47 // pred_region
          %s5136 = ssub.s32 4096, 4096
          %5137 = vsyncadd %s5128, %s5136
          %s5138 = smul.addr %s22, 32
          %s5139 = smul.addr %s5138, 128
          %s5140 = scalar_lea.hbm %s7, %s5139
          %s5141 = sshll.u32 %s5131, 4
          %s5142 = int_to_ptr.vmem [resolvable:$true] %s5141
          %5147 = dma.vmem_to_hbm [thread:$0]  %s5142, 4096, %s5140, %s5128, 128, 128, 8
        $region56: #{tpu_custom_call.1} parent=47 // pred_fallthru
          _
      $region48: #{tpu_custom_call.1} parent=5 // pred_fallthru
        _
      %p5148 = scmp.le.s32.totalorder 2, %s17
      // Predicated region
      $region57: #{tpu_custom_call.1} parent=5 // pred_check
        %p5149 = pneg %p5148
      $region58: #{tpu_custom_call.1} parent=5 // pred_check_branch
        %5151 = sbr.rel (%p5149) target = $region60
      $region59: #{tpu_custom_call.1} parent=5 // pred_region
        %s5152 = ssub.s32 %s17, 2
        // Predicated region
        $region61: #{tpu_custom_call.1} parent=59 // pred_check
          %p5153 = pneg %p198
        $region62: #{tpu_custom_call.1} parent=59 // pred_check_branch
          %5155 = sbr.rel (%p5153) target = $region64
        $region63: #{tpu_custom_call.1} parent=59 // pred_region
          %s5156 = sand.u32 %s183, 1
          %s5157 = scalar_lea.sflag [#allocation7], %s5156
          %s5158 = sand.u32 %s183, 1
          %s5159 = smul.addr %s5158, 256
          %s5160 = scalar_lea.vmem [#allocation8], %s5159
          %5161 = dma.done %s5157, 4096
        $region64: #{tpu_custom_call.1} parent=59 // pred_fallthru
          _
      $region60: #{tpu_custom_call.1} parent=5 // pred_fallthru
        _
    $region6: #{tpu_custom_call.1} parent=1 // loop_footer
      %s21 = sadd.s32 1, %s17
    $region7: #{tpu_custom_call.1} parent=1 // loop_footer_branch
      %16 = sbr.rel target = $region3
    $region8: #{tpu_custom_call.1} parent=1 // loop_exit
      _
    %5162 = vsyncpa [#allocation6], 1
    %s5163 = scalar_lea.sflag [#allocation6], 1
    %5164 = vsyncpa %s5163, 1
    %5165 = vsyncpa [#allocation7], 1
    %s5166 = scalar_lea.sflag [#allocation7], 1
    %5167 = vsyncpa %s5166, 1

</llo_original>
